<compile_context>
chip_gen: v6e
topology: v6e:2x2x1
jax: 0.10.0
libtpu: 0.0.40
codegen_flags: <defaults>
</compile_context>

<pallas_src>
import functools
import math

import jax
import jax.numpy as jnp
from jax import lax
from jax.experimental import pallas as pl
from jax.experimental.pallas import tpu as pltpu


def _mlp_kernel(xp_ref, w1_ref, b1_ref, w2_ref, b2_ref, o_ref, *,
                dot_dtype, precision):
    # One (packed) batch tile: x @ W1 + b1 -> ReLU -> @ W2 + b2 -> ReLU.
    x = xp_ref[...]
    if dot_dtype is not None and x.dtype != dot_dtype:
        x = x.astype(dot_dtype)          # in-kernel cast: free VPU work
    h = jnp.dot(x, w1_ref[...], preferred_element_type=jnp.float32,
                precision=precision)
    h = jnp.maximum(h + b1_ref[...], 0.0)
    # NOTE: in the bf16 path the inter-layer activation is rounded to bf16
    # here; accumulation inside each matmul stays f32.
    h = h.astype(w2_ref.dtype)
    y = jnp.dot(h, w2_ref[...], preferred_element_type=jnp.float32,
                precision=precision)
    y = jnp.maximum(y + b2_ref[...], 0.0)
    o_ref[...] = y.astype(o_ref.dtype)


def _block_diag(w, p):
    """[din, dout] -> block-diagonal [p*din, p*dout] (p independent copies)."""
    if p == 1:
        return w
    din, dout = w.shape
    eye = jnp.eye(p, dtype=w.dtype)
    return (eye[:, None, :, None] * w[None, :, None, :]).reshape(p * din, p * dout)


def _pack_factor(d_in, hidden, emb):
    """Batch rows packed per 128-lane row.

    Prefer full lane-density (input, hidden and output widths all multiples of
    128); for d_in | 128 this is exactly P = 128 // d_in, the MXU-push sweet
    spot (do NOT over-pack to fill the 256-deep MXU).  Otherwise settle for
    lane-dense hidden/output widths (unmasked stores are the dominant lever).
    """
    lane = 128

    def p_for(n):
        return lane // math.gcd(n, lane)

    def lcm(a, b):
        return a * b // math.gcd(a, b)

    p_full = lcm(lcm(p_for(d_in), p_for(hidden)), p_for(emb))
    p_out = lcm(p_for(hidden), p_for(emb))
    for p in (p_full, p_out):
        wbytes = p * p * (d_in * hidden + hidden * emb) * 4
        if p <= 16 and wbytes <= (4 << 20):
            return p
    # TODO(synk): pathological dims fall back to lane-sparse (masked) stores.
    return 1


@functools.partial(jax.jit,
                   static_argnames=("block_rows", "compute_dtype", "out_dtype"))
def context_encoder_forward(x, w1, b1, w2, b2, *, block_rows=None,
                            compute_dtype=None, out_dtype=None):
    """Fused MLP forward.

    x: [B, d_in], w1: [d_in, 64], b1: [1, 64] (or [64]),
    w2: [64, emb], b2: [1, emb] (or [emb])  ->  [B, emb].

    compute_dtype: None  -> true-f32 matmuls (Precision.HIGHEST, pinned).
                   bf16  -> single-pass bf16 MXU multiplies, f32 accumulation
                            per matmul; x is cast in-kernel (no extra HBM pass).
    out_dtype:     output stream dtype (default: x.dtype).  bf16 halves the
                   dominant HBM write stream.
    """
    B, d_in = x.shape
    hidden = w1.shape[1]
    emb = w2.shape[1]
    out_dtype = x.dtype if out_dtype is None else out_dtype

    # ----- batch-in-lane packing -----
    P = _pack_factor(d_in, hidden, emb)
    rem = B % P
    if rem:
        # TODO(synk): ragged B pads x / slices y in HBM (one extra pass each);
        # prefer B % P == 0 (P <= 16) to hit the zero-copy path, or route the
        # <=15-row tail through a separate tiny call.
        x = jnp.pad(x, ((0, P - rem), (0, 0)))
    B_pad = x.shape[0]
    Bp = B_pad // P
    xp = x.reshape(Bp, P * d_in)                      # free row-major reshape

    # Block-diagonal weights / tiled biases keep the P packed rows independent.
    if compute_dtype is None:
        dot_dtype = None
        w_dtype = w1.dtype
        precision = lax.Precision.HIGHEST             # explicit true-f32 path
    else:
        dot_dtype = compute_dtype
        w_dtype = compute_dtype
        precision = lax.Precision.DEFAULT             # single-pass bf16 MXU
    w1p = _block_diag(w1, P).astype(w_dtype)          # [P*d_in,  P*hidden]
    w2p = _block_diag(w2, P).astype(w_dtype)          # [P*hidden, P*emb]
    b1p = jnp.tile(b1.reshape(1, hidden).astype(jnp.float32), (1, P))
    b2p = jnp.tile(b2.reshape(1, emb).astype(jnp.float32), (1, P))

    # ----- batch tile (in packed rows) -----
    # >=4 grid steps when the batch allows it (>=2 per v7x TensorCore,
    # pipelined DMAs); capped at 1024 packed rows so double-buffered in/out
    # tiles + resident weights + f32 temporaries stay under v5e's 16 MiB
    # default scoped-VMEM limit (v6e/v7x have more headroom).
    if block_rows is not None:
        cap_bp = max(8, (block_rows // P) // 8 * 8)
    else:
        cap_bp = 1024
    if Bp <= 8:
        block_bp = Bp                                  # tiny batch: one step
    else:
        block_bp = max(8, min(cap_bp, (Bp // 4) // 8 * 8))
        block_bp = min(block_bp, Bp)
    grid = (pl.cdiv(Bp, block_bp),)

    # Accurate scheduling hint: packed (block-diagonal) MXU FLOPs + real bytes.
    x_isz = jnp.dtype(x.dtype).itemsize
    w_isz = jnp.dtype(w_dtype).itemsize
    o_isz = jnp.dtype(out_dtype).itemsize
    cost = pl.CostEstimate(
        flops=2 * Bp * ((P * d_in) * (P * hidden) + (P * hidden) * (P * emb)),
        transcendentals=0,
        bytes_accessed=int(Bp * P * d_in * x_isz
                           + Bp * P * emb * o_isz
                           + (P * d_in) * (P * hidden) * w_isz
                           + (P * hidden) * (P * emb) * w_isz
                           + P * (hidden + emb) * 4),
    )

    kernel = functools.partial(_mlp_kernel, dot_dtype=dot_dtype,
                               precision=precision)

    # NOTE: the W1/b1/W2/b2 specs have constant index_maps (resident blocks);
    # pipeline_mode=pl.Buffered(1) would drop their ~0.8 MiB second buffers —
    # omitted for broad jax-version compatibility (small, non-critical win).
    yp = pl.pallas_call(
        kernel,
        out_shape=jax.ShapeDtypeStruct((Bp, P * emb), out_dtype),
        grid_spec=pltpu.PrefetchScalarGridSpec(
            num_scalar_prefetch=0,
            grid=grid,
            in_specs=[
                pl.BlockSpec((block_bp, P * d_in), lambda i: (i, 0)),    # x (streamed)
                pl.BlockSpec((P * d_in, P * hidden), lambda i: (0, 0)),  # W1 (resident)
                pl.BlockSpec((1, P * hidden), lambda i: (0, 0)),         # b1 (resident)
                pl.BlockSpec((P * hidden, P * emb), lambda i: (0, 0)),   # W2 (resident)
                pl.BlockSpec((1, P * emb), lambda i: (0, 0)),            # b2 (resident)
            ],
            out_specs=pl.BlockSpec((block_bp, P * emb), lambda i: (i, 0)),
        ),
        compiler_params=pltpu.CompilerParams(
            dimension_semantics=("parallel",),
            vmem_limit_bytes=32 * 1024 * 1024,
        ),
        cost_estimate=cost,
    )(xp, w1p, b1p, w2p, b2p)

    y = yp.reshape(B_pad, emb)                        # free row-major reshape
    if B_pad != B:
        y = y[:B]
    return y


def init_params(key, input_dim, emb_dim=32, hidden=64, dtype=jnp.float32):
    """Deterministic synthetic parameters matching nn.Linear shapes.
    PyTorch Linear weight is [out, in]; we store the transpose [in, out]."""
    k1, k2, k3, k4 = jax.random.split(key, 4)
    lim1 = 1.0 / jnp.sqrt(input_dim)
    lim2 = 1.0 / jnp.sqrt(hidden)
    w1 = jax.random.uniform(k1, (input_dim, hidden), dtype, -lim1, lim1)
    b1 = jax.random.uniform(k2, (1, hidden), dtype, -lim1, lim1)
    w2 = jax.random.uniform(k3, (hidden, emb_dim), dtype, -lim2, lim2)
    b2 = jax.random.uniform(k4, (1, emb_dim), dtype, -lim2, lim2)
    return w1, b1, w2, b2


def reference_forward(x, w1, b1, w2, b2):
    h = jnp.maximum(x @ w1 + b1, 0.0)
    return jnp.maximum(h @ w2 + b2, 0.0)


if __name__ == "__main__":
    key = jax.random.PRNGKey(0)
    kx, kp, k2, k3 = jax.random.split(key, 4)

    batch, input_dim, emb_dim = 8, 16, 32
    x = jax.random.normal(kx, (batch, input_dim), jnp.float32)
    w1, b1, w2, b2 = init_params(kp, input_dim, emb_dim)
    ref = reference_forward(x, w1, b1, w2, b2)

    # f32 path (explicit HIGHEST MXU precision) -- tight tolerance.
    out = jax.block_until_ready(context_encoder_forward(x, w1, b1, w2, b2))
    assert out.shape == (batch, emb_dim) and out.dtype == x.dtype
    assert jnp.allclose(out, ref, atol=1e-5, rtol=1e-5)

    # bf16 compute + bf16 output stream: x stays f32 in HBM, cast happens
    # in-kernel; output HBM traffic is halved.
    out_bf16 = jax.block_until_ready(
        context_encoder_forward(x, w1, b1, w2, b2,
                                compute_dtype=jnp.bfloat16,
                                out_dtype=jnp.bfloat16))
    assert out_bf16.shape == (batch, emb_dim) and out_bf16.dtype == jnp.bfloat16
    assert jnp.allclose(out_bf16.astype(jnp.float32), ref, atol=5e-2, rtol=5e-2)

    # Larger batch (multiple of P=8): zero-copy packing, multi-step parallel grid.
    big_B = 4096
    xb = jax.random.normal(k2, (big_B, input_dim), jnp.float32)
    outb = jax.block_until_ready(context_encoder_forward(xb, w1, b1, w2, b2))
    refb = reference_forward(xb, w1, b1, w2, b2)
    assert outb.shape == (big_B, emb_dim)
    assert jnp.allclose(outb, refb, atol=1e-4, rtol=1e-4)

    # Ragged batch (B % P != 0): correctness of the padded fallback path.
    xr = jax.random.normal(k3, (13, input_dim), jnp.float32)
    outr = jax.block_until_ready(context_encoder_forward(xr, w1, b1, w2, b2))
    assert outr.shape == (13, emb_dim)
    assert jnp.allclose(outr, reference_forward(xr, w1, b1, w2, b2),
                        atol=1e-5, rtol=1e-5)

    print("KERNEL_OK")
</pallas_src>

<mosaic_0001>
module attributes {stable_mosaic.version = 11 : i64} {
  func.func @_mlp_kernel(%arg0: i32, %arg1: memref<1x128xf32, #tpu.memory_space<vmem>>, %arg2: memref<128x512xf32, #tpu.memory_space<vmem>>, %arg3: memref<1x512xf32, #tpu.memory_space<vmem>>, %arg4: memref<512x256xf32, #tpu.memory_space<vmem>>, %arg5: memref<1x256xf32, #tpu.memory_space<vmem>>, %arg6: memref<1x256xf32, #tpu.memory_space<vmem>>) attributes {dimension_semantics = [#tpu.dimension_semantics<parallel>], iteration_bounds = array<i64: 1>, scalar_prefetch = 0 : i64, scratch_operands = 0 : i64, tpu.core_type = #tpu.core_type<tc>, window_params = [{transform_indices = @transform_0, window_bounds = array<i64: 1, 128>}, {pipeline_mode = #tpu.pipeline_mode<synchronous>, transform_indices = @transform_1, window_bounds = array<i64: 128, 512>}, {pipeline_mode = #tpu.pipeline_mode<synchronous>, transform_indices = @transform_2, window_bounds = array<i64: 1, 512>}, {pipeline_mode = #tpu.pipeline_mode<synchronous>, transform_indices = @transform_3, window_bounds = array<i64: 512, 256>}, {pipeline_mode = #tpu.pipeline_mode<synchronous>, transform_indices = @transform_4, window_bounds = array<i64: 1, 256>}, {transform_indices = @transform_5, window_bounds = array<i64: 1, 256>}]} {
    %c0 = arith.constant 0 : index
    %c0_0 = arith.constant 0 : index
    %0 = vector.load %arg1[%c0, %c0_0] : memref<1x128xf32, #tpu.memory_space<vmem>>, vector<1x128xf32>
    %c0_1 = arith.constant 0 : index
    %c0_2 = arith.constant 0 : index
    %1 = vector.load %arg2[%c0_1, %c0_2] : memref<128x512xf32, #tpu.memory_space<vmem>>, vector<128x512xf32>
    %cst = arith.constant dense<0.000000e+00> : vector<1x512xf32>
    %2 = tpu.matmul %0, %1, %cst {dimension_numbers = #tpu.dot_dimension_numbers<[1], [0], [0], [1], [0, 0, 1, 1], [], []>, precision = #tpu.contract_precision<fp32>} : vector<1x128xf32>, vector<128x512xf32>, vector<1x512xf32> -> vector<1x512xf32>
    %c0_3 = arith.constant 0 : index
    %c0_4 = arith.constant 0 : index
    %3 = vector.load %arg3[%c0_3, %c0_4] : memref<1x512xf32, #tpu.memory_space<vmem>>, vector<1x512xf32>
    %4 = arith.addf %2, %3 : vector<1x512xf32>
    %cst_5 = arith.constant 0.000000e+00 : f32
    %5 = vector.broadcast %cst_5 : f32 to vector<1x512xf32>
    %6 = arith.maximumf %4, %5 : vector<1x512xf32>
    %c0_6 = arith.constant 0 : index
    %c0_7 = arith.constant 0 : index
    %7 = vector.load %arg4[%c0_6, %c0_7] : memref<512x256xf32, #tpu.memory_space<vmem>>, vector<512x256xf32>
    %cst_8 = arith.constant dense<0.000000e+00> : vector<1x256xf32>
    %8 = tpu.matmul %6, %7, %cst_8 {dimension_numbers = #tpu.dot_dimension_numbers<[1], [0], [0], [1], [0, 0, 1, 1], [], []>, precision = #tpu.contract_precision<fp32>} : vector<1x512xf32>, vector<512x256xf32>, vector<1x256xf32> -> vector<1x256xf32>
    %c0_9 = arith.constant 0 : index
    %c0_10 = arith.constant 0 : index
    %9 = vector.load %arg5[%c0_9, %c0_10] : memref<1x256xf32, #tpu.memory_space<vmem>>, vector<1x256xf32>
    %10 = arith.addf %8, %9 : vector<1x256xf32>
    %cst_11 = arith.constant 0.000000e+00 : f32
    %11 = vector.broadcast %cst_11 : f32 to vector<1x256xf32>
    %12 = arith.maximumf %10, %11 : vector<1x256xf32>
    %c0_12 = arith.constant 0 : index
    %c0_13 = arith.constant 0 : index
    %13 = vector.load %arg6[%c0_12, %c0_13] : memref<1x256xf32, #tpu.memory_space<vmem>>, vector<1x256xf32>
    tpu.vector_store %arg6[%c0_12, %c0_13], %12 {strides = array<i32>} : memref<1x256xf32, #tpu.memory_space<vmem>>, vector<1x256xf32>,
    return
  }
  func.func @transform_0(%arg0: i32) -> (i32, i32) {
    %c0_i32 = arith.constant 0 : i32
    %c0_i32_0 = arith.constant 0 : i32
    return %arg0, %c0_i32 : i32, i32
  }
  func.func @transform_1(%arg0: i32) -> (i32, i32) {
    %c0_i32 = arith.constant 0 : i32
    %c0_i32_0 = arith.constant 0 : i32
    %c0_i32_1 = arith.constant 0 : i32
    return %c0_i32, %c0_i32_0 : i32, i32
  }
  func.func @transform_2(%arg0: i32) -> (i32, i32) {
    %c0_i32 = arith.constant 0 : i32
    %c0_i32_0 = arith.constant 0 : i32
    %c0_i32_1 = arith.constant 0 : i32
    return %c0_i32, %c0_i32_0 : i32, i32
  }
  func.func @transform_3(%arg0: i32) -> (i32, i32) {
    %c0_i32 = arith.constant 0 : i32
    %c0_i32_0 = arith.constant 0 : i32
    %c0_i32_1 = arith.constant 0 : i32
    return %c0_i32, %c0_i32_0 : i32, i32
  }
  func.func @transform_4(%arg0: i32) -> (i32, i32) {
    %c0_i32 = arith.constant 0 : i32
    %c0_i32_0 = arith.constant 0 : i32
    %c0_i32_1 = arith.constant 0 : i32
    return %c0_i32, %c0_i32_0 : i32, i32
  }
  func.func @transform_5(%arg0: i32) -> (i32, i32) {
    %c0_i32 = arith.constant 0 : i32
    %c0_i32_0 = arith.constant 0 : i32
    return %arg0, %c0_i32 : i32, i32
  }
}

</mosaic_0001>

<llo_original>
// kernel: context_encoder_forward.1
$region0: #{context_encoder_forward.1}
  #allocation0 [shape = 'u32[]', space=smem, size = 0x4, offset = 0x4, fixed_abs, tag = 'smem constant byte address 0x4 - core index']
  #allocation1 [shape = 'u32[144,128]{1,0:T(1,128)}', space=vmem, size = 0x12000, scoped, tag = 'internal scratch']
  %s0 = inlined_call_operand.vmem [shape: f32[1,128], index: 0, kind: input, shape index: {}]
  %s1 = inlined_call_operand.vmem [shape: f32[128,512], index: 1, kind: input, shape index: {}]
  %s2 = inlined_call_operand.vmem [shape: f32[1,512], index: 2, kind: input, shape index: {}]
  %s3 = inlined_call_operand.vmem [shape: f32[512,256], index: 3, kind: input, shape index: {}]
  %s4 = inlined_call_operand.vmem [shape: f32[1,256], index: 4, kind: input, shape index: {}]
  %s5 = inlined_call_operand.vmem [shape: f32[1,256], index: 5, kind: output, shape index: {}]
  %s6 = sld [smem:[#allocation0]]
  $region30: #{context_encoder_forward.1} parent=0
    _
  %s8 = ssub.s32 1, %s6
  %s9 = scalar_select 0, %s8, %s6
  // Predicated region
  $region2: #{context_encoder_forward.1} parent=0 // pred_check
    _
  $region3: #{context_encoder_forward.1} parent=0 // pred_check_branch
    %11 = sbr.rel (0) target = $region5
  $region4: #{context_encoder_forward.1} parent=0 // pred_region
    _
  $region5: #{context_encoder_forward.1} parent=0 // pred_fallthru
    _
  // Predicated region
  $region6: #{context_encoder_forward.1} parent=0 // pred_check
    _
  $region7: #{context_encoder_forward.1} parent=0 // pred_check_branch
    %13 = sbr.rel (0) target = $region9
  $region8: #{context_encoder_forward.1} parent=0 // pred_region
    _
  $region9: #{context_encoder_forward.1} parent=0 // pred_fallthru
    _
  // Predicated region
  $region10: #{context_encoder_forward.1} parent=0 // pred_check
    _
  $region11: #{context_encoder_forward.1} parent=0 // pred_check_branch
    %15 = sbr.rel (0) target = $region13
  $region12: #{context_encoder_forward.1} parent=0 // pred_region
    _
  $region13: #{context_encoder_forward.1} parent=0 // pred_fallthru
    _
  // Predicated region
  $region14: #{context_encoder_forward.1} parent=0 // pred_check
    _
  $region15: #{context_encoder_forward.1} parent=0 // pred_check_branch
    %17 = sbr.rel (0) target = $region17
  $region16: #{context_encoder_forward.1} parent=0 // pred_region
    _
  $region17: #{context_encoder_forward.1} parent=0 // pred_fallthru
    _
  // Predicated region
  $region18: #{context_encoder_forward.1} parent=0 // pred_check
    _
  $region19: #{context_encoder_forward.1} parent=0 // pred_check_branch
    %19 = sbr.rel (0) target = $region21
  $region20: #{context_encoder_forward.1} parent=0 // pred_region
    _
  $region21: #{context_encoder_forward.1} parent=0 // pred_fallthru
    _
  %v20 = vld [vmem:[%s0] sm:$0x1]
  %v21 = vld [vmem:[%s1] sm:$0xff]
  %v22 = vld [vmem:[%s1 + $0x8] sm:$0xff]
  %v23 = vld [vmem:[%s1 + $0x10] sm:$0xff]
  %v24 = vld [vmem:[%s1 + $0x18] sm:$0xff]
  %v25 = vld [vmem:[%s1 + $0x20] sm:$0xff]
  %v26 = vld [vmem:[%s1 + $0x28] sm:$0xff]
  %v27 = vld [vmem:[%s1 + $0x30] sm:$0xff]
  %v28 = vld [vmem:[%s1 + $0x38] sm:$0xff]
  %v29 = vld [vmem:[%s1 + $0x40] sm:$0xff]
  %v30 = vld [vmem:[%s1 + $0x48] sm:$0xff]
  %v31 = vld [vmem:[%s1 + $0x50] sm:$0xff]
  %v32 = vld [vmem:[%s1 + $0x58] sm:$0xff]
  %v33 = vld [vmem:[%s1 + $0x60] sm:$0xff]
  %v34 = vld [vmem:[%s1 + $0x68] sm:$0xff]
  %v35 = vld [vmem:[%s1 + $0x70] sm:$0xff]
  %v36 = vld [vmem:[%s1 + $0x78] sm:$0xff]
  %v37 = vld [vmem:[%s1 + $0x80] sm:$0xff]
  %v38 = vld [vmem:[%s1 + $0x88] sm:$0xff]
  %v39 = vld [vmem:[%s1 + $0x90] sm:$0xff]
  %v40 = vld [vmem:[%s1 + $0x98] sm:$0xff]
  %v41 = vld [vmem:[%s1 + $0xa0] sm:$0xff]
  %v42 = vld [vmem:[%s1 + $0xa8] sm:$0xff]
  %v43 = vld [vmem:[%s1 + $0xb0] sm:$0xff]
  %v44 = vld [vmem:[%s1 + $0xb8] sm:$0xff]
  %v45 = vld [vmem:[%s1 + $0xc0] sm:$0xff]
  %v46 = vld [vmem:[%s1 + $0xc8] sm:$0xff]
  %v47 = vld [vmem:[%s1 + $0xd0] sm:$0xff]
  %v48 = vld [vmem:[%s1 + $0xd8] sm:$0xff]
  %v49 = vld [vmem:[%s1 + $0xe0] sm:$0xff]
  %v50 = vld [vmem:[%s1 + $0xe8] sm:$0xff]
  %v51 = vld [vmem:[%s1 + $0xf0] sm:$0xff]
  %v52 = vld [vmem:[%s1 + $0xf8] sm:$0xff]
  %v53 = vld [vmem:[%s1 + $0x100] sm:$0xff]
  %v54 = vld [vmem:[%s1 + $0x108] sm:$0xff]
  %v55 = vld [vmem:[%s1 + $0x110] sm:$0xff]
  %v56 = vld [vmem:[%s1 + $0x118] sm:$0xff]
  %v57 = vld [vmem:[%s1 + $0x120] sm:$0xff]
  %v58 = vld [vmem:[%s1 + $0x128] sm:$0xff]
  %v59 = vld [vmem:[%s1 + $0x130] sm:$0xff]
  %v60 = vld [vmem:[%s1 + $0x138] sm:$0xff]
  %v61 = vld [vmem:[%s1 + $0x140] sm:$0xff]
  %v62 = vld [vmem:[%s1 + $0x148] sm:$0xff]
  %v63 = vld [vmem:[%s1 + $0x150] sm:$0xff]
  %v64 = vld [vmem:[%s1 + $0x158] sm:$0xff]
  %v65 = vld [vmem:[%s1 + $0x160] sm:$0xff]
  %v66 = vld [vmem:[%s1 + $0x168] sm:$0xff]
  %v67 = vld [vmem:[%s1 + $0x170] sm:$0xff]
  %v68 = vld [vmem:[%s1 + $0x178] sm:$0xff]
  %v69 = vld [vmem:[%s1 + $0x180] sm:$0xff]
  %v70 = vld [vmem:[%s1 + $0x188] sm:$0xff]
  %v71 = vld [vmem:[%s1 + $0x190] sm:$0xff]
  %v72 = vld [vmem:[%s1 + $0x198] sm:$0xff]
  %v73 = vld [vmem:[%s1 + $0x1a0] sm:$0xff]
  %v74 = vld [vmem:[%s1 + $0x1a8] sm:$0xff]
  %v75 = vld [vmem:[%s1 + $0x1b0] sm:$0xff]
  %v76 = vld [vmem:[%s1 + $0x1b8] sm:$0xff]
  %v77 = vld [vmem:[%s1 + $0x1c0] sm:$0xff]
  %v78 = vld [vmem:[%s1 + $0x1c8] sm:$0xff]
  %v79 = vld [vmem:[%s1 + $0x1d0] sm:$0xff]
  %v80 = vld [vmem:[%s1 + $0x1d8] sm:$0xff]
  %v81 = vld [vmem:[%s1 + $0x1e0] sm:$0xff]
  %v82 = vld [vmem:[%s1 + $0x1e8] sm:$0xff]
  %v83 = vld [vmem:[%s1 + $0x1f0] sm:$0xff]
  %v84 = vld [vmem:[%s1 + $0x1f8] sm:$0xff]
  %v85 = vld [vmem:[%s2] sm:$0xf]
  %v87 = vlaneseq
  %v88 = vshrl.u32 %v87, 7
  %v89 = vsub.s32 0, %v88
  %v90 = vrot.slane %v85, %v89
  %v91 = vlaneseq
  %v92 = vshrl.u32 %v91, 7
  %v93 = vsub.s32 1, %v92
  %v94 = vrot.slane %v85, %v93
  %v95 = vlaneseq
  %v96 = vshrl.u32 %v95, 7
  %v97 = vsub.s32 2, %v96
  %v98 = vrot.slane %v85, %v97
  %v99 = vlaneseq
  %v100 = vshrl.u32 %v99, 7
  %v101 = vsub.s32 3, %v100
  %v102 = vrot.slane %v85, %v101
  %v107 = vand.u32 %v82, 4294901760
  %108 = vmatprep.subr.mxu0 %v107
  %v109 = vand.u32 %v81, 4294901760
  %110 = vmatpush1.msra.mxu0 %v109
  %v111 = vand.u32 %v78, 4294901760
  %112 = vmatprep.subr.mxu0 %v111
  %v113 = vand.u32 %v77, 4294901760
  %114 = vmatpush1.msra.mxu0 %v113
  %v115 = vand.u32 %v74, 4294901760
  %116 = vmatprep.subr.mxu0 %v115
  %v117 = vand.u32 %v73, 4294901760
  %118 = vmatpush1.msra.mxu0 %v117
  %v119 = vand.u32 %v70, 4294901760
  %120 = vmatprep.subr.mxu0 %v119
  %v121 = vand.u32 %v69, 4294901760
  %122 = vmatpush1.msra.mxu0 %v121
  %v123 = vand.u32 %v66, 4294901760
  %124 = vmatprep.subr.mxu0 %v123
  %v125 = vand.u32 %v65, 4294901760
  %126 = vmatpush1.msra.mxu0 %v125
  %v127 = vand.u32 %v62, 4294901760
  %128 = vmatprep.subr.mxu0 %v127
  %v129 = vand.u32 %v61, 4294901760
  %130 = vmatpush1.msra.mxu0 %v129
  %v131 = vand.u32 %v58, 4294901760
  %132 = vmatprep.subr.mxu0 %v131
  %v133 = vand.u32 %v57, 4294901760
  %134 = vmatpush1.msra.mxu0 %v133
  %v135 = vand.u32 %v54, 4294901760
  %136 = vmatprep.subr.mxu0 %v135
  %v137 = vand.u32 %v53, 4294901760
  %138 = vmatpush1.msra.mxu0 %v137
  %v139 = vand.u32 %v50, 4294901760
  %140 = vmatprep.subr.mxu0 %v139
  %v141 = vand.u32 %v49, 4294901760
  %142 = vmatpush1.msra.mxu0 %v141
  %v143 = vand.u32 %v46, 4294901760
  %144 = vmatprep.subr.mxu0 %v143
  %v145 = vand.u32 %v45, 4294901760
  %146 = vmatpush1.msra.mxu0 %v145
  %v147 = vand.u32 %v42, 4294901760
  %148 = vmatprep.subr.mxu0 %v147
  %v149 = vand.u32 %v41, 4294901760
  %150 = vmatpush1.msra.mxu0 %v149
  %v151 = vand.u32 %v38, 4294901760
  %152 = vmatprep.subr.mxu0 %v151
  %v153 = vand.u32 %v37, 4294901760
  %154 = vmatpush1.msra.mxu0 %v153
  %v155 = vand.u32 %v34, 4294901760
  %156 = vmatprep.subr.mxu0 %v155
  %v157 = vand.u32 %v33, 4294901760
  %158 = vmatpush1.msra.mxu0 %v157
  %v159 = vand.u32 %v30, 4294901760
  %160 = vmatprep.subr.mxu0 %v159
  %v161 = vand.u32 %v29, 4294901760
  %162 = vmatpush1.msra.mxu0 %v161
  %v163 = vand.u32 %v26, 4294901760
  %164 = vmatprep.subr.mxu0 %v163
  %v165 = vand.u32 %v25, 4294901760
  %166 = vmatpush1.msra.mxu0 %v165
  %v167 = vand.u32 %v22, 4294901760
  %168 = vmatprep.subr.mxu0 %v167
  %v169 = vand.u32 %v21, 4294901760
  %170 = vmatpush1.msra.mxu0 %v169
  %171 = vmatprep.subr.mxu0 0.0
  %172 = vmatpush2.msra.mxu0 0.0
  %173 = vmatprep.subr.mxu0 0.0
  %174 = vmatpush2.msra.mxu0 0.0
  %175 = vmatprep.subr.mxu0 0.0
  %176 = vmatpush2.msra.mxu0 0.0
  %177 = vmatprep.subr.mxu0 0.0
  %178 = vmatpush2.msra.mxu0 0.0
  %179 = vmatprep.subr.mxu0 0.0
  %180 = vmatpush2.msra.mxu0 0.0
  %181 = vmatprep.subr.mxu0 0.0
  %182 = vmatpush2.msra.mxu0 0.0
  %183 = vmatprep.subr.mxu0 0.0
  %184 = vmatpush2.msra.mxu0 0.0
  %185 = vmatprep.subr.mxu0 0.0
  %186 = vmatpush2.msra.mxu0 0.0
  %187 = vmatprep.subr.mxu0 0.0
  %188 = vmatpush2.msra.mxu0 0.0
  %189 = vmatprep.subr.mxu0 0.0
  %190 = vmatpush2.msra.mxu0 0.0
  %191 = vmatprep.subr.mxu0 0.0
  %192 = vmatpush2.msra.mxu0 0.0
  %193 = vmatprep.subr.mxu0 0.0
  %194 = vmatpush2.msra.mxu0 0.0
  %195 = vmatprep.subr.mxu0 0.0
  %196 = vmatpush2.msra.mxu0 0.0
  %197 = vmatprep.subr.mxu0 0.0
  %198 = vmatpush2.msra.mxu0 0.0
  %199 = vmatprep.subr.mxu0 0.0
  %200 = vmatpush2.msra.mxu0 0.0
  %201 = vmatprep.subr.mxu0 0.0
  %202 = vmatpush2.msra.mxu0 0.0
  %203 = vmatprep.mubr.f32.mxu0 0.0
  %v204 = vand.u32 %v20, 4294901760
  %v205 = vsub.f32 %v20, %v204
  %v206 = vand.u32 %v205, 4294901760
  %v207 = vsub.f32 %v205, %v206
  %v208 = vand.u32 %v207, 4294901760
  %209 = vmatmul.mubr.f32.gmra.mxu0 %v208
  %v210 = vpop.f32.mrf.mxu0
  %v211 = vadd.f32 %v90, %v210
  %v212 = vpop.f32.mrf.mxu0
  %v213 = vadd.f32 %v94, %v212
  %214 = vdwg.mxu0
  %v215 = vand.u32 %v82, 4294901760
  %v216 = vsub.f32 %v82, %v215
  %v217 = vand.u32 %v216, 4294901760
  %v218 = vsub.f32 %v216, %v217
  %v219 = vand.u32 %v218, 4294901760
  %220 = vmatprep.subr.mxu0 %v219
  %v221 = vand.u32 %v81, 4294901760
  %v222 = vsub.f32 %v81, %v221
  %v223 = vand.u32 %v222, 4294901760
  %v224 = vsub.f32 %v222, %v223
  %v225 = vand.u32 %v224, 4294901760
  %226 = vmatpush1.msra.mxu0 %v225
  %v227 = vand.u32 %v78, 4294901760
  %v228 = vsub.f32 %v78, %v227
  %v229 = vand.u32 %v228, 4294901760
  %v230 = vsub.f32 %v228, %v229
  %v231 = vand.u32 %v230, 4294901760
  %232 = vmatprep.subr.mxu0 %v231
  %v233 = vand.u32 %v77, 4294901760
  %v234 = vsub.f32 %v77, %v233
  %v235 = vand.u32 %v234, 4294901760
  %v236 = vsub.f32 %v234, %v235
  %v237 = vand.u32 %v236, 4294901760
  %238 = vmatpush1.msra.mxu0 %v237
  %v239 = vand.u32 %v74, 4294901760
  %v240 = vsub.f32 %v74, %v239
  %v241 = vand.u32 %v240, 4294901760
  %v242 = vsub.f32 %v240, %v241
  %v243 = vand.u32 %v242, 4294901760
  %244 = vmatprep.subr.mxu0 %v243
  %v245 = vand.u32 %v73, 4294901760
  %v246 = vsub.f32 %v73, %v245
  %v247 = vand.u32 %v246, 4294901760
  %v248 = vsub.f32 %v246, %v247
  %v249 = vand.u32 %v248, 4294901760
  %250 = vmatpush1.msra.mxu0 %v249
  %v251 = vand.u32 %v70, 4294901760
  %v252 = vsub.f32 %v70, %v251
  %v253 = vand.u32 %v252, 4294901760
  %v254 = vsub.f32 %v252, %v253
  %v255 = vand.u32 %v254, 4294901760
  %256 = vmatprep.subr.mxu0 %v255
  %v257 = vand.u32 %v69, 4294901760
  %v258 = vsub.f32 %v69, %v257
  %v259 = vand.u32 %v258, 4294901760
  %v260 = vsub.f32 %v258, %v259
  %v261 = vand.u32 %v260, 4294901760
  %262 = vmatpush1.msra.mxu0 %v261
  %v263 = vand.u32 %v66, 4294901760
  %v264 = vsub.f32 %v66, %v263
  %v265 = vand.u32 %v264, 4294901760
  %v266 = vsub.f32 %v264, %v265
  %v267 = vand.u32 %v266, 4294901760
  %268 = vmatprep.subr.mxu0 %v267
  %v269 = vand.u32 %v65, 4294901760
  %v270 = vsub.f32 %v65, %v269
  %v271 = vand.u32 %v270, 4294901760
  %v272 = vsub.f32 %v270, %v271
  %v273 = vand.u32 %v272, 4294901760
  %274 = vmatpush1.msra.mxu0 %v273
  %v275 = vand.u32 %v62, 4294901760
  %v276 = vsub.f32 %v62, %v275
  %v277 = vand.u32 %v276, 4294901760
  %v278 = vsub.f32 %v276, %v277
  %v279 = vand.u32 %v278, 4294901760
  %280 = vmatprep.subr.mxu0 %v279
  %v281 = vand.u32 %v61, 4294901760
  %v282 = vsub.f32 %v61, %v281
  %v283 = vand.u32 %v282, 4294901760
  %v284 = vsub.f32 %v282, %v283
  %v285 = vand.u32 %v284, 4294901760
  %286 = vmatpush1.msra.mxu0 %v285
  %v287 = vand.u32 %v58, 4294901760
  %v288 = vsub.f32 %v58, %v287
  %v289 = vand.u32 %v288, 4294901760
  %v290 = vsub.f32 %v288, %v289
  %v291 = vand.u32 %v290, 4294901760
  %292 = vmatprep.subr.mxu0 %v291
  %v293 = vand.u32 %v57, 4294901760
  %v294 = vsub.f32 %v57, %v293
  %v295 = vand.u32 %v294, 4294901760
  %v296 = vsub.f32 %v294, %v295
  %v297 = vand.u32 %v296, 4294901760
  %298 = vmatpush1.msra.mxu0 %v297
  %v299 = vand.u32 %v54, 4294901760
  %v300 = vsub.f32 %v54, %v299
  %v301 = vand.u32 %v300, 4294901760
  %v302 = vsub.f32 %v300, %v301
  %v303 = vand.u32 %v302, 4294901760
  %304 = vmatprep.subr.mxu0 %v303
  %v305 = vand.u32 %v53, 4294901760
  %v306 = vsub.f32 %v53, %v305
  %v307 = vand.u32 %v306, 4294901760
  %v308 = vsub.f32 %v306, %v307
  %v309 = vand.u32 %v308, 4294901760
  %310 = vmatpush1.msra.mxu0 %v309
  %v311 = vand.u32 %v50, 4294901760
  %v312 = vsub.f32 %v50, %v311
  %v313 = vand.u32 %v312, 4294901760
  %v314 = vsub.f32 %v312, %v313
  %v315 = vand.u32 %v314, 4294901760
  %316 = vmatprep.subr.mxu0 %v315
  %v317 = vand.u32 %v49, 4294901760
  %v318 = vsub.f32 %v49, %v317
  %v319 = vand.u32 %v318, 4294901760
  %v320 = vsub.f32 %v318, %v319
  %v321 = vand.u32 %v320, 4294901760
  %322 = vmatpush1.msra.mxu0 %v321
  %v323 = vand.u32 %v46, 4294901760
  %v324 = vsub.f32 %v46, %v323
  %v325 = vand.u32 %v324, 4294901760
  %v326 = vsub.f32 %v324, %v325
  %v327 = vand.u32 %v326, 4294901760
  %328 = vmatprep.subr.mxu0 %v327
  %v329 = vand.u32 %v45, 4294901760
  %v330 = vsub.f32 %v45, %v329
  %v331 = vand.u32 %v330, 4294901760
  %v332 = vsub.f32 %v330, %v331
  %v333 = vand.u32 %v332, 4294901760
  %334 = vmatpush1.msra.mxu0 %v333
  %v335 = vand.u32 %v42, 4294901760
  %v336 = vsub.f32 %v42, %v335
  %v337 = vand.u32 %v336, 4294901760
  %v338 = vsub.f32 %v336, %v337
  %v339 = vand.u32 %v338, 4294901760
  %340 = vmatprep.subr.mxu0 %v339
  %v341 = vand.u32 %v41, 4294901760
  %v342 = vsub.f32 %v41, %v341
  %v343 = vand.u32 %v342, 4294901760
  %v344 = vsub.f32 %v342, %v343
  %v345 = vand.u32 %v344, 4294901760
  %346 = vmatpush1.msra.mxu0 %v345
  %v347 = vand.u32 %v38, 4294901760
  %v348 = vsub.f32 %v38, %v347
  %v349 = vand.u32 %v348, 4294901760
  %v350 = vsub.f32 %v348, %v349
  %v351 = vand.u32 %v350, 4294901760
  %352 = vmatprep.subr.mxu0 %v351
  %v353 = vand.u32 %v37, 4294901760
  %v354 = vsub.f32 %v37, %v353
  %v355 = vand.u32 %v354, 4294901760
  %v356 = vsub.f32 %v354, %v355
  %v357 = vand.u32 %v356, 4294901760
  %358 = vmatpush1.msra.mxu0 %v357
  %v359 = vand.u32 %v34, 4294901760
  %v360 = vsub.f32 %v34, %v359
  %v361 = vand.u32 %v360, 4294901760
  %v362 = vsub.f32 %v360, %v361
  %v363 = vand.u32 %v362, 4294901760
  %364 = vmatprep.subr.mxu0 %v363
  %v365 = vand.u32 %v33, 4294901760
  %v366 = vsub.f32 %v33, %v365
  %v367 = vand.u32 %v366, 4294901760
  %v368 = vsub.f32 %v366, %v367
  %v369 = vand.u32 %v368, 4294901760
  %370 = vmatpush1.msra.mxu0 %v369
  %v371 = vand.u32 %v30, 4294901760
  %v372 = vsub.f32 %v30, %v371
  %v373 = vand.u32 %v372, 4294901760
  %v374 = vsub.f32 %v372, %v373
  %v375 = vand.u32 %v374, 4294901760
  %376 = vmatprep.subr.mxu0 %v375
  %v377 = vand.u32 %v29, 4294901760
  %v378 = vsub.f32 %v29, %v377
  %v379 = vand.u32 %v378, 4294901760
  %v380 = vsub.f32 %v378, %v379
  %v381 = vand.u32 %v380, 4294901760
  %382 = vmatpush1.msra.mxu0 %v381
  %v383 = vand.u32 %v26, 4294901760
  %v384 = vsub.f32 %v26, %v383
  %v385 = vand.u32 %v384, 4294901760
  %v386 = vsub.f32 %v384, %v385
  %v387 = vand.u32 %v386, 4294901760
  %388 = vmatprep.subr.mxu0 %v387
  %v389 = vand.u32 %v25, 4294901760
  %v390 = vsub.f32 %v25, %v389
  %v391 = vand.u32 %v390, 4294901760
  %v392 = vsub.f32 %v390, %v391
  %v393 = vand.u32 %v392, 4294901760
  %394 = vmatpush1.msra.mxu0 %v393
  %v395 = vand.u32 %v22, 4294901760
  %v396 = vsub.f32 %v22, %v395
  %v397 = vand.u32 %v396, 4294901760
  %v398 = vsub.f32 %v396, %v397
  %v399 = vand.u32 %v398, 4294901760
  %400 = vmatprep.subr.mxu0 %v399
  %v401 = vand.u32 %v21, 4294901760
  %v402 = vsub.f32 %v21, %v401
  %v403 = vand.u32 %v402, 4294901760
  %v404 = vsub.f32 %v402, %v403
  %v405 = vand.u32 %v404, 4294901760
  %406 = vmatpush1.msra.mxu0 %v405
  %407 = vmatprep.subr.mxu0 0.0
  %408 = vmatpush2.msra.mxu0 0.0
  %409 = vmatprep.subr.mxu0 0.0
  %410 = vmatpush2.msra.mxu0 0.0
  %411 = vmatprep.subr.mxu0 0.0
  %412 = vmatpush2.msra.mxu0 0.0
  %413 = vmatprep.subr.mxu0 0.0
  %414 = vmatpush2.msra.mxu0 0.0
  %415 = vmatprep.subr.mxu0 0.0
  %416 = vmatpush2.msra.mxu0 0.0
  %417 = vmatprep.subr.mxu0 0.0
  %418 = vmatpush2.msra.mxu0 0.0
  %419 = vmatprep.subr.mxu0 0.0
  %420 = vmatpush2.msra.mxu0 0.0
  %421 = vmatprep.subr.mxu0 0.0
  %422 = vmatpush2.msra.mxu0 0.0
  %423 = vmatprep.subr.mxu0 0.0
  %424 = vmatpush2.msra.mxu0 0.0
  %425 = vmatprep.subr.mxu0 0.0
  %426 = vmatpush2.msra.mxu0 0.0
  %427 = vmatprep.subr.mxu0 0.0
  %428 = vmatpush2.msra.mxu0 0.0
  %429 = vmatprep.subr.mxu0 0.0
  %430 = vmatpush2.msra.mxu0 0.0
  %431 = vmatprep.subr.mxu0 0.0
  %432 = vmatpush2.msra.mxu0 0.0
  %433 = vmatprep.subr.mxu0 0.0
  %434 = vmatpush2.msra.mxu0 0.0
  %435 = vmatprep.subr.mxu0 0.0
  %436 = vmatpush2.msra.mxu0 0.0
  %437 = vmatprep.subr.mxu0 0.0
  %438 = vmatpush2.msra.mxu0 0.0
  %439 = vmatprep.mubr.f32.mxu0 0.0
  %v440 = vand.u32 %v20, 4294901760
  %441 = vmatmul.mubr.f32.gmra.mxu0 %v440
  %v442 = vpop.f32.mrf.mxu0
  %v443 = vadd.f32 %v211, %v442
  %v444 = vpop.f32.mrf.mxu0
  %v445 = vadd.f32 %v213, %v444
  %446 = vdwg.mxu0
  %v447 = vand.u32 %v82, 4294901760
  %v448 = vsub.f32 %v82, %v447
  %449 = vmatprep.subr.mxu0 %v448
  %v450 = vand.u32 %v81, 4294901760
  %v451 = vsub.f32 %v81, %v450
  %452 = vmatpush1.msra.mxu0 %v451
  %v453 = vand.u32 %v78, 4294901760
  %v454 = vsub.f32 %v78, %v453
  %455 = vmatprep.subr.mxu0 %v454
  %v456 = vand.u32 %v77, 4294901760
  %v457 = vsub.f32 %v77, %v456
  %458 = vmatpush1.msra.mxu0 %v457
  %v459 = vand.u32 %v74, 4294901760
  %v460 = vsub.f32 %v74, %v459
  %461 = vmatprep.subr.mxu0 %v460
  %v462 = vand.u32 %v73, 4294901760
  %v463 = vsub.f32 %v73, %v462
  %464 = vmatpush1.msra.mxu0 %v463
  %v465 = vand.u32 %v70, 4294901760
  %v466 = vsub.f32 %v70, %v465
  %467 = vmatprep.subr.mxu0 %v466
  %v468 = vand.u32 %v69, 4294901760
  %v469 = vsub.f32 %v69, %v468
  %470 = vmatpush1.msra.mxu0 %v469
  %v471 = vand.u32 %v66, 4294901760
  %v472 = vsub.f32 %v66, %v471
  %473 = vmatprep.subr.mxu0 %v472
  %v474 = vand.u32 %v65, 4294901760
  %v475 = vsub.f32 %v65, %v474
  %476 = vmatpush1.msra.mxu0 %v475
  %v477 = vand.u32 %v62, 4294901760
  %v478 = vsub.f32 %v62, %v477
  %479 = vmatprep.subr.mxu0 %v478
  %v480 = vand.u32 %v61, 4294901760
  %v481 = vsub.f32 %v61, %v480
  %482 = vmatpush1.msra.mxu0 %v481
  %v483 = vand.u32 %v58, 4294901760
  %v484 = vsub.f32 %v58, %v483
  %485 = vmatprep.subr.mxu0 %v484
  %v486 = vand.u32 %v57, 4294901760
  %v487 = vsub.f32 %v57, %v486
  %488 = vmatpush1.msra.mxu0 %v487
  %v489 = vand.u32 %v54, 4294901760
  %v490 = vsub.f32 %v54, %v489
  %491 = vmatprep.subr.mxu0 %v490
  %v492 = vand.u32 %v53, 4294901760
  %v493 = vsub.f32 %v53, %v492
  %494 = vmatpush1.msra.mxu0 %v493
  %v495 = vand.u32 %v50, 4294901760
  %v496 = vsub.f32 %v50, %v495
  %497 = vmatprep.subr.mxu0 %v496
  %v498 = vand.u32 %v49, 4294901760
  %v499 = vsub.f32 %v49, %v498
  %500 = vmatpush1.msra.mxu0 %v499
  %v501 = vand.u32 %v46, 4294901760
  %v502 = vsub.f32 %v46, %v501
  %503 = vmatprep.subr.mxu0 %v502
  %v504 = vand.u32 %v45, 4294901760
  %v505 = vsub.f32 %v45, %v504
  %506 = vmatpush1.msra.mxu0 %v505
  %v507 = vand.u32 %v42, 4294901760
  %v508 = vsub.f32 %v42, %v507
  %509 = vmatprep.subr.mxu0 %v508
  %v510 = vand.u32 %v41, 4294901760
  %v511 = vsub.f32 %v41, %v510
  %512 = vmatpush1.msra.mxu0 %v511
  %v513 = vand.u32 %v38, 4294901760
  %v514 = vsub.f32 %v38, %v513
  %515 = vmatprep.subr.mxu0 %v514
  %v516 = vand.u32 %v37, 4294901760
  %v517 = vsub.f32 %v37, %v516
  %518 = vmatpush1.msra.mxu0 %v517
  %v519 = vand.u32 %v34, 4294901760
  %v520 = vsub.f32 %v34, %v519
  %521 = vmatprep.subr.mxu0 %v520
  %v522 = vand.u32 %v33, 4294901760
  %v523 = vsub.f32 %v33, %v522
  %524 = vmatpush1.msra.mxu0 %v523
  %v525 = vand.u32 %v30, 4294901760
  %v526 = vsub.f32 %v30, %v525
  %527 = vmatprep.subr.mxu0 %v526
  %v528 = vand.u32 %v29, 4294901760
  %v529 = vsub.f32 %v29, %v528
  %530 = vmatpush1.msra.mxu0 %v529
  %v531 = vand.u32 %v26, 4294901760
  %v532 = vsub.f32 %v26, %v531
  %533 = vmatprep.subr.mxu0 %v532
  %v534 = vand.u32 %v25, 4294901760
  %v535 = vsub.f32 %v25, %v534
  %536 = vmatpush1.msra.mxu0 %v535
  %v537 = vand.u32 %v22, 4294901760
  %v538 = vsub.f32 %v22, %v537
  %539 = vmatprep.subr.mxu0 %v538
  %v540 = vand.u32 %v21, 4294901760
  %v541 = vsub.f32 %v21, %v540
  %542 = vmatpush1.msra.mxu0 %v541
  %543 = vmatprep.subr.mxu0 0.0
  %544 = vmatpush2.msra.mxu0 0.0
  %545 = vmatprep.subr.mxu0 0.0
  %546 = vmatpush2.msra.mxu0 0.0
  %547 = vmatprep.subr.mxu0 0.0
  %548 = vmatpush2.msra.mxu0 0.0
  %549 = vmatprep.subr.mxu0 0.0
  %550 = vmatpush2.msra.mxu0 0.0
  %551 = vmatprep.subr.mxu0 0.0
  %552 = vmatpush2.msra.mxu0 0.0
  %553 = vmatprep.subr.mxu0 0.0
  %554 = vmatpush2.msra.mxu0 0.0
  %555 = vmatprep.subr.mxu0 0.0
  %556 = vmatpush2.msra.mxu0 0.0
  %557 = vmatprep.subr.mxu0 0.0
  %558 = vmatpush2.msra.mxu0 0.0
  %559 = vmatprep.subr.mxu0 0.0
  %560 = vmatpush2.msra.mxu0 0.0
  %561 = vmatprep.subr.mxu0 0.0
  %562 = vmatpush2.msra.mxu0 0.0
  %563 = vmatprep.subr.mxu0 0.0
  %564 = vmatpush2.msra.mxu0 0.0
  %565 = vmatprep.subr.mxu0 0.0
  %566 = vmatpush2.msra.mxu0 0.0
  %567 = vmatprep.subr.mxu0 0.0
  %568 = vmatpush2.msra.mxu0 0.0
  %569 = vmatprep.subr.mxu0 0.0
  %570 = vmatpush2.msra.mxu0 0.0
  %571 = vmatprep.subr.mxu0 0.0
  %572 = vmatpush2.msra.mxu0 0.0
  %573 = vmatprep.subr.mxu0 0.0
  %574 = vmatpush2.msra.mxu0 0.0
  %575 = vmatprep.mubr.f32.mxu0 0.0
  %v576 = vand.u32 %v20, 4294901760
  %v577 = vsub.f32 %v20, %v576
  %578 = vmatmul.mubr.f32.gmra.mxu0 %v577
  %v579 = vpop.f32.mrf.mxu0
  %v580 = vadd.f32 %v443, %v579
  %v581 = vpop.f32.mrf.mxu0
  %v582 = vadd.f32 %v445, %v581
  %583 = vdwg.mxu0
  %v584 = vand.u32 %v82, 4294901760
  %585 = vmatprep.subr.mxu0 %v584
  %v586 = vand.u32 %v81, 4294901760
  %587 = vmatpush1.msra.mxu0 %v586
  %v588 = vand.u32 %v78, 4294901760
  %589 = vmatprep.subr.mxu0 %v588
  %v590 = vand.u32 %v77, 4294901760
  %591 = vmatpush1.msra.mxu0 %v590
  %v592 = vand.u32 %v74, 4294901760
  %593 = vmatprep.subr.mxu0 %v592
  %v594 = vand.u32 %v73, 4294901760
  %595 = vmatpush1.msra.mxu0 %v594
  %v596 = vand.u32 %v70, 4294901760
  %597 = vmatprep.subr.mxu0 %v596
  %v598 = vand.u32 %v69, 4294901760
  %599 = vmatpush1.msra.mxu0 %v598
  %v600 = vand.u32 %v66, 4294901760
  %601 = vmatprep.subr.mxu0 %v600
  %v602 = vand.u32 %v65, 4294901760
  %603 = vmatpush1.msra.mxu0 %v602
  %v604 = vand.u32 %v62, 4294901760
  %605 = vmatprep.subr.mxu0 %v604
  %v606 = vand.u32 %v61, 4294901760
  %607 = vmatpush1.msra.mxu0 %v606
  %v608 = vand.u32 %v58, 4294901760
  %609 = vmatprep.subr.mxu0 %v608
  %v610 = vand.u32 %v57, 4294901760
  %611 = vmatpush1.msra.mxu0 %v610
  %v612 = vand.u32 %v54, 4294901760
  %613 = vmatprep.subr.mxu0 %v612
  %v614 = vand.u32 %v53, 4294901760
  %615 = vmatpush1.msra.mxu0 %v614
  %v616 = vand.u32 %v50, 4294901760
  %617 = vmatprep.subr.mxu0 %v616
  %v618 = vand.u32 %v49, 4294901760
  %619 = vmatpush1.msra.mxu0 %v618
  %v620 = vand.u32 %v46, 4294901760
  %621 = vmatprep.subr.mxu0 %v620
  %v622 = vand.u32 %v45, 4294901760
  %623 = vmatpush1.msra.mxu0 %v622
  %v624 = vand.u32 %v42, 4294901760
  %625 = vmatprep.subr.mxu0 %v624
  %v626 = vand.u32 %v41, 4294901760
  %627 = vmatpush1.msra.mxu0 %v626
  %v628 = vand.u32 %v38, 4294901760
  %629 = vmatprep.subr.mxu0 %v628
  %v630 = vand.u32 %v37, 4294901760
  %631 = vmatpush1.msra.mxu0 %v630
  %v632 = vand.u32 %v34, 4294901760
  %633 = vmatprep.subr.mxu0 %v632
  %v634 = vand.u32 %v33, 4294901760
  %635 = vmatpush1.msra.mxu0 %v634
  %v636 = vand.u32 %v30, 4294901760
  %637 = vmatprep.subr.mxu0 %v636
  %v638 = vand.u32 %v29, 4294901760
  %639 = vmatpush1.msra.mxu0 %v638
  %v640 = vand.u32 %v26, 4294901760
  %641 = vmatprep.subr.mxu0 %v640
  %v642 = vand.u32 %v25, 4294901760
  %643 = vmatpush1.msra.mxu0 %v642
  %v644 = vand.u32 %v22, 4294901760
  %645 = vmatprep.subr.mxu0 %v644
  %v646 = vand.u32 %v21, 4294901760
  %647 = vmatpush1.msra.mxu0 %v646
  %648 = vmatprep.subr.mxu0 0.0
  %649 = vmatpush2.msra.mxu0 0.0
  %650 = vmatprep.subr.mxu0 0.0
  %651 = vmatpush2.msra.mxu0 0.0
  %652 = vmatprep.subr.mxu0 0.0
  %653 = vmatpush2.msra.mxu0 0.0
  %654 = vmatprep.subr.mxu0 0.0
  %655 = vmatpush2.msra.mxu0 0.0
  %656 = vmatprep.subr.mxu0 0.0
  %657 = vmatpush2.msra.mxu0 0.0
  %658 = vmatprep.subr.mxu0 0.0
  %659 = vmatpush2.msra.mxu0 0.0
  %660 = vmatprep.subr.mxu0 0.0
  %661 = vmatpush2.msra.mxu0 0.0
  %662 = vmatprep.subr.mxu0 0.0
  %663 = vmatpush2.msra.mxu0 0.0
  %664 = vmatprep.subr.mxu0 0.0
  %665 = vmatpush2.msra.mxu0 0.0
  %666 = vmatprep.subr.mxu0 0.0
  %667 = vmatpush2.msra.mxu0 0.0
  %668 = vmatprep.subr.mxu0 0.0
  %669 = vmatpush2.msra.mxu0 0.0
  %670 = vmatprep.subr.mxu0 0.0
  %671 = vmatpush2.msra.mxu0 0.0
  %672 = vmatprep.subr.mxu0 0.0
  %673 = vmatpush2.msra.mxu0 0.0
  %674 = vmatprep.subr.mxu0 0.0
  %675 = vmatpush2.msra.mxu0 0.0
  %676 = vmatprep.subr.mxu0 0.0
  %677 = vmatpush2.msra.mxu0 0.0
  %678 = vmatprep.subr.mxu0 0.0
  %679 = vmatpush2.msra.mxu0 0.0
  %680 = vmatprep.mubr.f32.mxu0 0.0
  %v681 = vand.u32 %v20, 4294901760
  %v682 = vsub.f32 %v20, %v681
  %v683 = vand.u32 %v682, 4294901760
  %684 = vmatmul.mubr.f32.gmra.mxu0 %v683
  %v685 = vpop.f32.mrf.mxu0
  %v686 = vadd.f32 %v580, %v685
  %v687 = vpop.f32.mrf.mxu0
  %v688 = vadd.f32 %v582, %v687
  %689 = vdwg.mxu0
  %v690 = vand.u32 %v82, 4294901760
  %v691 = vsub.f32 %v82, %v690
  %v692 = vand.u32 %v691, 4294901760
  %693 = vmatprep.subr.mxu0 %v692
  %v694 = vand.u32 %v81, 4294901760
  %v695 = vsub.f32 %v81, %v694
  %v696 = vand.u32 %v695, 4294901760
  %697 = vmatpush1.msra.mxu0 %v696
  %v698 = vand.u32 %v78, 4294901760
  %v699 = vsub.f32 %v78, %v698
  %v700 = vand.u32 %v699, 4294901760
  %701 = vmatprep.subr.mxu0 %v700
  %v702 = vand.u32 %v77, 4294901760
  %v703 = vsub.f32 %v77, %v702
  %v704 = vand.u32 %v703, 4294901760
  %705 = vmatpush1.msra.mxu0 %v704
  %v706 = vand.u32 %v74, 4294901760
  %v707 = vsub.f32 %v74, %v706
  %v708 = vand.u32 %v707, 4294901760
  %709 = vmatprep.subr.mxu0 %v708
  %v710 = vand.u32 %v73, 4294901760
  %v711 = vsub.f32 %v73, %v710
  %v712 = vand.u32 %v711, 4294901760
  %713 = vmatpush1.msra.mxu0 %v712
  %v714 = vand.u32 %v70, 4294901760
  %v715 = vsub.f32 %v70, %v714
  %v716 = vand.u32 %v715, 4294901760
  %717 = vmatprep.subr.mxu0 %v716
  %v718 = vand.u32 %v69, 4294901760
  %v719 = vsub.f32 %v69, %v718
  %v720 = vand.u32 %v719, 4294901760
  %721 = vmatpush1.msra.mxu0 %v720
  %v722 = vand.u32 %v66, 4294901760
  %v723 = vsub.f32 %v66, %v722
  %v724 = vand.u32 %v723, 4294901760
  %725 = vmatprep.subr.mxu0 %v724
  %v726 = vand.u32 %v65, 4294901760
  %v727 = vsub.f32 %v65, %v726
  %v728 = vand.u32 %v727, 4294901760
  %729 = vmatpush1.msra.mxu0 %v728
  %v730 = vand.u32 %v62, 4294901760
  %v731 = vsub.f32 %v62, %v730
  %v732 = vand.u32 %v731, 4294901760
  %733 = vmatprep.subr.mxu0 %v732
  %v734 = vand.u32 %v61, 4294901760
  %v735 = vsub.f32 %v61, %v734
  %v736 = vand.u32 %v735, 4294901760
  %737 = vmatpush1.msra.mxu0 %v736
  %v738 = vand.u32 %v58, 4294901760
  %v739 = vsub.f32 %v58, %v738
  %v740 = vand.u32 %v739, 4294901760
  %741 = vmatprep.subr.mxu0 %v740
  %v742 = vand.u32 %v57, 4294901760
  %v743 = vsub.f32 %v57, %v742
  %v744 = vand.u32 %v743, 4294901760
  %745 = vmatpush1.msra.mxu0 %v744
  %v746 = vand.u32 %v54, 4294901760
  %v747 = vsub.f32 %v54, %v746
  %v748 = vand.u32 %v747, 4294901760
  %749 = vmatprep.subr.mxu0 %v748
  %v750 = vand.u32 %v53, 4294901760
  %v751 = vsub.f32 %v53, %v750
  %v752 = vand.u32 %v751, 4294901760
  %753 = vmatpush1.msra.mxu0 %v752
  %v754 = vand.u32 %v50, 4294901760
  %v755 = vsub.f32 %v50, %v754
  %v756 = vand.u32 %v755, 4294901760
  %757 = vmatprep.subr.mxu0 %v756
  %v758 = vand.u32 %v49, 4294901760
  %v759 = vsub.f32 %v49, %v758
  %v760 = vand.u32 %v759, 4294901760
  %761 = vmatpush1.msra.mxu0 %v760
  %v762 = vand.u32 %v46, 4294901760
  %v763 = vsub.f32 %v46, %v762
  %v764 = vand.u32 %v763, 4294901760
  %765 = vmatprep.subr.mxu0 %v764
  %v766 = vand.u32 %v45, 4294901760
  %v767 = vsub.f32 %v45, %v766
  %v768 = vand.u32 %v767, 4294901760
  %769 = vmatpush1.msra.mxu0 %v768
  %v770 = vand.u32 %v42, 4294901760
  %v771 = vsub.f32 %v42, %v770
  %v772 = vand.u32 %v771, 4294901760
  %773 = vmatprep.subr.mxu0 %v772
  %v774 = vand.u32 %v41, 4294901760
  %v775 = vsub.f32 %v41, %v774
  %v776 = vand.u32 %v775, 4294901760
  %777 = vmatpush1.msra.mxu0 %v776
  %v778 = vand.u32 %v38, 4294901760
  %v779 = vsub.f32 %v38, %v778
  %v780 = vand.u32 %v779, 4294901760
  %781 = vmatprep.subr.mxu0 %v780
  %v782 = vand.u32 %v37, 4294901760
  %v783 = vsub.f32 %v37, %v782
  %v784 = vand.u32 %v783, 4294901760
  %785 = vmatpush1.msra.mxu0 %v784
  %v786 = vand.u32 %v34, 4294901760
  %v787 = vsub.f32 %v34, %v786
  %v788 = vand.u32 %v787, 4294901760
  %789 = vmatprep.subr.mxu0 %v788
  %v790 = vand.u32 %v33, 4294901760
  %v791 = vsub.f32 %v33, %v790
  %v792 = vand.u32 %v791, 4294901760
  %793 = vmatpush1.msra.mxu0 %v792
  %v794 = vand.u32 %v30, 4294901760
  %v795 = vsub.f32 %v30, %v794
  %v796 = vand.u32 %v795, 4294901760
  %797 = vmatprep.subr.mxu0 %v796
  %v798 = vand.u32 %v29, 4294901760
  %v799 = vsub.f32 %v29, %v798
  %v800 = vand.u32 %v799, 4294901760
  %801 = vmatpush1.msra.mxu0 %v800
  %v802 = vand.u32 %v26, 4294901760
  %v803 = vsub.f32 %v26, %v802
  %v804 = vand.u32 %v803, 4294901760
  %805 = vmatprep.subr.mxu0 %v804
  %v806 = vand.u32 %v25, 4294901760
  %v807 = vsub.f32 %v25, %v806
  %v808 = vand.u32 %v807, 4294901760
  %809 = vmatpush1.msra.mxu0 %v808
  %v810 = vand.u32 %v22, 4294901760
  %v811 = vsub.f32 %v22, %v810
  %v812 = vand.u32 %v811, 4294901760
  %813 = vmatprep.subr.mxu0 %v812
  %v814 = vand.u32 %v21, 4294901760
  %v815 = vsub.f32 %v21, %v814
  %v816 = vand.u32 %v815, 4294901760
  %817 = vmatpush1.msra.mxu0 %v816
  %818 = vmatprep.subr.mxu0 0.0
  %819 = vmatpush2.msra.mxu0 0.0
  %820 = vmatprep.subr.mxu0 0.0
  %821 = vmatpush2.msra.mxu0 0.0
  %822 = vmatprep.subr.mxu0 0.0
  %823 = vmatpush2.msra.mxu0 0.0
  %824 = vmatprep.subr.mxu0 0.0
  %825 = vmatpush2.msra.mxu0 0.0
  %826 = vmatprep.subr.mxu0 0.0
  %827 = vmatpush2.msra.mxu0 0.0
  %828 = vmatprep.subr.mxu0 0.0
  %829 = vmatpush2.msra.mxu0 0.0
  %830 = vmatprep.subr.mxu0 0.0
  %831 = vmatpush2.msra.mxu0 0.0
  %832 = vmatprep.subr.mxu0 0.0
  %833 = vmatpush2.msra.mxu0 0.0
  %834 = vmatprep.subr.mxu0 0.0
  %835 = vmatpush2.msra.mxu0 0.0
  %836 = vmatprep.subr.mxu0 0.0
  %837 = vmatpush2.msra.mxu0 0.0
  %838 = vmatprep.subr.mxu0 0.0
  %839 = vmatpush2.msra.mxu0 0.0
  %840 = vmatprep.subr.mxu0 0.0
  %841 = vmatpush2.msra.mxu0 0.0
  %842 = vmatprep.subr.mxu0 0.0
  %843 = vmatpush2.msra.mxu0 0.0
  %844 = vmatprep.subr.mxu0 0.0
  %845 = vmatpush2.msra.mxu0 0.0
  %846 = vmatprep.subr.mxu0 0.0
  %847 = vmatpush2.msra.mxu0 0.0
  %848 = vmatprep.subr.mxu0 0.0
  %849 = vmatpush2.msra.mxu0 0.0
  %850 = vmatprep.mubr.f32.mxu0 0.0
  %v851 = vand.u32 %v20, 4294901760
  %852 = vmatmul.mubr.f32.gmra.mxu0 %v851
  %v853 = vpop.f32.mrf.mxu0
  %v854 = vadd.f32 %v686, %v853
  %v855 = vpop.f32.mrf.mxu0
  %v856 = vadd.f32 %v688, %v855
  %857 = vdwg.mxu0
  %v858 = vand.u32 %v82, 4294901760
  %859 = vmatprep.subr.mxu0 %v858
  %v860 = vand.u32 %v81, 4294901760
  %861 = vmatpush1.msra.mxu0 %v860
  %v862 = vand.u32 %v78, 4294901760
  %863 = vmatprep.subr.mxu0 %v862
  %v864 = vand.u32 %v77, 4294901760
  %865 = vmatpush1.msra.mxu0 %v864
  %v866 = vand.u32 %v74, 4294901760
  %867 = vmatprep.subr.mxu0 %v866
  %v868 = vand.u32 %v73, 4294901760
  %869 = vmatpush1.msra.mxu0 %v868
  %v870 = vand.u32 %v70, 4294901760
  %871 = vmatprep.subr.mxu0 %v870
  %v872 = vand.u32 %v69, 4294901760
  %873 = vmatpush1.msra.mxu0 %v872
  %v874 = vand.u32 %v66, 4294901760
  %875 = vmatprep.subr.mxu0 %v874
  %v876 = vand.u32 %v65, 4294901760
  %877 = vmatpush1.msra.mxu0 %v876
  %v878 = vand.u32 %v62, 4294901760
  %879 = vmatprep.subr.mxu0 %v878
  %v880 = vand.u32 %v61, 4294901760
  %881 = vmatpush1.msra.mxu0 %v880
  %v882 = vand.u32 %v58, 4294901760
  %883 = vmatprep.subr.mxu0 %v882
  %v884 = vand.u32 %v57, 4294901760
  %885 = vmatpush1.msra.mxu0 %v884
  %v886 = vand.u32 %v54, 4294901760
  %887 = vmatprep.subr.mxu0 %v886
  %v888 = vand.u32 %v53, 4294901760
  %889 = vmatpush1.msra.mxu0 %v888
  %v890 = vand.u32 %v50, 4294901760
  %891 = vmatprep.subr.mxu0 %v890
  %v892 = vand.u32 %v49, 4294901760
  %893 = vmatpush1.msra.mxu0 %v892
  %v894 = vand.u32 %v46, 4294901760
  %895 = vmatprep.subr.mxu0 %v894
  %v896 = vand.u32 %v45, 4294901760
  %897 = vmatpush1.msra.mxu0 %v896
  %v898 = vand.u32 %v42, 4294901760
  %899 = vmatprep.subr.mxu0 %v898
  %v900 = vand.u32 %v41, 4294901760
  %901 = vmatpush1.msra.mxu0 %v900
  %v902 = vand.u32 %v38, 4294901760
  %903 = vmatprep.subr.mxu0 %v902
  %v904 = vand.u32 %v37, 4294901760
  %905 = vmatpush1.msra.mxu0 %v904
  %v906 = vand.u32 %v34, 4294901760
  %907 = vmatprep.subr.mxu0 %v906
  %v908 = vand.u32 %v33, 4294901760
  %909 = vmatpush1.msra.mxu0 %v908
  %v910 = vand.u32 %v30, 4294901760
  %911 = vmatprep.subr.mxu0 %v910
  %v912 = vand.u32 %v29, 4294901760
  %913 = vmatpush1.msra.mxu0 %v912
  %v914 = vand.u32 %v26, 4294901760
  %915 = vmatprep.subr.mxu0 %v914
  %v916 = vand.u32 %v25, 4294901760
  %917 = vmatpush1.msra.mxu0 %v916
  %v918 = vand.u32 %v22, 4294901760
  %919 = vmatprep.subr.mxu0 %v918
  %v920 = vand.u32 %v21, 4294901760
  %921 = vmatpush1.msra.mxu0 %v920
  %922 = vmatprep.subr.mxu0 0.0
  %923 = vmatpush2.msra.mxu0 0.0
  %924 = vmatprep.subr.mxu0 0.0
  %925 = vmatpush2.msra.mxu0 0.0
  %926 = vmatprep.subr.mxu0 0.0
  %927 = vmatpush2.msra.mxu0 0.0
  %928 = vmatprep.subr.mxu0 0.0
  %929 = vmatpush2.msra.mxu0 0.0
  %930 = vmatprep.subr.mxu0 0.0
  %931 = vmatpush2.msra.mxu0 0.0
  %932 = vmatprep.subr.mxu0 0.0
  %933 = vmatpush2.msra.mxu0 0.0
  %934 = vmatprep.subr.mxu0 0.0
  %935 = vmatpush2.msra.mxu0 0.0
  %936 = vmatprep.subr.mxu0 0.0
  %937 = vmatpush2.msra.mxu0 0.0
  %938 = vmatprep.subr.mxu0 0.0
  %939 = vmatpush2.msra.mxu0 0.0
  %940 = vmatprep.subr.mxu0 0.0
  %941 = vmatpush2.msra.mxu0 0.0
  %942 = vmatprep.subr.mxu0 0.0
  %943 = vmatpush2.msra.mxu0 0.0
  %944 = vmatprep.subr.mxu0 0.0
  %945 = vmatpush2.msra.mxu0 0.0
  %946 = vmatprep.subr.mxu0 0.0
  %947 = vmatpush2.msra.mxu0 0.0
  %948 = vmatprep.subr.mxu0 0.0
  %949 = vmatpush2.msra.mxu0 0.0
  %950 = vmatprep.subr.mxu0 0.0
  %951 = vmatpush2.msra.mxu0 0.0
  %952 = vmatprep.subr.mxu0 0.0
  %953 = vmatpush2.msra.mxu0 0.0
  %954 = vmatprep.mubr.f32.mxu0 0.0
  %v955 = vand.u32 %v20, 4294901760
  %956 = vmatmul.mubr.f32.gmra.mxu0 %v955
  %v957 = vpop.f32.mrf.mxu0
  %v958 = vadd.f32 %v854, %v957
  %v959 = vpop.f32.mrf.mxu0
  %v960 = vadd.f32 %v856, %v959
  %961 = vdwg.mxu0
  %v962 = vand.u32 %v84, 4294901760
  %963 = vmatprep.subr.mxu0 %v962
  %v964 = vand.u32 %v83, 4294901760
  %965 = vmatpush1.msra.mxu0 %v964
  %v966 = vand.u32 %v80, 4294901760
  %967 = vmatprep.subr.mxu0 %v966
  %v968 = vand.u32 %v79, 4294901760
  %969 = vmatpush1.msra.mxu0 %v968
  %v970 = vand.u32 %v76, 4294901760
  %971 = vmatprep.subr.mxu0 %v970
  %v972 = vand.u32 %v75, 4294901760
  %973 = vmatpush1.msra.mxu0 %v972
  %v974 = vand.u32 %v72, 4294901760
  %975 = vmatprep.subr.mxu0 %v974
  %v976 = vand.u32 %v71, 4294901760
  %977 = vmatpush1.msra.mxu0 %v976
  %v978 = vand.u32 %v68, 4294901760
  %979 = vmatprep.subr.mxu0 %v978
  %v980 = vand.u32 %v67, 4294901760
  %981 = vmatpush1.msra.mxu0 %v980
  %v982 = vand.u32 %v64, 4294901760
  %983 = vmatprep.subr.mxu0 %v982
  %v984 = vand.u32 %v63, 4294901760
  %985 = vmatpush1.msra.mxu0 %v984
  %v986 = vand.u32 %v60, 4294901760
  %987 = vmatprep.subr.mxu0 %v986
  %v988 = vand.u32 %v59, 4294901760
  %989 = vmatpush1.msra.mxu0 %v988
  %v990 = vand.u32 %v56, 4294901760
  %991 = vmatprep.subr.mxu0 %v990
  %v992 = vand.u32 %v55, 4294901760
  %993 = vmatpush1.msra.mxu0 %v992
  %v994 = vand.u32 %v52, 4294901760
  %995 = vmatprep.subr.mxu0 %v994
  %v996 = vand.u32 %v51, 4294901760
  %997 = vmatpush1.msra.mxu0 %v996
  %v998 = vand.u32 %v48, 4294901760
  %999 = vmatprep.subr.mxu0 %v998
  %v1000 = vand.u32 %v47, 4294901760
  %1001 = vmatpush1.msra.mxu0 %v1000
  %v1002 = vand.u32 %v44, 4294901760
  %1003 = vmatprep.subr.mxu0 %v1002
  %v1004 = vand.u32 %v43, 4294901760
  %1005 = vmatpush1.msra.mxu0 %v1004
  %v1006 = vand.u32 %v40, 4294901760
  %1007 = vmatprep.subr.mxu0 %v1006
  %v1008 = vand.u32 %v39, 4294901760
  %1009 = vmatpush1.msra.mxu0 %v1008
  %v1010 = vand.u32 %v36, 4294901760
  %1011 = vmatprep.subr.mxu0 %v1010
  %v1012 = vand.u32 %v35, 4294901760
  %1013 = vmatpush1.msra.mxu0 %v1012
  %v1014 = vand.u32 %v32, 4294901760
  %1015 = vmatprep.subr.mxu0 %v1014
  %v1016 = vand.u32 %v31, 4294901760
  %1017 = vmatpush1.msra.mxu0 %v1016
  %v1018 = vand.u32 %v28, 4294901760
  %1019 = vmatprep.subr.mxu0 %v1018
  %v1020 = vand.u32 %v27, 4294901760
  %1021 = vmatpush1.msra.mxu0 %v1020
  %v1022 = vand.u32 %v24, 4294901760
  %1023 = vmatprep.subr.mxu0 %v1022
  %v1024 = vand.u32 %v23, 4294901760
  %1025 = vmatpush1.msra.mxu0 %v1024
  %1026 = vmatprep.subr.mxu0 0.0
  %1027 = vmatpush2.msra.mxu0 0.0
  %1028 = vmatprep.subr.mxu0 0.0
  %1029 = vmatpush2.msra.mxu0 0.0
  %1030 = vmatprep.subr.mxu0 0.0
  %1031 = vmatpush2.msra.mxu0 0.0
  %1032 = vmatprep.subr.mxu0 0.0
  %1033 = vmatpush2.msra.mxu0 0.0
  %1034 = vmatprep.subr.mxu0 0.0
  %1035 = vmatpush2.msra.mxu0 0.0
  %1036 = vmatprep.subr.mxu0 0.0
  %1037 = vmatpush2.msra.mxu0 0.0
  %1038 = vmatprep.subr.mxu0 0.0
  %1039 = vmatpush2.msra.mxu0 0.0
  %1040 = vmatprep.subr.mxu0 0.0
  %1041 = vmatpush2.msra.mxu0 0.0
  %1042 = vmatprep.subr.mxu0 0.0
  %1043 = vmatpush2.msra.mxu0 0.0
  %1044 = vmatprep.subr.mxu0 0.0
  %1045 = vmatpush2.msra.mxu0 0.0
  %1046 = vmatprep.subr.mxu0 0.0
  %1047 = vmatpush2.msra.mxu0 0.0
  %1048 = vmatprep.subr.mxu0 0.0
  %1049 = vmatpush2.msra.mxu0 0.0
  %1050 = vmatprep.subr.mxu0 0.0
  %1051 = vmatpush2.msra.mxu0 0.0
  %1052 = vmatprep.subr.mxu0 0.0
  %1053 = vmatpush2.msra.mxu0 0.0
  %1054 = vmatprep.subr.mxu0 0.0
  %1055 = vmatpush2.msra.mxu0 0.0
  %1056 = vmatprep.subr.mxu0 0.0
  %1057 = vmatpush2.msra.mxu0 0.0
  %1058 = vmatprep.mubr.f32.mxu0 0.0
  %v1059 = vand.u32 %v20, 4294901760
  %v1060 = vsub.f32 %v20, %v1059
  %v1061 = vand.u32 %v1060, 4294901760
  %v1062 = vsub.f32 %v1060, %v1061
  %v1063 = vand.u32 %v1062, 4294901760
  %1064 = vmatmul.mubr.f32.gmra.mxu0 %v1063
  %v1065 = vpop.f32.mrf.mxu0
  %v1066 = vadd.f32 %v98, %v1065
  %v1067 = vpop.f32.mrf.mxu0
  %v1068 = vadd.f32 %v102, %v1067
  %1069 = vdwg.mxu0
  %v1070 = vand.u32 %v84, 4294901760
  %v1071 = vsub.f32 %v84, %v1070
  %v1072 = vand.u32 %v1071, 4294901760
  %v1073 = vsub.f32 %v1071, %v1072
  %v1074 = vand.u32 %v1073, 4294901760
  %1075 = vmatprep.subr.mxu0 %v1074
  %v1076 = vand.u32 %v83, 4294901760
  %v1077 = vsub.f32 %v83, %v1076
  %v1078 = vand.u32 %v1077, 4294901760
  %v1079 = vsub.f32 %v1077, %v1078
  %v1080 = vand.u32 %v1079, 4294901760
  %1081 = vmatpush1.msra.mxu0 %v1080
  %v1082 = vand.u32 %v80, 4294901760
  %v1083 = vsub.f32 %v80, %v1082
  %v1084 = vand.u32 %v1083, 4294901760
  %v1085 = vsub.f32 %v1083, %v1084
  %v1086 = vand.u32 %v1085, 4294901760
  %1087 = vmatprep.subr.mxu0 %v1086
  %v1088 = vand.u32 %v79, 4294901760
  %v1089 = vsub.f32 %v79, %v1088
  %v1090 = vand.u32 %v1089, 4294901760
  %v1091 = vsub.f32 %v1089, %v1090
  %v1092 = vand.u32 %v1091, 4294901760
  %1093 = vmatpush1.msra.mxu0 %v1092
  %v1094 = vand.u32 %v76, 4294901760
  %v1095 = vsub.f32 %v76, %v1094
  %v1096 = vand.u32 %v1095, 4294901760
  %v1097 = vsub.f32 %v1095, %v1096
  %v1098 = vand.u32 %v1097, 4294901760
  %1099 = vmatprep.subr.mxu0 %v1098
  %v1100 = vand.u32 %v75, 4294901760
  %v1101 = vsub.f32 %v75, %v1100
  %v1102 = vand.u32 %v1101, 4294901760
  %v1103 = vsub.f32 %v1101, %v1102
  %v1104 = vand.u32 %v1103, 4294901760
  %1105 = vmatpush1.msra.mxu0 %v1104
  %v1106 = vand.u32 %v72, 4294901760
  %v1107 = vsub.f32 %v72, %v1106
  %v1108 = vand.u32 %v1107, 4294901760
  %v1109 = vsub.f32 %v1107, %v1108
  %v1110 = vand.u32 %v1109, 4294901760
  %1111 = vmatprep.subr.mxu0 %v1110
  %v1112 = vand.u32 %v71, 4294901760
  %v1113 = vsub.f32 %v71, %v1112
  %v1114 = vand.u32 %v1113, 4294901760
  %v1115 = vsub.f32 %v1113, %v1114
  %v1116 = vand.u32 %v1115, 4294901760
  %1117 = vmatpush1.msra.mxu0 %v1116
  %v1118 = vand.u32 %v68, 4294901760
  %v1119 = vsub.f32 %v68, %v1118
  %v1120 = vand.u32 %v1119, 4294901760
  %v1121 = vsub.f32 %v1119, %v1120
  %v1122 = vand.u32 %v1121, 4294901760
  %1123 = vmatprep.subr.mxu0 %v1122
  %v1124 = vand.u32 %v67, 4294901760
  %v1125 = vsub.f32 %v67, %v1124
  %v1126 = vand.u32 %v1125, 4294901760
  %v1127 = vsub.f32 %v1125, %v1126
  %v1128 = vand.u32 %v1127, 4294901760
  %1129 = vmatpush1.msra.mxu0 %v1128
  %v1130 = vand.u32 %v64, 4294901760
  %v1131 = vsub.f32 %v64, %v1130
  %v1132 = vand.u32 %v1131, 4294901760
  %v1133 = vsub.f32 %v1131, %v1132
  %v1134 = vand.u32 %v1133, 4294901760
  %1135 = vmatprep.subr.mxu0 %v1134
  %v1136 = vand.u32 %v63, 4294901760
  %v1137 = vsub.f32 %v63, %v1136
  %v1138 = vand.u32 %v1137, 4294901760
  %v1139 = vsub.f32 %v1137, %v1138
  %v1140 = vand.u32 %v1139, 4294901760
  %1141 = vmatpush1.msra.mxu0 %v1140
  %v1142 = vand.u32 %v60, 4294901760
  %v1143 = vsub.f32 %v60, %v1142
  %v1144 = vand.u32 %v1143, 4294901760
  %v1145 = vsub.f32 %v1143, %v1144
  %v1146 = vand.u32 %v1145, 4294901760
  %1147 = vmatprep.subr.mxu0 %v1146
  %v1148 = vand.u32 %v59, 4294901760
  %v1149 = vsub.f32 %v59, %v1148
  %v1150 = vand.u32 %v1149, 4294901760
  %v1151 = vsub.f32 %v1149, %v1150
  %v1152 = vand.u32 %v1151, 4294901760
  %1153 = vmatpush1.msra.mxu0 %v1152
  %v1154 = vand.u32 %v56, 4294901760
  %v1155 = vsub.f32 %v56, %v1154
  %v1156 = vand.u32 %v1155, 4294901760
  %v1157 = vsub.f32 %v1155, %v1156
  %v1158 = vand.u32 %v1157, 4294901760
  %1159 = vmatprep.subr.mxu0 %v1158
  %v1160 = vand.u32 %v55, 4294901760
  %v1161 = vsub.f32 %v55, %v1160
  %v1162 = vand.u32 %v1161, 4294901760
  %v1163 = vsub.f32 %v1161, %v1162
  %v1164 = vand.u32 %v1163, 4294901760
  %1165 = vmatpush1.msra.mxu0 %v1164
  %v1166 = vand.u32 %v52, 4294901760
  %v1167 = vsub.f32 %v52, %v1166
  %v1168 = vand.u32 %v1167, 4294901760
  %v1169 = vsub.f32 %v1167, %v1168
  %v1170 = vand.u32 %v1169, 4294901760
  %1171 = vmatprep.subr.mxu0 %v1170
  %v1172 = vand.u32 %v51, 4294901760
  %v1173 = vsub.f32 %v51, %v1172
  %v1174 = vand.u32 %v1173, 4294901760
  %v1175 = vsub.f32 %v1173, %v1174
  %v1176 = vand.u32 %v1175, 4294901760
  %1177 = vmatpush1.msra.mxu0 %v1176
  %v1178 = vand.u32 %v48, 4294901760
  %v1179 = vsub.f32 %v48, %v1178
  %v1180 = vand.u32 %v1179, 4294901760
  %v1181 = vsub.f32 %v1179, %v1180
  %v1182 = vand.u32 %v1181, 4294901760
  %1183 = vmatprep.subr.mxu0 %v1182
  %v1184 = vand.u32 %v47, 4294901760
  %v1185 = vsub.f32 %v47, %v1184
  %v1186 = vand.u32 %v1185, 4294901760
  %v1187 = vsub.f32 %v1185, %v1186
  %v1188 = vand.u32 %v1187, 4294901760
  %1189 = vmatpush1.msra.mxu0 %v1188
  %v1190 = vand.u32 %v44, 4294901760
  %v1191 = vsub.f32 %v44, %v1190
  %v1192 = vand.u32 %v1191, 4294901760
  %v1193 = vsub.f32 %v1191, %v1192
  %v1194 = vand.u32 %v1193, 4294901760
  %1195 = vmatprep.subr.mxu0 %v1194
  %v1196 = vand.u32 %v43, 4294901760
  %v1197 = vsub.f32 %v43, %v1196
  %v1198 = vand.u32 %v1197, 4294901760
  %v1199 = vsub.f32 %v1197, %v1198
  %v1200 = vand.u32 %v1199, 4294901760
  %1201 = vmatpush1.msra.mxu0 %v1200
  %v1202 = vand.u32 %v40, 4294901760
  %v1203 = vsub.f32 %v40, %v1202
  %v1204 = vand.u32 %v1203, 4294901760
  %v1205 = vsub.f32 %v1203, %v1204
  %v1206 = vand.u32 %v1205, 4294901760
  %1207 = vmatprep.subr.mxu0 %v1206
  %v1208 = vand.u32 %v39, 4294901760
  %v1209 = vsub.f32 %v39, %v1208
  %v1210 = vand.u32 %v1209, 4294901760
  %v1211 = vsub.f32 %v1209, %v1210
  %v1212 = vand.u32 %v1211, 4294901760
  %1213 = vmatpush1.msra.mxu0 %v1212
  %v1214 = vand.u32 %v36, 4294901760
  %v1215 = vsub.f32 %v36, %v1214
  %v1216 = vand.u32 %v1215, 4294901760
  %v1217 = vsub.f32 %v1215, %v1216
  %v1218 = vand.u32 %v1217, 4294901760
  %1219 = vmatprep.subr.mxu0 %v1218
  %v1220 = vand.u32 %v35, 4294901760
  %v1221 = vsub.f32 %v35, %v1220
  %v1222 = vand.u32 %v1221, 4294901760
  %v1223 = vsub.f32 %v1221, %v1222
  %v1224 = vand.u32 %v1223, 4294901760
  %1225 = vmatpush1.msra.mxu0 %v1224
  %v1226 = vand.u32 %v32, 4294901760
  %v1227 = vsub.f32 %v32, %v1226
  %v1228 = vand.u32 %v1227, 4294901760
  %v1229 = vsub.f32 %v1227, %v1228
  %v1230 = vand.u32 %v1229, 4294901760
  %1231 = vmatprep.subr.mxu0 %v1230
  %v1232 = vand.u32 %v31, 4294901760
  %v1233 = vsub.f32 %v31, %v1232
  %v1234 = vand.u32 %v1233, 4294901760
  %v1235 = vsub.f32 %v1233, %v1234
  %v1236 = vand.u32 %v1235, 4294901760
  %1237 = vmatpush1.msra.mxu0 %v1236
  %v1238 = vand.u32 %v28, 4294901760
  %v1239 = vsub.f32 %v28, %v1238
  %v1240 = vand.u32 %v1239, 4294901760
  %v1241 = vsub.f32 %v1239, %v1240
  %v1242 = vand.u32 %v1241, 4294901760
  %1243 = vmatprep.subr.mxu0 %v1242
  %v1244 = vand.u32 %v27, 4294901760
  %v1245 = vsub.f32 %v27, %v1244
  %v1246 = vand.u32 %v1245, 4294901760
  %v1247 = vsub.f32 %v1245, %v1246
  %v1248 = vand.u32 %v1247, 4294901760
  %1249 = vmatpush1.msra.mxu0 %v1248
  %v1250 = vand.u32 %v24, 4294901760
  %v1251 = vsub.f32 %v24, %v1250
  %v1252 = vand.u32 %v1251, 4294901760
  %v1253 = vsub.f32 %v1251, %v1252
  %v1254 = vand.u32 %v1253, 4294901760
  %1255 = vmatprep.subr.mxu0 %v1254
  %v1256 = vand.u32 %v23, 4294901760
  %v1257 = vsub.f32 %v23, %v1256
  %v1258 = vand.u32 %v1257, 4294901760
  %v1259 = vsub.f32 %v1257, %v1258
  %v1260 = vand.u32 %v1259, 4294901760
  %1261 = vmatpush1.msra.mxu0 %v1260
  %1262 = vmatprep.subr.mxu0 0.0
  %1263 = vmatpush2.msra.mxu0 0.0
  %1264 = vmatprep.subr.mxu0 0.0
  %1265 = vmatpush2.msra.mxu0 0.0
  %1266 = vmatprep.subr.mxu0 0.0
  %1267 = vmatpush2.msra.mxu0 0.0
  %1268 = vmatprep.subr.mxu0 0.0
  %1269 = vmatpush2.msra.mxu0 0.0
  %1270 = vmatprep.subr.mxu0 0.0
  %1271 = vmatpush2.msra.mxu0 0.0
  %1272 = vmatprep.subr.mxu0 0.0
  %1273 = vmatpush2.msra.mxu0 0.0
  %1274 = vmatprep.subr.mxu0 0.0
  %1275 = vmatpush2.msra.mxu0 0.0
  %1276 = vmatprep.subr.mxu0 0.0
  %1277 = vmatpush2.msra.mxu0 0.0
  %1278 = vmatprep.subr.mxu0 0.0
  %1279 = vmatpush2.msra.mxu0 0.0
  %1280 = vmatprep.subr.mxu0 0.0
  %1281 = vmatpush2.msra.mxu0 0.0
  %1282 = vmatprep.subr.mxu0 0.0
  %1283 = vmatpush2.msra.mxu0 0.0
  %1284 = vmatprep.subr.mxu0 0.0
  %1285 = vmatpush2.msra.mxu0 0.0
  %1286 = vmatprep.subr.mxu0 0.0
  %1287 = vmatpush2.msra.mxu0 0.0
  %1288 = vmatprep.subr.mxu0 0.0
  %1289 = vmatpush2.msra.mxu0 0.0
  %1290 = vmatprep.subr.mxu0 0.0
  %1291 = vmatpush2.msra.mxu0 0.0
  %1292 = vmatprep.subr.mxu0 0.0
  %1293 = vmatpush2.msra.mxu0 0.0
  %1294 = vmatprep.mubr.f32.mxu0 0.0
  %v1295 = vand.u32 %v20, 4294901760
  %1296 = vmatmul.mubr.f32.gmra.mxu0 %v1295
  %v1297 = vpop.f32.mrf.mxu0
  %v1298 = vadd.f32 %v1066, %v1297
  %v1299 = vpop.f32.mrf.mxu0
  %v1300 = vadd.f32 %v1068, %v1299
  %1301 = vdwg.mxu0
  %v1302 = vand.u32 %v84, 4294901760
  %v1303 = vsub.f32 %v84, %v1302
  %1304 = vmatprep.subr.mxu0 %v1303
  %v1305 = vand.u32 %v83, 4294901760
  %v1306 = vsub.f32 %v83, %v1305
  %1307 = vmatpush1.msra.mxu0 %v1306
  %v1308 = vand.u32 %v80, 4294901760
  %v1309 = vsub.f32 %v80, %v1308
  %1310 = vmatprep.subr.mxu0 %v1309
  %v1311 = vand.u32 %v79, 4294901760
  %v1312 = vsub.f32 %v79, %v1311
  %1313 = vmatpush1.msra.mxu0 %v1312
  %v1314 = vand.u32 %v76, 4294901760
  %v1315 = vsub.f32 %v76, %v1314
  %1316 = vmatprep.subr.mxu0 %v1315
  %v1317 = vand.u32 %v75, 4294901760
  %v1318 = vsub.f32 %v75, %v1317
  %1319 = vmatpush1.msra.mxu0 %v1318
  %v1320 = vand.u32 %v72, 4294901760
  %v1321 = vsub.f32 %v72, %v1320
  %1322 = vmatprep.subr.mxu0 %v1321
  %v1323 = vand.u32 %v71, 4294901760
  %v1324 = vsub.f32 %v71, %v1323
  %1325 = vmatpush1.msra.mxu0 %v1324
  %v1326 = vand.u32 %v68, 4294901760
  %v1327 = vsub.f32 %v68, %v1326
  %1328 = vmatprep.subr.mxu0 %v1327
  %v1329 = vand.u32 %v67, 4294901760
  %v1330 = vsub.f32 %v67, %v1329
  %1331 = vmatpush1.msra.mxu0 %v1330
  %v1332 = vand.u32 %v64, 4294901760
  %v1333 = vsub.f32 %v64, %v1332
  %1334 = vmatprep.subr.mxu0 %v1333
  %v1335 = vand.u32 %v63, 4294901760
  %v1336 = vsub.f32 %v63, %v1335
  %1337 = vmatpush1.msra.mxu0 %v1336
  %v1338 = vand.u32 %v60, 4294901760
  %v1339 = vsub.f32 %v60, %v1338
  %1340 = vmatprep.subr.mxu0 %v1339
  %v1341 = vand.u32 %v59, 4294901760
  %v1342 = vsub.f32 %v59, %v1341
  %1343 = vmatpush1.msra.mxu0 %v1342
  %v1344 = vand.u32 %v56, 4294901760
  %v1345 = vsub.f32 %v56, %v1344
  %1346 = vmatprep.subr.mxu0 %v1345
  %v1347 = vand.u32 %v55, 4294901760
  %v1348 = vsub.f32 %v55, %v1347
  %1349 = vmatpush1.msra.mxu0 %v1348
  %v1350 = vand.u32 %v52, 4294901760
  %v1351 = vsub.f32 %v52, %v1350
  %1352 = vmatprep.subr.mxu0 %v1351
  %v1353 = vand.u32 %v51, 4294901760
  %v1354 = vsub.f32 %v51, %v1353
  %1355 = vmatpush1.msra.mxu0 %v1354
  %v1356 = vand.u32 %v48, 4294901760
  %v1357 = vsub.f32 %v48, %v1356
  %1358 = vmatprep.subr.mxu0 %v1357
  %v1359 = vand.u32 %v47, 4294901760
  %v1360 = vsub.f32 %v47, %v1359
  %1361 = vmatpush1.msra.mxu0 %v1360
  %v1362 = vand.u32 %v44, 4294901760
  %v1363 = vsub.f32 %v44, %v1362
  %1364 = vmatprep.subr.mxu0 %v1363
  %v1365 = vand.u32 %v43, 4294901760
  %v1366 = vsub.f32 %v43, %v1365
  %1367 = vmatpush1.msra.mxu0 %v1366
  %v1368 = vand.u32 %v40, 4294901760
  %v1369 = vsub.f32 %v40, %v1368
  %1370 = vmatprep.subr.mxu0 %v1369
  %v1371 = vand.u32 %v39, 4294901760
  %v1372 = vsub.f32 %v39, %v1371
  %1373 = vmatpush1.msra.mxu0 %v1372
  %v1374 = vand.u32 %v36, 4294901760
  %v1375 = vsub.f32 %v36, %v1374
  %1376 = vmatprep.subr.mxu0 %v1375
  %v1377 = vand.u32 %v35, 4294901760
  %v1378 = vsub.f32 %v35, %v1377
  %1379 = vmatpush1.msra.mxu0 %v1378
  %v1380 = vand.u32 %v32, 4294901760
  %v1381 = vsub.f32 %v32, %v1380
  %1382 = vmatprep.subr.mxu0 %v1381
  %v1383 = vand.u32 %v31, 4294901760
  %v1384 = vsub.f32 %v31, %v1383
  %1385 = vmatpush1.msra.mxu0 %v1384
  %v1386 = vand.u32 %v28, 4294901760
  %v1387 = vsub.f32 %v28, %v1386
  %1388 = vmatprep.subr.mxu0 %v1387
  %v1389 = vand.u32 %v27, 4294901760
  %v1390 = vsub.f32 %v27, %v1389
  %1391 = vmatpush1.msra.mxu0 %v1390
  %v1392 = vand.u32 %v24, 4294901760
  %v1393 = vsub.f32 %v24, %v1392
  %1394 = vmatprep.subr.mxu0 %v1393
  %v1395 = vand.u32 %v23, 4294901760
  %v1396 = vsub.f32 %v23, %v1395
  %1397 = vmatpush1.msra.mxu0 %v1396
  %1398 = vmatprep.subr.mxu0 0.0
  %1399 = vmatpush2.msra.mxu0 0.0
  %1400 = vmatprep.subr.mxu0 0.0
  %1401 = vmatpush2.msra.mxu0 0.0
  %1402 = vmatprep.subr.mxu0 0.0
  %1403 = vmatpush2.msra.mxu0 0.0
  %1404 = vmatprep.subr.mxu0 0.0
  %1405 = vmatpush2.msra.mxu0 0.0
  %1406 = vmatprep.subr.mxu0 0.0
  %1407 = vmatpush2.msra.mxu0 0.0
  %1408 = vmatprep.subr.mxu0 0.0
  %1409 = vmatpush2.msra.mxu0 0.0
  %1410 = vmatprep.subr.mxu0 0.0
  %1411 = vmatpush2.msra.mxu0 0.0
  %1412 = vmatprep.subr.mxu0 0.0
  %1413 = vmatpush2.msra.mxu0 0.0
  %1414 = vmatprep.subr.mxu0 0.0
  %1415 = vmatpush2.msra.mxu0 0.0
  %1416 = vmatprep.subr.mxu0 0.0
  %1417 = vmatpush2.msra.mxu0 0.0
  %1418 = vmatprep.subr.mxu0 0.0
  %1419 = vmatpush2.msra.mxu0 0.0
  %1420 = vmatprep.subr.mxu0 0.0
  %1421 = vmatpush2.msra.mxu0 0.0
  %1422 = vmatprep.subr.mxu0 0.0
  %1423 = vmatpush2.msra.mxu0 0.0
  %1424 = vmatprep.subr.mxu0 0.0
  %1425 = vmatpush2.msra.mxu0 0.0
  %1426 = vmatprep.subr.mxu0 0.0
  %1427 = vmatpush2.msra.mxu0 0.0
  %1428 = vmatprep.subr.mxu0 0.0
  %1429 = vmatpush2.msra.mxu0 0.0
  %1430 = vmatprep.mubr.f32.mxu0 0.0
  %v1431 = vand.u32 %v20, 4294901760
  %v1432 = vsub.f32 %v20, %v1431
  %1433 = vmatmul.mubr.f32.gmra.mxu0 %v1432
  %v1434 = vpop.f32.mrf.mxu0
  %v1435 = vadd.f32 %v1298, %v1434
  %v1436 = vpop.f32.mrf.mxu0
  %v1437 = vadd.f32 %v1300, %v1436
  %1438 = vdwg.mxu0
  %v1439 = vand.u32 %v84, 4294901760
  %1440 = vmatprep.subr.mxu0 %v1439
  %v1441 = vand.u32 %v83, 4294901760
  %1442 = vmatpush1.msra.mxu0 %v1441
  %v1443 = vand.u32 %v80, 4294901760
  %1444 = vmatprep.subr.mxu0 %v1443
  %v1445 = vand.u32 %v79, 4294901760
  %1446 = vmatpush1.msra.mxu0 %v1445
  %v1447 = vand.u32 %v76, 4294901760
  %1448 = vmatprep.subr.mxu0 %v1447
  %v1449 = vand.u32 %v75, 4294901760
  %1450 = vmatpush1.msra.mxu0 %v1449
  %v1451 = vand.u32 %v72, 4294901760
  %1452 = vmatprep.subr.mxu0 %v1451
  %v1453 = vand.u32 %v71, 4294901760
  %1454 = vmatpush1.msra.mxu0 %v1453
  %v1455 = vand.u32 %v68, 4294901760
  %1456 = vmatprep.subr.mxu0 %v1455
  %v1457 = vand.u32 %v67, 4294901760
  %1458 = vmatpush1.msra.mxu0 %v1457
  %v1459 = vand.u32 %v64, 4294901760
  %1460 = vmatprep.subr.mxu0 %v1459
  %v1461 = vand.u32 %v63, 4294901760
  %1462 = vmatpush1.msra.mxu0 %v1461
  %v1463 = vand.u32 %v60, 4294901760
  %1464 = vmatprep.subr.mxu0 %v1463
  %v1465 = vand.u32 %v59, 4294901760
  %1466 = vmatpush1.msra.mxu0 %v1465
  %v1467 = vand.u32 %v56, 4294901760
  %1468 = vmatprep.subr.mxu0 %v1467
  %v1469 = vand.u32 %v55, 4294901760
  %1470 = vmatpush1.msra.mxu0 %v1469
  %v1471 = vand.u32 %v52, 4294901760
  %1472 = vmatprep.subr.mxu0 %v1471
  %v1473 = vand.u32 %v51, 4294901760
  %1474 = vmatpush1.msra.mxu0 %v1473
  %v1475 = vand.u32 %v48, 4294901760
  %1476 = vmatprep.subr.mxu0 %v1475
  %v1477 = vand.u32 %v47, 4294901760
  %1478 = vmatpush1.msra.mxu0 %v1477
  %v1479 = vand.u32 %v44, 4294901760
  %1480 = vmatprep.subr.mxu0 %v1479
  %v1481 = vand.u32 %v43, 4294901760
  %1482 = vmatpush1.msra.mxu0 %v1481
  %v1483 = vand.u32 %v40, 4294901760
  %1484 = vmatprep.subr.mxu0 %v1483
  %v1485 = vand.u32 %v39, 4294901760
  %1486 = vmatpush1.msra.mxu0 %v1485
  %v1487 = vand.u32 %v36, 4294901760
  %1488 = vmatprep.subr.mxu0 %v1487
  %v1489 = vand.u32 %v35, 4294901760
  %1490 = vmatpush1.msra.mxu0 %v1489
  %v1491 = vand.u32 %v32, 4294901760
  %1492 = vmatprep.subr.mxu0 %v1491
  %v1493 = vand.u32 %v31, 4294901760
  %1494 = vmatpush1.msra.mxu0 %v1493
  %v1495 = vand.u32 %v28, 4294901760
  %1496 = vmatprep.subr.mxu0 %v1495
  %v1497 = vand.u32 %v27, 4294901760
  %1498 = vmatpush1.msra.mxu0 %v1497
  %v1499 = vand.u32 %v24, 4294901760
  %1500 = vmatprep.subr.mxu0 %v1499
  %v1501 = vand.u32 %v23, 4294901760
  %1502 = vmatpush1.msra.mxu0 %v1501
  %1503 = vmatprep.subr.mxu0 0.0
  %1504 = vmatpush2.msra.mxu0 0.0
  %1505 = vmatprep.subr.mxu0 0.0
  %1506 = vmatpush2.msra.mxu0 0.0
  %1507 = vmatprep.subr.mxu0 0.0
  %1508 = vmatpush2.msra.mxu0 0.0
  %1509 = vmatprep.subr.mxu0 0.0
  %1510 = vmatpush2.msra.mxu0 0.0
  %1511 = vmatprep.subr.mxu0 0.0
  %1512 = vmatpush2.msra.mxu0 0.0
  %1513 = vmatprep.subr.mxu0 0.0
  %1514 = vmatpush2.msra.mxu0 0.0
  %1515 = vmatprep.subr.mxu0 0.0
  %1516 = vmatpush2.msra.mxu0 0.0
  %1517 = vmatprep.subr.mxu0 0.0
  %1518 = vmatpush2.msra.mxu0 0.0
  %1519 = vmatprep.subr.mxu0 0.0
  %1520 = vmatpush2.msra.mxu0 0.0
  %1521 = vmatprep.subr.mxu0 0.0
  %1522 = vmatpush2.msra.mxu0 0.0
  %1523 = vmatprep.subr.mxu0 0.0
  %1524 = vmatpush2.msra.mxu0 0.0
  %1525 = vmatprep.subr.mxu0 0.0
  %1526 = vmatpush2.msra.mxu0 0.0
  %1527 = vmatprep.subr.mxu0 0.0
  %1528 = vmatpush2.msra.mxu0 0.0
  %1529 = vmatprep.subr.mxu0 0.0
  %1530 = vmatpush2.msra.mxu0 0.0
  %1531 = vmatprep.subr.mxu0 0.0
  %1532 = vmatpush2.msra.mxu0 0.0
  %1533 = vmatprep.subr.mxu0 0.0
  %1534 = vmatpush2.msra.mxu0 0.0
  %1535 = vmatprep.mubr.f32.mxu0 0.0
  %v1536 = vand.u32 %v20, 4294901760
  %v1537 = vsub.f32 %v20, %v1536
  %v1538 = vand.u32 %v1537, 4294901760
  %1539 = vmatmul.mubr.f32.gmra.mxu0 %v1538
  %v1540 = vpop.f32.mrf.mxu0
  %v1541 = vadd.f32 %v1435, %v1540
  %v1542 = vpop.f32.mrf.mxu0
  %v1543 = vadd.f32 %v1437, %v1542
  %1544 = vdwg.mxu0
  %v1545 = vand.u32 %v84, 4294901760
  %v1546 = vsub.f32 %v84, %v1545
  %v1547 = vand.u32 %v1546, 4294901760
  %1548 = vmatprep.subr.mxu0 %v1547
  %v1549 = vand.u32 %v83, 4294901760
  %v1550 = vsub.f32 %v83, %v1549
  %v1551 = vand.u32 %v1550, 4294901760
  %1552 = vmatpush1.msra.mxu0 %v1551
  %v1553 = vand.u32 %v80, 4294901760
  %v1554 = vsub.f32 %v80, %v1553
  %v1555 = vand.u32 %v1554, 4294901760
  %1556 = vmatprep.subr.mxu0 %v1555
  %v1557 = vand.u32 %v79, 4294901760
  %v1558 = vsub.f32 %v79, %v1557
  %v1559 = vand.u32 %v1558, 4294901760
  %1560 = vmatpush1.msra.mxu0 %v1559
  %v1561 = vand.u32 %v76, 4294901760
  %v1562 = vsub.f32 %v76, %v1561
  %v1563 = vand.u32 %v1562, 4294901760
  %1564 = vmatprep.subr.mxu0 %v1563
  %v1565 = vand.u32 %v75, 4294901760
  %v1566 = vsub.f32 %v75, %v1565
  %v1567 = vand.u32 %v1566, 4294901760
  %1568 = vmatpush1.msra.mxu0 %v1567
  %v1569 = vand.u32 %v72, 4294901760
  %v1570 = vsub.f32 %v72, %v1569
  %v1571 = vand.u32 %v1570, 4294901760
  %1572 = vmatprep.subr.mxu0 %v1571
  %v1573 = vand.u32 %v71, 4294901760
  %v1574 = vsub.f32 %v71, %v1573
  %v1575 = vand.u32 %v1574, 4294901760
  %1576 = vmatpush1.msra.mxu0 %v1575
  %v1577 = vand.u32 %v68, 4294901760
  %v1578 = vsub.f32 %v68, %v1577
  %v1579 = vand.u32 %v1578, 4294901760
  %1580 = vmatprep.subr.mxu0 %v1579
  %v1581 = vand.u32 %v67, 4294901760
  %v1582 = vsub.f32 %v67, %v1581
  %v1583 = vand.u32 %v1582, 4294901760
  %1584 = vmatpush1.msra.mxu0 %v1583
  %v1585 = vand.u32 %v64, 4294901760
  %v1586 = vsub.f32 %v64, %v1585
  %v1587 = vand.u32 %v1586, 4294901760
  %1588 = vmatprep.subr.mxu0 %v1587
  %v1589 = vand.u32 %v63, 4294901760
  %v1590 = vsub.f32 %v63, %v1589
  %v1591 = vand.u32 %v1590, 4294901760
  %1592 = vmatpush1.msra.mxu0 %v1591
  %v1593 = vand.u32 %v60, 4294901760
  %v1594 = vsub.f32 %v60, %v1593
  %v1595 = vand.u32 %v1594, 4294901760
  %1596 = vmatprep.subr.mxu0 %v1595
  %v1597 = vand.u32 %v59, 4294901760
  %v1598 = vsub.f32 %v59, %v1597
  %v1599 = vand.u32 %v1598, 4294901760
  %1600 = vmatpush1.msra.mxu0 %v1599
  %v1601 = vand.u32 %v56, 4294901760
  %v1602 = vsub.f32 %v56, %v1601
  %v1603 = vand.u32 %v1602, 4294901760
  %1604 = vmatprep.subr.mxu0 %v1603
  %v1605 = vand.u32 %v55, 4294901760
  %v1606 = vsub.f32 %v55, %v1605
  %v1607 = vand.u32 %v1606, 4294901760
  %1608 = vmatpush1.msra.mxu0 %v1607
  %v1609 = vand.u32 %v52, 4294901760
  %v1610 = vsub.f32 %v52, %v1609
  %v1611 = vand.u32 %v1610, 4294901760
  %1612 = vmatprep.subr.mxu0 %v1611
  %v1613 = vand.u32 %v51, 4294901760
  %v1614 = vsub.f32 %v51, %v1613
  %v1615 = vand.u32 %v1614, 4294901760
  %1616 = vmatpush1.msra.mxu0 %v1615
  %v1617 = vand.u32 %v48, 4294901760
  %v1618 = vsub.f32 %v48, %v1617
  %v1619 = vand.u32 %v1618, 4294901760
  %1620 = vmatprep.subr.mxu0 %v1619
  %v1621 = vand.u32 %v47, 4294901760
  %v1622 = vsub.f32 %v47, %v1621
  %v1623 = vand.u32 %v1622, 4294901760
  %1624 = vmatpush1.msra.mxu0 %v1623
  %v1625 = vand.u32 %v44, 4294901760
  %v1626 = vsub.f32 %v44, %v1625
  %v1627 = vand.u32 %v1626, 4294901760
  %1628 = vmatprep.subr.mxu0 %v1627
  %v1629 = vand.u32 %v43, 4294901760
  %v1630 = vsub.f32 %v43, %v1629
  %v1631 = vand.u32 %v1630, 4294901760
  %1632 = vmatpush1.msra.mxu0 %v1631
  %v1633 = vand.u32 %v40, 4294901760
  %v1634 = vsub.f32 %v40, %v1633
  %v1635 = vand.u32 %v1634, 4294901760
  %1636 = vmatprep.subr.mxu0 %v1635
  %v1637 = vand.u32 %v39, 4294901760
  %v1638 = vsub.f32 %v39, %v1637
  %v1639 = vand.u32 %v1638, 4294901760
  %1640 = vmatpush1.msra.mxu0 %v1639
  %v1641 = vand.u32 %v36, 4294901760
  %v1642 = vsub.f32 %v36, %v1641
  %v1643 = vand.u32 %v1642, 4294901760
  %1644 = vmatprep.subr.mxu0 %v1643
  %v1645 = vand.u32 %v35, 4294901760
  %v1646 = vsub.f32 %v35, %v1645
  %v1647 = vand.u32 %v1646, 4294901760
  %1648 = vmatpush1.msra.mxu0 %v1647
  %v1649 = vand.u32 %v32, 4294901760
  %v1650 = vsub.f32 %v32, %v1649
  %v1651 = vand.u32 %v1650, 4294901760
  %1652 = vmatprep.subr.mxu0 %v1651
  %v1653 = vand.u32 %v31, 4294901760
  %v1654 = vsub.f32 %v31, %v1653
  %v1655 = vand.u32 %v1654, 4294901760
  %1656 = vmatpush1.msra.mxu0 %v1655
  %v1657 = vand.u32 %v28, 4294901760
  %v1658 = vsub.f32 %v28, %v1657
  %v1659 = vand.u32 %v1658, 4294901760
  %1660 = vmatprep.subr.mxu0 %v1659
  %v1661 = vand.u32 %v27, 4294901760
  %v1662 = vsub.f32 %v27, %v1661
  %v1663 = vand.u32 %v1662, 4294901760
  %1664 = vmatpush1.msra.mxu0 %v1663
  %v1665 = vand.u32 %v24, 4294901760
  %v1666 = vsub.f32 %v24, %v1665
  %v1667 = vand.u32 %v1666, 4294901760
  %1668 = vmatprep.subr.mxu0 %v1667
  %v1669 = vand.u32 %v23, 4294901760
  %v1670 = vsub.f32 %v23, %v1669
  %v1671 = vand.u32 %v1670, 4294901760
  %1672 = vmatpush1.msra.mxu0 %v1671
  %1673 = vmatprep.subr.mxu0 0.0
  %1674 = vmatpush2.msra.mxu0 0.0
  %1675 = vmatprep.subr.mxu0 0.0
  %1676 = vmatpush2.msra.mxu0 0.0
  %1677 = vmatprep.subr.mxu0 0.0
  %1678 = vmatpush2.msra.mxu0 0.0
  %1679 = vmatprep.subr.mxu0 0.0
  %1680 = vmatpush2.msra.mxu0 0.0
  %1681 = vmatprep.subr.mxu0 0.0
  %1682 = vmatpush2.msra.mxu0 0.0
  %1683 = vmatprep.subr.mxu0 0.0
  %1684 = vmatpush2.msra.mxu0 0.0
  %1685 = vmatprep.subr.mxu0 0.0
  %1686 = vmatpush2.msra.mxu0 0.0
  %1687 = vmatprep.subr.mxu0 0.0
  %1688 = vmatpush2.msra.mxu0 0.0
  %1689 = vmatprep.subr.mxu0 0.0
  %1690 = vmatpush2.msra.mxu0 0.0
  %1691 = vmatprep.subr.mxu0 0.0
  %1692 = vmatpush2.msra.mxu0 0.0
  %1693 = vmatprep.subr.mxu0 0.0
  %1694 = vmatpush2.msra.mxu0 0.0
  %1695 = vmatprep.subr.mxu0 0.0
  %1696 = vmatpush2.msra.mxu0 0.0
  %1697 = vmatprep.subr.mxu0 0.0
  %1698 = vmatpush2.msra.mxu0 0.0
  %1699 = vmatprep.subr.mxu0 0.0
  %1700 = vmatpush2.msra.mxu0 0.0
  %1701 = vmatprep.subr.mxu0 0.0
  %1702 = vmatpush2.msra.mxu0 0.0
  %1703 = vmatprep.subr.mxu0 0.0
  %1704 = vmatpush2.msra.mxu0 0.0
  %1705 = vmatprep.mubr.f32.mxu0 0.0
  %v1706 = vand.u32 %v20, 4294901760
  %1707 = vmatmul.mubr.f32.gmra.mxu0 %v1706
  %v1708 = vpop.f32.mrf.mxu0
  %v1709 = vadd.f32 %v1541, %v1708
  %v1710 = vpop.f32.mrf.mxu0
  %v1711 = vadd.f32 %v1543, %v1710
  %1712 = vdwg.mxu0
  %v1713 = vand.u32 %v84, 4294901760
  %1714 = vmatprep.subr.mxu0 %v1713
  %v1715 = vand.u32 %v83, 4294901760
  %1716 = vmatpush1.msra.mxu0 %v1715
  %v1717 = vand.u32 %v80, 4294901760
  %1718 = vmatprep.subr.mxu0 %v1717
  %v1719 = vand.u32 %v79, 4294901760
  %1720 = vmatpush1.msra.mxu0 %v1719
  %v1721 = vand.u32 %v76, 4294901760
  %1722 = vmatprep.subr.mxu0 %v1721
  %v1723 = vand.u32 %v75, 4294901760
  %1724 = vmatpush1.msra.mxu0 %v1723
  %v1725 = vand.u32 %v72, 4294901760
  %1726 = vmatprep.subr.mxu0 %v1725
  %v1727 = vand.u32 %v71, 4294901760
  %1728 = vmatpush1.msra.mxu0 %v1727
  %v1729 = vand.u32 %v68, 4294901760
  %1730 = vmatprep.subr.mxu0 %v1729
  %v1731 = vand.u32 %v67, 4294901760
  %1732 = vmatpush1.msra.mxu0 %v1731
  %v1733 = vand.u32 %v64, 4294901760
  %1734 = vmatprep.subr.mxu0 %v1733
  %v1735 = vand.u32 %v63, 4294901760
  %1736 = vmatpush1.msra.mxu0 %v1735
  %v1737 = vand.u32 %v60, 4294901760
  %1738 = vmatprep.subr.mxu0 %v1737
  %v1739 = vand.u32 %v59, 4294901760
  %1740 = vmatpush1.msra.mxu0 %v1739
  %v1741 = vand.u32 %v56, 4294901760
  %1742 = vmatprep.subr.mxu0 %v1741
  %v1743 = vand.u32 %v55, 4294901760
  %1744 = vmatpush1.msra.mxu0 %v1743
  %v1745 = vand.u32 %v52, 4294901760
  %1746 = vmatprep.subr.mxu0 %v1745
  %v1747 = vand.u32 %v51, 4294901760
  %1748 = vmatpush1.msra.mxu0 %v1747
  %v1749 = vand.u32 %v48, 4294901760
  %1750 = vmatprep.subr.mxu0 %v1749
  %v1751 = vand.u32 %v47, 4294901760
  %1752 = vmatpush1.msra.mxu0 %v1751
  %v1753 = vand.u32 %v44, 4294901760
  %1754 = vmatprep.subr.mxu0 %v1753
  %v1755 = vand.u32 %v43, 4294901760
  %1756 = vmatpush1.msra.mxu0 %v1755
  %v1757 = vand.u32 %v40, 4294901760
  %1758 = vmatprep.subr.mxu0 %v1757
  %v1759 = vand.u32 %v39, 4294901760
  %1760 = vmatpush1.msra.mxu0 %v1759
  %v1761 = vand.u32 %v36, 4294901760
  %1762 = vmatprep.subr.mxu0 %v1761
  %v1763 = vand.u32 %v35, 4294901760
  %1764 = vmatpush1.msra.mxu0 %v1763
  %v1765 = vand.u32 %v32, 4294901760
  %1766 = vmatprep.subr.mxu0 %v1765
  %v1767 = vand.u32 %v31, 4294901760
  %1768 = vmatpush1.msra.mxu0 %v1767
  %v1769 = vand.u32 %v28, 4294901760
  %1770 = vmatprep.subr.mxu0 %v1769
  %v1771 = vand.u32 %v27, 4294901760
  %1772 = vmatpush1.msra.mxu0 %v1771
  %v1773 = vand.u32 %v24, 4294901760
  %1774 = vmatprep.subr.mxu0 %v1773
  %v1775 = vand.u32 %v23, 4294901760
  %1776 = vmatpush1.msra.mxu0 %v1775
  %1777 = vmatprep.subr.mxu0 0.0
  %1778 = vmatpush2.msra.mxu0 0.0
  %1779 = vmatprep.subr.mxu0 0.0
  %1780 = vmatpush2.msra.mxu0 0.0
  %1781 = vmatprep.subr.mxu0 0.0
  %1782 = vmatpush2.msra.mxu0 0.0
  %1783 = vmatprep.subr.mxu0 0.0
  %1784 = vmatpush2.msra.mxu0 0.0
  %1785 = vmatprep.subr.mxu0 0.0
  %1786 = vmatpush2.msra.mxu0 0.0
  %1787 = vmatprep.subr.mxu0 0.0
  %1788 = vmatpush2.msra.mxu0 0.0
  %1789 = vmatprep.subr.mxu0 0.0
  %1790 = vmatpush2.msra.mxu0 0.0
  %1791 = vmatprep.subr.mxu0 0.0
  %1792 = vmatpush2.msra.mxu0 0.0
  %1793 = vmatprep.subr.mxu0 0.0
  %1794 = vmatpush2.msra.mxu0 0.0
  %1795 = vmatprep.subr.mxu0 0.0
  %1796 = vmatpush2.msra.mxu0 0.0
  %1797 = vmatprep.subr.mxu0 0.0
  %1798 = vmatpush2.msra.mxu0 0.0
  %1799 = vmatprep.subr.mxu0 0.0
  %1800 = vmatpush2.msra.mxu0 0.0
  %1801 = vmatprep.subr.mxu0 0.0
  %1802 = vmatpush2.msra.mxu0 0.0
  %1803 = vmatprep.subr.mxu0 0.0
  %1804 = vmatpush2.msra.mxu0 0.0
  %1805 = vmatprep.subr.mxu0 0.0
  %1806 = vmatpush2.msra.mxu0 0.0
  %1807 = vmatprep.subr.mxu0 0.0
  %1808 = vmatpush2.msra.mxu0 0.0
  %1809 = vmatprep.mubr.f32.mxu0 0.0
  %v1810 = vand.u32 %v20, 4294901760
  %1811 = vmatmul.mubr.f32.gmra.mxu0 %v1810
  %v1812 = vpop.f32.mrf.mxu0
  %v1813 = vadd.f32 %v1709, %v1812
  %v1814 = vpop.f32.mrf.mxu0
  %v1815 = vadd.f32 %v1711, %v1814
  %1816 = vdwg.mxu0
  %v1817 = vmax.f32 %v958, 0.0
  %v1818 = vmax.f32 %v960, 0.0
  %v1819 = vmax.f32 %v1813, 0.0
  %v1820 = vmax.f32 %v1815, 0.0
  %v1821 = vld [vmem:[%s3] sm:$0xff]
  %v1822 = vld [vmem:[%s3 + $0x8] sm:$0xff]
  %v1823 = vld [vmem:[%s3 + $0x10] sm:$0xff]
  %v1824 = vld [vmem:[%s3 + $0x18] sm:$0xff]
  %v1825 = vld [vmem:[%s3 + $0x20] sm:$0xff]
  %v1826 = vld [vmem:[%s3 + $0x28] sm:$0xff]
  %v1827 = vld [vmem:[%s3 + $0x30] sm:$0xff]
  %v1828 = vld [vmem:[%s3 + $0x38] sm:$0xff]
  %v1829 = vld [vmem:[%s3 + $0x40] sm:$0xff]
  %v1830 = vld [vmem:[%s3 + $0x48] sm:$0xff]
  %v1831 = vld [vmem:[%s3 + $0x50] sm:$0xff]
  %v1832 = vld [vmem:[%s3 + $0x58] sm:$0xff]
  %v1833 = vld [vmem:[%s3 + $0x60] sm:$0xff]
  %v1834 = vld [vmem:[%s3 + $0x68] sm:$0xff]
  %v1835 = vld [vmem:[%s3 + $0x70] sm:$0xff]
  %v1836 = vld [vmem:[%s3 + $0x78] sm:$0xff]
  %v1837 = vld [vmem:[%s3 + $0x80] sm:$0xff]
  %v1838 = vld [vmem:[%s3 + $0x88] sm:$0xff]
  %v1839 = vld [vmem:[%s3 + $0x90] sm:$0xff]
  %v1840 = vld [vmem:[%s3 + $0x98] sm:$0xff]
  %v1841 = vld [vmem:[%s3 + $0xa0] sm:$0xff]
  %v1842 = vld [vmem:[%s3 + $0xa8] sm:$0xff]
  %v1843 = vld [vmem:[%s3 + $0xb0] sm:$0xff]
  %v1844 = vld [vmem:[%s3 + $0xb8] sm:$0xff]
  %v1845 = vld [vmem:[%s3 + $0xc0] sm:$0xff]
  %v1846 = vld [vmem:[%s3 + $0xc8] sm:$0xff]
  %v1847 = vld [vmem:[%s3 + $0xd0] sm:$0xff]
  %v1848 = vld [vmem:[%s3 + $0xd8] sm:$0xff]
  %v1849 = vld [vmem:[%s3 + $0xe0] sm:$0xff]
  %v1850 = vld [vmem:[%s3 + $0xe8] sm:$0xff]
  %v1851 = vld [vmem:[%s3 + $0xf0] sm:$0xff]
  %v1852 = vld [vmem:[%s3 + $0xf8] sm:$0xff]
  %v1853 = vld [vmem:[%s3 + $0x100] sm:$0xff]
  %v1854 = vld [vmem:[%s3 + $0x108] sm:$0xff]
  %v1855 = vld [vmem:[%s3 + $0x110] sm:$0xff]
  %v1856 = vld [vmem:[%s3 + $0x118] sm:$0xff]
  %v1857 = vld [vmem:[%s3 + $0x120] sm:$0xff]
  %v1858 = vld [vmem:[%s3 + $0x128] sm:$0xff]
  %v1859 = vld [vmem:[%s3 + $0x130] sm:$0xff]
  %v1860 = vld [vmem:[%s3 + $0x138] sm:$0xff]
  %v1861 = vld [vmem:[%s3 + $0x140] sm:$0xff]
  %v1862 = vld [vmem:[%s3 + $0x148] sm:$0xff]
  %v1863 = vld [vmem:[%s3 + $0x150] sm:$0xff]
  %v1864 = vld [vmem:[%s3 + $0x158] sm:$0xff]
  %v1865 = vld [vmem:[%s3 + $0x160] sm:$0xff]
  %v1866 = vld [vmem:[%s3 + $0x168] sm:$0xff]
  %v1867 = vld [vmem:[%s3 + $0x170] sm:$0xff]
  %v1868 = vld [vmem:[%s3 + $0x178] sm:$0xff]
  %v1869 = vld [vmem:[%s3 + $0x180] sm:$0xff]
  %v1870 = vld [vmem:[%s3 + $0x188] sm:$0xff]
  %v1871 = vld [vmem:[%s3 + $0x190] sm:$0xff]
  %v1872 = vld [vmem:[%s3 + $0x198] sm:$0xff]
  %v1873 = vld [vmem:[%s3 + $0x1a0] sm:$0xff]
  %v1874 = vld [vmem:[%s3 + $0x1a8] sm:$0xff]
  %v1875 = vld [vmem:[%s3 + $0x1b0] sm:$0xff]
  %v1876 = vld [vmem:[%s3 + $0x1b8] sm:$0xff]
  %v1877 = vld [vmem:[%s3 + $0x1c0] sm:$0xff]
  %v1878 = vld [vmem:[%s3 + $0x1c8] sm:$0xff]
  %v1879 = vld [vmem:[%s3 + $0x1d0] sm:$0xff]
  %v1880 = vld [vmem:[%s3 + $0x1d8] sm:$0xff]
  %v1881 = vld [vmem:[%s3 + $0x1e0] sm:$0xff]
  %v1882 = vld [vmem:[%s3 + $0x1e8] sm:$0xff]
  %v1883 = vld [vmem:[%s3 + $0x1f0] sm:$0xff]
  %v1884 = vld [vmem:[%s3 + $0x1f8] sm:$0xff]
  %v1885 = vld [vmem:[%s3 + $0x200] sm:$0xff]
  %v1886 = vld [vmem:[%s3 + $0x208] sm:$0xff]
  %v1887 = vld [vmem:[%s3 + $0x210] sm:$0xff]
  %v1888 = vld [vmem:[%s3 + $0x218] sm:$0xff]
  %v1889 = vld [vmem:[%s3 + $0x220] sm:$0xff]
  %v1890 = vld [vmem:[%s3 + $0x228] sm:$0xff]
  %v1891 = vld [vmem:[%s3 + $0x230] sm:$0xff]
  %v1892 = vld [vmem:[%s3 + $0x238] sm:$0xff]
  %v1893 = vld [vmem:[%s3 + $0x240] sm:$0xff]
  %v1894 = vld [vmem:[%s3 + $0x248] sm:$0xff]
  %v1895 = vld [vmem:[%s3 + $0x250] sm:$0xff]
  %v1896 = vld [vmem:[%s3 + $0x258] sm:$0xff]
  %v1897 = vld [vmem:[%s3 + $0x260] sm:$0xff]
  %v1898 = vld [vmem:[%s3 + $0x268] sm:$0xff]
  %v1899 = vld [vmem:[%s3 + $0x270] sm:$0xff]
  %v1900 = vld [vmem:[%s3 + $0x278] sm:$0xff]
  %v1901 = vld [vmem:[%s3 + $0x280] sm:$0xff]
  %v1902 = vld [vmem:[%s3 + $0x288] sm:$0xff]
  %v1903 = vld [vmem:[%s3 + $0x290] sm:$0xff]
  %v1904 = vld [vmem:[%s3 + $0x298] sm:$0xff]
  %v1905 = vld [vmem:[%s3 + $0x2a0] sm:$0xff]
  %v1906 = vld [vmem:[%s3 + $0x2a8] sm:$0xff]
  %v1907 = vld [vmem:[%s3 + $0x2b0] sm:$0xff]
  %v1908 = vld [vmem:[%s3 + $0x2b8] sm:$0xff]
  %v1909 = vld [vmem:[%s3 + $0x2c0] sm:$0xff]
  %v1910 = vld [vmem:[%s3 + $0x2c8] sm:$0xff]
  %v1911 = vld [vmem:[%s3 + $0x2d0] sm:$0xff]
  %v1912 = vld [vmem:[%s3 + $0x2d8] sm:$0xff]
  %v1913 = vld [vmem:[%s3 + $0x2e0] sm:$0xff]
  %v1914 = vld [vmem:[%s3 + $0x2e8] sm:$0xff]
  %v1915 = vld [vmem:[%s3 + $0x2f0] sm:$0xff]
  %v1916 = vld [vmem:[%s3 + $0x2f8] sm:$0xff]
  %v1917 = vld [vmem:[%s3 + $0x300] sm:$0xff]
  %v1918 = vld [vmem:[%s3 + $0x308] sm:$0xff]
  %v1919 = vld [vmem:[%s3 + $0x310] sm:$0xff]
  %v1920 = vld [vmem:[%s3 + $0x318] sm:$0xff]
  %v1921 = vld [vmem:[%s3 + $0x320] sm:$0xff]
  %v1922 = vld [vmem:[%s3 + $0x328] sm:$0xff]
  %v1923 = vld [vmem:[%s3 + $0x330] sm:$0xff]
  %v1924 = vld [vmem:[%s3 + $0x338] sm:$0xff]
  %v1925 = vld [vmem:[%s3 + $0x340] sm:$0xff]
  %v1926 = vld [vmem:[%s3 + $0x348] sm:$0xff]
  %v1927 = vld [vmem:[%s3 + $0x350] sm:$0xff]
  %v1928 = vld [vmem:[%s3 + $0x358] sm:$0xff]
  %v1929 = vld [vmem:[%s3 + $0x360] sm:$0xff]
  %v1930 = vld [vmem:[%s3 + $0x368] sm:$0xff]
  %v1931 = vld [vmem:[%s3 + $0x370] sm:$0xff]
  %v1932 = vld [vmem:[%s3 + $0x378] sm:$0xff]
  %v1933 = vld [vmem:[%s3 + $0x380] sm:$0xff]
  %v1934 = vld [vmem:[%s3 + $0x388] sm:$0xff]
  %v1935 = vld [vmem:[%s3 + $0x390] sm:$0xff]
  %v1936 = vld [vmem:[%s3 + $0x398] sm:$0xff]
  %v1937 = vld [vmem:[%s3 + $0x3a0] sm:$0xff]
  %v1938 = vld [vmem:[%s3 + $0x3a8] sm:$0xff]
  %v1939 = vld [vmem:[%s3 + $0x3b0] sm:$0xff]
  %v1940 = vld [vmem:[%s3 + $0x3b8] sm:$0xff]
  %v1941 = vld [vmem:[%s3 + $0x3c0] sm:$0xff]
  %v1942 = vld [vmem:[%s3 + $0x3c8] sm:$0xff]
  %v1943 = vld [vmem:[%s3 + $0x3d0] sm:$0xff]
  %v1944 = vld [vmem:[%s3 + $0x3d8] sm:$0xff]
  %v1945 = vld [vmem:[%s3 + $0x3e0] sm:$0xff]
  %v1946 = vld [vmem:[%s3 + $0x3e8] sm:$0xff]
  %v1947 = vld [vmem:[%s3 + $0x3f0] sm:$0xff]
  %v1948 = vld [vmem:[%s3 + $0x3f8] sm:$0xff]
  %v1949 = vld [vmem:[%s4] sm:$0x3]
  %v1951 = vlaneseq
  %v1952 = vshrl.u32 %v1951, 7
  %v1953 = vsub.s32 0, %v1952
  %v1954 = vrot.slane %v1949, %v1953
  %v1955 = vlaneseq
  %v1956 = vshrl.u32 %v1955, 7
  %v1957 = vsub.s32 1, %v1956
  %v1958 = vrot.slane %v1949, %v1957
  %v1961 = vand.u32 %v1852, 4294901760
  %1962 = vmatprep.subr.mxu0 %v1961
  %v1963 = vand.u32 %v1851, 4294901760
  %1964 = vmatpush1.msra.mxu0 %v1963
  %v1965 = vand.u32 %v1850, 4294901760
  %1966 = vmatprep.subr.mxu0 %v1965
  %v1967 = vand.u32 %v1849, 4294901760
  %1968 = vmatpush1.msra.mxu0 %v1967
  %v1969 = vand.u32 %v1848, 4294901760
  %1970 = vmatprep.subr.mxu0 %v1969
  %v1971 = vand.u32 %v1847, 4294901760
  %1972 = vmatpush1.msra.mxu0 %v1971
  %v1973 = vand.u32 %v1846, 4294901760
  %1974 = vmatprep.subr.mxu0 %v1973
  %v1975 = vand.u32 %v1845, 4294901760
  %1976 = vmatpush1.msra.mxu0 %v1975
  %v1977 = vand.u32 %v1844, 4294901760
  %1978 = vmatprep.subr.mxu0 %v1977
  %v1979 = vand.u32 %v1843, 4294901760
  %1980 = vmatpush1.msra.mxu0 %v1979
  %v1981 = vand.u32 %v1842, 4294901760
  %1982 = vmatprep.subr.mxu0 %v1981
  %v1983 = vand.u32 %v1841, 4294901760
  %1984 = vmatpush1.msra.mxu0 %v1983
  %v1985 = vand.u32 %v1840, 4294901760
  %1986 = vmatprep.subr.mxu0 %v1985
  %v1987 = vand.u32 %v1839, 4294901760
  %1988 = vmatpush1.msra.mxu0 %v1987
  %v1989 = vand.u32 %v1838, 4294901760
  %1990 = vmatprep.subr.mxu0 %v1989
  %v1991 = vand.u32 %v1837, 4294901760
  %1992 = vmatpush1.msra.mxu0 %v1991
  %v1993 = vand.u32 %v1836, 4294901760
  %1994 = vmatprep.subr.mxu0 %v1993
  %v1995 = vand.u32 %v1835, 4294901760
  %1996 = vmatpush1.msra.mxu0 %v1995
  %v1997 = vand.u32 %v1834, 4294901760
  %1998 = vmatprep.subr.mxu0 %v1997
  %v1999 = vand.u32 %v1833, 4294901760
  %2000 = vmatpush1.msra.mxu0 %v1999
  %v2001 = vand.u32 %v1832, 4294901760
  %2002 = vmatprep.subr.mxu0 %v2001
  %v2003 = vand.u32 %v1831, 4294901760
  %2004 = vmatpush1.msra.mxu0 %v2003
  %v2005 = vand.u32 %v1830, 4294901760
  %2006 = vmatprep.subr.mxu0 %v2005
  %v2007 = vand.u32 %v1829, 4294901760
  %2008 = vmatpush1.msra.mxu0 %v2007
  %v2009 = vand.u32 %v1828, 4294901760
  %2010 = vmatprep.subr.mxu0 %v2009
  %v2011 = vand.u32 %v1827, 4294901760
  %2012 = vmatpush1.msra.mxu0 %v2011
  %v2013 = vand.u32 %v1826, 4294901760
  %2014 = vmatprep.subr.mxu0 %v2013
  %v2015 = vand.u32 %v1825, 4294901760
  %2016 = vmatpush1.msra.mxu0 %v2015
  %v2017 = vand.u32 %v1824, 4294901760
  %2018 = vmatprep.subr.mxu0 %v2017
  %v2019 = vand.u32 %v1823, 4294901760
  %2020 = vmatpush1.msra.mxu0 %v2019
  %v2021 = vand.u32 %v1822, 4294901760
  %2022 = vmatprep.subr.mxu0 %v2021
  %v2023 = vand.u32 %v1821, 4294901760
  %2024 = vmatpush1.msra.mxu0 %v2023
  %v2025 = vand.u32 %v1884, 4294901760
  %2026 = vmatprep.subr.mxu0 %v2025
  %v2027 = vand.u32 %v1883, 4294901760
  %2028 = vmatpush2.msra.mxu0 %v2027
  %v2029 = vand.u32 %v1882, 4294901760
  %2030 = vmatprep.subr.mxu0 %v2029
  %v2031 = vand.u32 %v1881, 4294901760
  %2032 = vmatpush2.msra.mxu0 %v2031
  %v2033 = vand.u32 %v1880, 4294901760
  %2034 = vmatprep.subr.mxu0 %v2033
  %v2035 = vand.u32 %v1879, 4294901760
  %2036 = vmatpush2.msra.mxu0 %v2035
  %v2037 = vand.u32 %v1878, 4294901760
  %2038 = vmatprep.subr.mxu0 %v2037
  %v2039 = vand.u32 %v1877, 4294901760
  %2040 = vmatpush2.msra.mxu0 %v2039
  %v2041 = vand.u32 %v1876, 4294901760
  %2042 = vmatprep.subr.mxu0 %v2041
  %v2043 = vand.u32 %v1875, 4294901760
  %2044 = vmatpush2.msra.mxu0 %v2043
  %v2045 = vand.u32 %v1874, 4294901760
  %2046 = vmatprep.subr.mxu0 %v2045
  %v2047 = vand.u32 %v1873, 4294901760
  %2048 = vmatpush2.msra.mxu0 %v2047
  %v2049 = vand.u32 %v1872, 4294901760
  %2050 = vmatprep.subr.mxu0 %v2049
  %v2051 = vand.u32 %v1871, 4294901760
  %2052 = vmatpush2.msra.mxu0 %v2051
  %v2053 = vand.u32 %v1870, 4294901760
  %2054 = vmatprep.subr.mxu0 %v2053
  %v2055 = vand.u32 %v1869, 4294901760
  %2056 = vmatpush2.msra.mxu0 %v2055
  %v2057 = vand.u32 %v1868, 4294901760
  %2058 = vmatprep.subr.mxu0 %v2057
  %v2059 = vand.u32 %v1867, 4294901760
  %2060 = vmatpush2.msra.mxu0 %v2059
  %v2061 = vand.u32 %v1866, 4294901760
  %2062 = vmatprep.subr.mxu0 %v2061
  %v2063 = vand.u32 %v1865, 4294901760
  %2064 = vmatpush2.msra.mxu0 %v2063
  %v2065 = vand.u32 %v1864, 4294901760
  %2066 = vmatprep.subr.mxu0 %v2065
  %v2067 = vand.u32 %v1863, 4294901760
  %2068 = vmatpush2.msra.mxu0 %v2067
  %v2069 = vand.u32 %v1862, 4294901760
  %2070 = vmatprep.subr.mxu0 %v2069
  %v2071 = vand.u32 %v1861, 4294901760
  %2072 = vmatpush2.msra.mxu0 %v2071
  %v2073 = vand.u32 %v1860, 4294901760
  %2074 = vmatprep.subr.mxu0 %v2073
  %v2075 = vand.u32 %v1859, 4294901760
  %2076 = vmatpush2.msra.mxu0 %v2075
  %v2077 = vand.u32 %v1858, 4294901760
  %2078 = vmatprep.subr.mxu0 %v2077
  %v2079 = vand.u32 %v1857, 4294901760
  %2080 = vmatpush2.msra.mxu0 %v2079
  %v2081 = vand.u32 %v1856, 4294901760
  %2082 = vmatprep.subr.mxu0 %v2081
  %v2083 = vand.u32 %v1855, 4294901760
  %2084 = vmatpush2.msra.mxu0 %v2083
  %v2085 = vand.u32 %v1854, 4294901760
  %2086 = vmatprep.subr.mxu0 %v2085
  %v2087 = vand.u32 %v1853, 4294901760
  %2088 = vmatpush2.msra.mxu0 %v2087
  %v2089 = vand.u32 %v1818, 4294901760
  %v2090 = vsub.f32 %v1818, %v2089
  %v2091 = vand.u32 %v2090, 4294901760
  %v2092 = vsub.f32 %v2090, %v2091
  %v2093 = vand.u32 %v2092, 4294901760
  %2094 = vmatprep.mubr.f32.mxu0 %v2093
  %v2095 = vand.u32 %v1817, 4294901760
  %v2096 = vsub.f32 %v1817, %v2095
  %v2097 = vand.u32 %v2096, 4294901760
  %v2098 = vsub.f32 %v2096, %v2097
  %v2099 = vand.u32 %v2098, 4294901760
  %2100 = vmatmul.mubr.f32.gmra.mxu0 %v2099
  %v2101 = vpop.f32.mrf.mxu0
  %v2102 = vadd.f32 %v1954, %v2101
  %v2103 = vpop.f32.mrf.mxu0
  %v2104 = vadd.f32 %v1958, %v2103
  %2105 = vdwg.mxu0
  %v2106 = vand.u32 %v1852, 4294901760
  %v2107 = vsub.f32 %v1852, %v2106
  %v2108 = vand.u32 %v2107, 4294901760
  %v2109 = vsub.f32 %v2107, %v2108
  %v2110 = vand.u32 %v2109, 4294901760
  %2111 = vmatprep.subr.mxu0 %v2110
  %v2112 = vand.u32 %v1851, 4294901760
  %v2113 = vsub.f32 %v1851, %v2112
  %v2114 = vand.u32 %v2113, 4294901760
  %v2115 = vsub.f32 %v2113, %v2114
  %v2116 = vand.u32 %v2115, 4294901760
  %2117 = vmatpush1.msra.mxu0 %v2116
  %v2118 = vand.u32 %v1850, 4294901760
  %v2119 = vsub.f32 %v1850, %v2118
  %v2120 = vand.u32 %v2119, 4294901760
  %v2121 = vsub.f32 %v2119, %v2120
  %v2122 = vand.u32 %v2121, 4294901760
  %2123 = vmatprep.subr.mxu0 %v2122
  %v2124 = vand.u32 %v1849, 4294901760
  %v2125 = vsub.f32 %v1849, %v2124
  %v2126 = vand.u32 %v2125, 4294901760
  %v2127 = vsub.f32 %v2125, %v2126
  %v2128 = vand.u32 %v2127, 4294901760
  %2129 = vmatpush1.msra.mxu0 %v2128
  %v2130 = vand.u32 %v1848, 4294901760
  %v2131 = vsub.f32 %v1848, %v2130
  %v2132 = vand.u32 %v2131, 4294901760
  %v2133 = vsub.f32 %v2131, %v2132
  %v2134 = vand.u32 %v2133, 4294901760
  %2135 = vmatprep.subr.mxu0 %v2134
  %v2136 = vand.u32 %v1847, 4294901760
  %v2137 = vsub.f32 %v1847, %v2136
  %v2138 = vand.u32 %v2137, 4294901760
  %v2139 = vsub.f32 %v2137, %v2138
  %v2140 = vand.u32 %v2139, 4294901760
  %2141 = vmatpush1.msra.mxu0 %v2140
  %v2142 = vand.u32 %v1846, 4294901760
  %v2143 = vsub.f32 %v1846, %v2142
  %v2144 = vand.u32 %v2143, 4294901760
  %v2145 = vsub.f32 %v2143, %v2144
  %v2146 = vand.u32 %v2145, 4294901760
  %2147 = vmatprep.subr.mxu0 %v2146
  %v2148 = vand.u32 %v1845, 4294901760
  %v2149 = vsub.f32 %v1845, %v2148
  %v2150 = vand.u32 %v2149, 4294901760
  %v2151 = vsub.f32 %v2149, %v2150
  %v2152 = vand.u32 %v2151, 4294901760
  %2153 = vmatpush1.msra.mxu0 %v2152
  %v2154 = vand.u32 %v1844, 4294901760
  %v2155 = vsub.f32 %v1844, %v2154
  %v2156 = vand.u32 %v2155, 4294901760
  %v2157 = vsub.f32 %v2155, %v2156
  %v2158 = vand.u32 %v2157, 4294901760
  %2159 = vmatprep.subr.mxu0 %v2158
  %v2160 = vand.u32 %v1843, 4294901760
  %v2161 = vsub.f32 %v1843, %v2160
  %v2162 = vand.u32 %v2161, 4294901760
  %v2163 = vsub.f32 %v2161, %v2162
  %v2164 = vand.u32 %v2163, 4294901760
  %2165 = vmatpush1.msra.mxu0 %v2164
  %v2166 = vand.u32 %v1842, 4294901760
  %v2167 = vsub.f32 %v1842, %v2166
  %v2168 = vand.u32 %v2167, 4294901760
  %v2169 = vsub.f32 %v2167, %v2168
  %v2170 = vand.u32 %v2169, 4294901760
  %2171 = vmatprep.subr.mxu0 %v2170
  %v2172 = vand.u32 %v1841, 4294901760
  %v2173 = vsub.f32 %v1841, %v2172
  %v2174 = vand.u32 %v2173, 4294901760
  %v2175 = vsub.f32 %v2173, %v2174
  %v2176 = vand.u32 %v2175, 4294901760
  %2177 = vmatpush1.msra.mxu0 %v2176
  %v2178 = vand.u32 %v1840, 4294901760
  %v2179 = vsub.f32 %v1840, %v2178
  %v2180 = vand.u32 %v2179, 4294901760
  %v2181 = vsub.f32 %v2179, %v2180
  %v2182 = vand.u32 %v2181, 4294901760
  %2183 = vmatprep.subr.mxu0 %v2182
  %v2184 = vand.u32 %v1839, 4294901760
  %v2185 = vsub.f32 %v1839, %v2184
  %v2186 = vand.u32 %v2185, 4294901760
  %v2187 = vsub.f32 %v2185, %v2186
  %v2188 = vand.u32 %v2187, 4294901760
  %2189 = vmatpush1.msra.mxu0 %v2188
  %v2190 = vand.u32 %v1838, 4294901760
  %v2191 = vsub.f32 %v1838, %v2190
  %v2192 = vand.u32 %v2191, 4294901760
  %v2193 = vsub.f32 %v2191, %v2192
  %v2194 = vand.u32 %v2193, 4294901760
  %2195 = vmatprep.subr.mxu0 %v2194
  %v2196 = vand.u32 %v1837, 4294901760
  %v2197 = vsub.f32 %v1837, %v2196
  %v2198 = vand.u32 %v2197, 4294901760
  %v2199 = vsub.f32 %v2197, %v2198
  %v2200 = vand.u32 %v2199, 4294901760
  %2201 = vmatpush1.msra.mxu0 %v2200
  %v2202 = vand.u32 %v1836, 4294901760
  %v2203 = vsub.f32 %v1836, %v2202
  %v2204 = vand.u32 %v2203, 4294901760
  %v2205 = vsub.f32 %v2203, %v2204
  %v2206 = vand.u32 %v2205, 4294901760
  %2207 = vmatprep.subr.mxu0 %v2206
  %v2208 = vand.u32 %v1835, 4294901760
  %v2209 = vsub.f32 %v1835, %v2208
  %v2210 = vand.u32 %v2209, 4294901760
  %v2211 = vsub.f32 %v2209, %v2210
  %v2212 = vand.u32 %v2211, 4294901760
  %2213 = vmatpush1.msra.mxu0 %v2212
  %v2214 = vand.u32 %v1834, 4294901760
  %v2215 = vsub.f32 %v1834, %v2214
  %v2216 = vand.u32 %v2215, 4294901760
  %v2217 = vsub.f32 %v2215, %v2216
  %v2218 = vand.u32 %v2217, 4294901760
  %2219 = vmatprep.subr.mxu0 %v2218
  %v2220 = vand.u32 %v1833, 4294901760
  %v2221 = vsub.f32 %v1833, %v2220
  %v2222 = vand.u32 %v2221, 4294901760
  %v2223 = vsub.f32 %v2221, %v2222
  %v2224 = vand.u32 %v2223, 4294901760
  %2225 = vmatpush1.msra.mxu0 %v2224
  %v2226 = vand.u32 %v1832, 4294901760
  %v2227 = vsub.f32 %v1832, %v2226
  %v2228 = vand.u32 %v2227, 4294901760
  %v2229 = vsub.f32 %v2227, %v2228
  %v2230 = vand.u32 %v2229, 4294901760
  %2231 = vmatprep.subr.mxu0 %v2230
  %v2232 = vand.u32 %v1831, 4294901760
  %v2233 = vsub.f32 %v1831, %v2232
  %v2234 = vand.u32 %v2233, 4294901760
  %v2235 = vsub.f32 %v2233, %v2234
  %v2236 = vand.u32 %v2235, 4294901760
  %2237 = vmatpush1.msra.mxu0 %v2236
  %v2238 = vand.u32 %v1830, 4294901760
  %v2239 = vsub.f32 %v1830, %v2238
  %v2240 = vand.u32 %v2239, 4294901760
  %v2241 = vsub.f32 %v2239, %v2240
  %v2242 = vand.u32 %v2241, 4294901760
  %2243 = vmatprep.subr.mxu0 %v2242
  %v2244 = vand.u32 %v1829, 4294901760
  %v2245 = vsub.f32 %v1829, %v2244
  %v2246 = vand.u32 %v2245, 4294901760
  %v2247 = vsub.f32 %v2245, %v2246
  %v2248 = vand.u32 %v2247, 4294901760
  %2249 = vmatpush1.msra.mxu0 %v2248
  %v2250 = vand.u32 %v1828, 4294901760
  %v2251 = vsub.f32 %v1828, %v2250
  %v2252 = vand.u32 %v2251, 4294901760
  %v2253 = vsub.f32 %v2251, %v2252
  %v2254 = vand.u32 %v2253, 4294901760
  %2255 = vmatprep.subr.mxu0 %v2254
  %v2256 = vand.u32 %v1827, 4294901760
  %v2257 = vsub.f32 %v1827, %v2256
  %v2258 = vand.u32 %v2257, 4294901760
  %v2259 = vsub.f32 %v2257, %v2258
  %v2260 = vand.u32 %v2259, 4294901760
  %2261 = vmatpush1.msra.mxu0 %v2260
  %v2262 = vand.u32 %v1826, 4294901760
  %v2263 = vsub.f32 %v1826, %v2262
  %v2264 = vand.u32 %v2263, 4294901760
  %v2265 = vsub.f32 %v2263, %v2264
  %v2266 = vand.u32 %v2265, 4294901760
  %2267 = vmatprep.subr.mxu0 %v2266
  %v2268 = vand.u32 %v1825, 4294901760
  %v2269 = vsub.f32 %v1825, %v2268
  %v2270 = vand.u32 %v2269, 4294901760
  %v2271 = vsub.f32 %v2269, %v2270
  %v2272 = vand.u32 %v2271, 4294901760
  %2273 = vmatpush1.msra.mxu0 %v2272
  %v2274 = vand.u32 %v1824, 4294901760
  %v2275 = vsub.f32 %v1824, %v2274
  %v2276 = vand.u32 %v2275, 4294901760
  %v2277 = vsub.f32 %v2275, %v2276
  %v2278 = vand.u32 %v2277, 4294901760
  %2279 = vmatprep.subr.mxu0 %v2278
  %v2280 = vand.u32 %v1823, 4294901760
  %v2281 = vsub.f32 %v1823, %v2280
  %v2282 = vand.u32 %v2281, 4294901760
  %v2283 = vsub.f32 %v2281, %v2282
  %v2284 = vand.u32 %v2283, 4294901760
  %2285 = vmatpush1.msra.mxu0 %v2284
  %v2286 = vand.u32 %v1822, 4294901760
  %v2287 = vsub.f32 %v1822, %v2286
  %v2288 = vand.u32 %v2287, 4294901760
  %v2289 = vsub.f32 %v2287, %v2288
  %v2290 = vand.u32 %v2289, 4294901760
  %2291 = vmatprep.subr.mxu0 %v2290
  %v2292 = vand.u32 %v1821, 4294901760
  %v2293 = vsub.f32 %v1821, %v2292
  %v2294 = vand.u32 %v2293, 4294901760
  %v2295 = vsub.f32 %v2293, %v2294
  %v2296 = vand.u32 %v2295, 4294901760
  %2297 = vmatpush1.msra.mxu0 %v2296
  %v2298 = vand.u32 %v1884, 4294901760
  %v2299 = vsub.f32 %v1884, %v2298
  %v2300 = vand.u32 %v2299, 4294901760
  %v2301 = vsub.f32 %v2299, %v2300
  %v2302 = vand.u32 %v2301, 4294901760
  %2303 = vmatprep.subr.mxu0 %v2302
  %v2304 = vand.u32 %v1883, 4294901760
  %v2305 = vsub.f32 %v1883, %v2304
  %v2306 = vand.u32 %v2305, 4294901760
  %v2307 = vsub.f32 %v2305, %v2306
  %v2308 = vand.u32 %v2307, 4294901760
  %2309 = vmatpush2.msra.mxu0 %v2308
  %v2310 = vand.u32 %v1882, 4294901760
  %v2311 = vsub.f32 %v1882, %v2310
  %v2312 = vand.u32 %v2311, 4294901760
  %v2313 = vsub.f32 %v2311, %v2312
  %v2314 = vand.u32 %v2313, 4294901760
  %2315 = vmatprep.subr.mxu0 %v2314
  %v2316 = vand.u32 %v1881, 4294901760
  %v2317 = vsub.f32 %v1881, %v2316
  %v2318 = vand.u32 %v2317, 4294901760
  %v2319 = vsub.f32 %v2317, %v2318
  %v2320 = vand.u32 %v2319, 4294901760
  %2321 = vmatpush2.msra.mxu0 %v2320
  %v2322 = vand.u32 %v1880, 4294901760
  %v2323 = vsub.f32 %v1880, %v2322
  %v2324 = vand.u32 %v2323, 4294901760
  %v2325 = vsub.f32 %v2323, %v2324
  %v2326 = vand.u32 %v2325, 4294901760
  %2327 = vmatprep.subr.mxu0 %v2326
  %v2328 = vand.u32 %v1879, 4294901760
  %v2329 = vsub.f32 %v1879, %v2328
  %v2330 = vand.u32 %v2329, 4294901760
  %v2331 = vsub.f32 %v2329, %v2330
  %v2332 = vand.u32 %v2331, 4294901760
  %2333 = vmatpush2.msra.mxu0 %v2332
  %v2334 = vand.u32 %v1878, 4294901760
  %v2335 = vsub.f32 %v1878, %v2334
  %v2336 = vand.u32 %v2335, 4294901760
  %v2337 = vsub.f32 %v2335, %v2336
  %v2338 = vand.u32 %v2337, 4294901760
  %2339 = vmatprep.subr.mxu0 %v2338
  %v2340 = vand.u32 %v1877, 4294901760
  %v2341 = vsub.f32 %v1877, %v2340
  %v2342 = vand.u32 %v2341, 4294901760
  %v2343 = vsub.f32 %v2341, %v2342
  %v2344 = vand.u32 %v2343, 4294901760
  %2345 = vmatpush2.msra.mxu0 %v2344
  %v2346 = vand.u32 %v1876, 4294901760
  %v2347 = vsub.f32 %v1876, %v2346
  %v2348 = vand.u32 %v2347, 4294901760
  %v2349 = vsub.f32 %v2347, %v2348
  %v2350 = vand.u32 %v2349, 4294901760
  %2351 = vmatprep.subr.mxu0 %v2350
  %v2352 = vand.u32 %v1875, 4294901760
  %v2353 = vsub.f32 %v1875, %v2352
  %v2354 = vand.u32 %v2353, 4294901760
  %v2355 = vsub.f32 %v2353, %v2354
  %v2356 = vand.u32 %v2355, 4294901760
  %2357 = vmatpush2.msra.mxu0 %v2356
  %v2358 = vand.u32 %v1874, 4294901760
  %v2359 = vsub.f32 %v1874, %v2358
  %v2360 = vand.u32 %v2359, 4294901760
  %v2361 = vsub.f32 %v2359, %v2360
  %v2362 = vand.u32 %v2361, 4294901760
  %2363 = vmatprep.subr.mxu0 %v2362
  %v2364 = vand.u32 %v1873, 4294901760
  %v2365 = vsub.f32 %v1873, %v2364
  %v2366 = vand.u32 %v2365, 4294901760
  %v2367 = vsub.f32 %v2365, %v2366
  %v2368 = vand.u32 %v2367, 4294901760
  %2369 = vmatpush2.msra.mxu0 %v2368
  %v2370 = vand.u32 %v1872, 4294901760
  %v2371 = vsub.f32 %v1872, %v2370
  %v2372 = vand.u32 %v2371, 4294901760
  %v2373 = vsub.f32 %v2371, %v2372
  %v2374 = vand.u32 %v2373, 4294901760
  %2375 = vmatprep.subr.mxu0 %v2374
  %v2376 = vand.u32 %v1871, 4294901760
  %v2377 = vsub.f32 %v1871, %v2376
  %v2378 = vand.u32 %v2377, 4294901760
  %v2379 = vsub.f32 %v2377, %v2378
  %v2380 = vand.u32 %v2379, 4294901760
  %2381 = vmatpush2.msra.mxu0 %v2380
  %v2382 = vand.u32 %v1870, 4294901760
  %v2383 = vsub.f32 %v1870, %v2382
  %v2384 = vand.u32 %v2383, 4294901760
  %v2385 = vsub.f32 %v2383, %v2384
  %v2386 = vand.u32 %v2385, 4294901760
  %2387 = vmatprep.subr.mxu0 %v2386
  %v2388 = vand.u32 %v1869, 4294901760
  %v2389 = vsub.f32 %v1869, %v2388
  %v2390 = vand.u32 %v2389, 4294901760
  %v2391 = vsub.f32 %v2389, %v2390
  %v2392 = vand.u32 %v2391, 4294901760
  %2393 = vmatpush2.msra.mxu0 %v2392
  %v2394 = vand.u32 %v1868, 4294901760
  %v2395 = vsub.f32 %v1868, %v2394
  %v2396 = vand.u32 %v2395, 4294901760
  %v2397 = vsub.f32 %v2395, %v2396
  %v2398 = vand.u32 %v2397, 4294901760
  %2399 = vmatprep.subr.mxu0 %v2398
  %v2400 = vand.u32 %v1867, 4294901760
  %v2401 = vsub.f32 %v1867, %v2400
  %v2402 = vand.u32 %v2401, 4294901760
  %v2403 = vsub.f32 %v2401, %v2402
  %v2404 = vand.u32 %v2403, 4294901760
  %2405 = vmatpush2.msra.mxu0 %v2404
  %v2406 = vand.u32 %v1866, 4294901760
  %v2407 = vsub.f32 %v1866, %v2406
  %v2408 = vand.u32 %v2407, 4294901760
  %v2409 = vsub.f32 %v2407, %v2408
  %v2410 = vand.u32 %v2409, 4294901760
  %2411 = vmatprep.subr.mxu0 %v2410
  %v2412 = vand.u32 %v1865, 4294901760
  %v2413 = vsub.f32 %v1865, %v2412
  %v2414 = vand.u32 %v2413, 4294901760
  %v2415 = vsub.f32 %v2413, %v2414
  %v2416 = vand.u32 %v2415, 4294901760
  %2417 = vmatpush2.msra.mxu0 %v2416
  %v2418 = vand.u32 %v1864, 4294901760
  %v2419 = vsub.f32 %v1864, %v2418
  %v2420 = vand.u32 %v2419, 4294901760
  %v2421 = vsub.f32 %v2419, %v2420
  %v2422 = vand.u32 %v2421, 4294901760
  %2423 = vmatprep.subr.mxu0 %v2422
  %v2424 = vand.u32 %v1863, 4294901760
  %v2425 = vsub.f32 %v1863, %v2424
  %v2426 = vand.u32 %v2425, 4294901760
  %v2427 = vsub.f32 %v2425, %v2426
  %v2428 = vand.u32 %v2427, 4294901760
  %2429 = vmatpush2.msra.mxu0 %v2428
  %v2430 = vand.u32 %v1862, 4294901760
  %v2431 = vsub.f32 %v1862, %v2430
  %v2432 = vand.u32 %v2431, 4294901760
  %v2433 = vsub.f32 %v2431, %v2432
  %v2434 = vand.u32 %v2433, 4294901760
  %2435 = vmatprep.subr.mxu0 %v2434
  %v2436 = vand.u32 %v1861, 4294901760
  %v2437 = vsub.f32 %v1861, %v2436
  %v2438 = vand.u32 %v2437, 4294901760
  %v2439 = vsub.f32 %v2437, %v2438
  %v2440 = vand.u32 %v2439, 4294901760
  %2441 = vmatpush2.msra.mxu0 %v2440
  %v2442 = vand.u32 %v1860, 4294901760
  %v2443 = vsub.f32 %v1860, %v2442
  %v2444 = vand.u32 %v2443, 4294901760
  %v2445 = vsub.f32 %v2443, %v2444
  %v2446 = vand.u32 %v2445, 4294901760
  %2447 = vmatprep.subr.mxu0 %v2446
  %v2448 = vand.u32 %v1859, 4294901760
  %v2449 = vsub.f32 %v1859, %v2448
  %v2450 = vand.u32 %v2449, 4294901760
  %v2451 = vsub.f32 %v2449, %v2450
  %v2452 = vand.u32 %v2451, 4294901760
  %2453 = vmatpush2.msra.mxu0 %v2452
  %v2454 = vand.u32 %v1858, 4294901760
  %v2455 = vsub.f32 %v1858, %v2454
  %v2456 = vand.u32 %v2455, 4294901760
  %v2457 = vsub.f32 %v2455, %v2456
  %v2458 = vand.u32 %v2457, 4294901760
  %2459 = vmatprep.subr.mxu0 %v2458
  %v2460 = vand.u32 %v1857, 4294901760
  %v2461 = vsub.f32 %v1857, %v2460
  %v2462 = vand.u32 %v2461, 4294901760
  %v2463 = vsub.f32 %v2461, %v2462
  %v2464 = vand.u32 %v2463, 4294901760
  %2465 = vmatpush2.msra.mxu0 %v2464
  %v2466 = vand.u32 %v1856, 4294901760
  %v2467 = vsub.f32 %v1856, %v2466
  %v2468 = vand.u32 %v2467, 4294901760
  %v2469 = vsub.f32 %v2467, %v2468
  %v2470 = vand.u32 %v2469, 4294901760
  %2471 = vmatprep.subr.mxu0 %v2470
  %v2472 = vand.u32 %v1855, 4294901760
  %v2473 = vsub.f32 %v1855, %v2472
  %v2474 = vand.u32 %v2473, 4294901760
  %v2475 = vsub.f32 %v2473, %v2474
  %v2476 = vand.u32 %v2475, 4294901760
  %2477 = vmatpush2.msra.mxu0 %v2476
  %v2478 = vand.u32 %v1854, 4294901760
  %v2479 = vsub.f32 %v1854, %v2478
  %v2480 = vand.u32 %v2479, 4294901760
  %v2481 = vsub.f32 %v2479, %v2480
  %v2482 = vand.u32 %v2481, 4294901760
  %2483 = vmatprep.subr.mxu0 %v2482
  %v2484 = vand.u32 %v1853, 4294901760
  %v2485 = vsub.f32 %v1853, %v2484
  %v2486 = vand.u32 %v2485, 4294901760
  %v2487 = vsub.f32 %v2485, %v2486
  %v2488 = vand.u32 %v2487, 4294901760
  %2489 = vmatpush2.msra.mxu0 %v2488
  %v2490 = vand.u32 %v1818, 4294901760
  %2491 = vmatprep.mubr.f32.mxu0 %v2490
  %v2492 = vand.u32 %v1817, 4294901760
  %2493 = vmatmul.mubr.f32.gmra.mxu0 %v2492
  %v2494 = vpop.f32.mrf.mxu0
  %v2495 = vadd.f32 %v2102, %v2494
  %v2496 = vpop.f32.mrf.mxu0
  %v2497 = vadd.f32 %v2104, %v2496
  %2498 = vdwg.mxu0
  %v2499 = vand.u32 %v1852, 4294901760
  %v2500 = vsub.f32 %v1852, %v2499
  %2501 = vmatprep.subr.mxu0 %v2500
  %v2502 = vand.u32 %v1851, 4294901760
  %v2503 = vsub.f32 %v1851, %v2502
  %2504 = vmatpush1.msra.mxu0 %v2503
  %v2505 = vand.u32 %v1850, 4294901760
  %v2506 = vsub.f32 %v1850, %v2505
  %2507 = vmatprep.subr.mxu0 %v2506
  %v2508 = vand.u32 %v1849, 4294901760
  %v2509 = vsub.f32 %v1849, %v2508
  %2510 = vmatpush1.msra.mxu0 %v2509
  %v2511 = vand.u32 %v1848, 4294901760
  %v2512 = vsub.f32 %v1848, %v2511
  %2513 = vmatprep.subr.mxu0 %v2512
  %v2514 = vand.u32 %v1847, 4294901760
  %v2515 = vsub.f32 %v1847, %v2514
  %2516 = vmatpush1.msra.mxu0 %v2515
  %v2517 = vand.u32 %v1846, 4294901760
  %v2518 = vsub.f32 %v1846, %v2517
  %2519 = vmatprep.subr.mxu0 %v2518
  %v2520 = vand.u32 %v1845, 4294901760
  %v2521 = vsub.f32 %v1845, %v2520
  %2522 = vmatpush1.msra.mxu0 %v2521
  %v2523 = vand.u32 %v1844, 4294901760
  %v2524 = vsub.f32 %v1844, %v2523
  %2525 = vmatprep.subr.mxu0 %v2524
  %v2526 = vand.u32 %v1843, 4294901760
  %v2527 = vsub.f32 %v1843, %v2526
  %2528 = vmatpush1.msra.mxu0 %v2527
  %v2529 = vand.u32 %v1842, 4294901760
  %v2530 = vsub.f32 %v1842, %v2529
  %2531 = vmatprep.subr.mxu0 %v2530
  %v2532 = vand.u32 %v1841, 4294901760
  %v2533 = vsub.f32 %v1841, %v2532
  %2534 = vmatpush1.msra.mxu0 %v2533
  %v2535 = vand.u32 %v1840, 4294901760
  %v2536 = vsub.f32 %v1840, %v2535
  %2537 = vmatprep.subr.mxu0 %v2536
  %v2538 = vand.u32 %v1839, 4294901760
  %v2539 = vsub.f32 %v1839, %v2538
  %2540 = vmatpush1.msra.mxu0 %v2539
  %v2541 = vand.u32 %v1838, 4294901760
  %v2542 = vsub.f32 %v1838, %v2541
  %2543 = vmatprep.subr.mxu0 %v2542
  %v2544 = vand.u32 %v1837, 4294901760
  %v2545 = vsub.f32 %v1837, %v2544
  %2546 = vmatpush1.msra.mxu0 %v2545
  %v2547 = vand.u32 %v1836, 4294901760
  %v2548 = vsub.f32 %v1836, %v2547
  %2549 = vmatprep.subr.mxu0 %v2548
  %v2550 = vand.u32 %v1835, 4294901760
  %v2551 = vsub.f32 %v1835, %v2550
  %2552 = vmatpush1.msra.mxu0 %v2551
  %v2553 = vand.u32 %v1834, 4294901760
  %v2554 = vsub.f32 %v1834, %v2553
  %2555 = vmatprep.subr.mxu0 %v2554
  %v2556 = vand.u32 %v1833, 4294901760
  %v2557 = vsub.f32 %v1833, %v2556
  %2558 = vmatpush1.msra.mxu0 %v2557
  %v2559 = vand.u32 %v1832, 4294901760
  %v2560 = vsub.f32 %v1832, %v2559
  %2561 = vmatprep.subr.mxu0 %v2560
  %v2562 = vand.u32 %v1831, 4294901760
  %v2563 = vsub.f32 %v1831, %v2562
  %2564 = vmatpush1.msra.mxu0 %v2563
  %v2565 = vand.u32 %v1830, 4294901760
  %v2566 = vsub.f32 %v1830, %v2565
  %2567 = vmatprep.subr.mxu0 %v2566
  %v2568 = vand.u32 %v1829, 4294901760
  %v2569 = vsub.f32 %v1829, %v2568
  %2570 = vmatpush1.msra.mxu0 %v2569
  %v2571 = vand.u32 %v1828, 4294901760
  %v2572 = vsub.f32 %v1828, %v2571
  %2573 = vmatprep.subr.mxu0 %v2572
  %v2574 = vand.u32 %v1827, 4294901760
  %v2575 = vsub.f32 %v1827, %v2574
  %2576 = vmatpush1.msra.mxu0 %v2575
  %v2577 = vand.u32 %v1826, 4294901760
  %v2578 = vsub.f32 %v1826, %v2577
  %2579 = vmatprep.subr.mxu0 %v2578
  %v2580 = vand.u32 %v1825, 4294901760
  %v2581 = vsub.f32 %v1825, %v2580
  %2582 = vmatpush1.msra.mxu0 %v2581
  %v2583 = vand.u32 %v1824, 4294901760
  %v2584 = vsub.f32 %v1824, %v2583
  %2585 = vmatprep.subr.mxu0 %v2584
  %v2586 = vand.u32 %v1823, 4294901760
  %v2587 = vsub.f32 %v1823, %v2586
  %2588 = vmatpush1.msra.mxu0 %v2587
  %v2589 = vand.u32 %v1822, 4294901760
  %v2590 = vsub.f32 %v1822, %v2589
  %2591 = vmatprep.subr.mxu0 %v2590
  %v2592 = vand.u32 %v1821, 4294901760
  %v2593 = vsub.f32 %v1821, %v2592
  %2594 = vmatpush1.msra.mxu0 %v2593
  %v2595 = vand.u32 %v1884, 4294901760
  %v2596 = vsub.f32 %v1884, %v2595
  %2597 = vmatprep.subr.mxu0 %v2596
  %v2598 = vand.u32 %v1883, 4294901760
  %v2599 = vsub.f32 %v1883, %v2598
  %2600 = vmatpush2.msra.mxu0 %v2599
  %v2601 = vand.u32 %v1882, 4294901760
  %v2602 = vsub.f32 %v1882, %v2601
  %2603 = vmatprep.subr.mxu0 %v2602
  %v2604 = vand.u32 %v1881, 4294901760
  %v2605 = vsub.f32 %v1881, %v2604
  %2606 = vmatpush2.msra.mxu0 %v2605
  %v2607 = vand.u32 %v1880, 4294901760
  %v2608 = vsub.f32 %v1880, %v2607
  %2609 = vmatprep.subr.mxu0 %v2608
  %v2610 = vand.u32 %v1879, 4294901760
  %v2611 = vsub.f32 %v1879, %v2610
  %2612 = vmatpush2.msra.mxu0 %v2611
  %v2613 = vand.u32 %v1878, 4294901760
  %v2614 = vsub.f32 %v1878, %v2613
  %2615 = vmatprep.subr.mxu0 %v2614
  %v2616 = vand.u32 %v1877, 4294901760
  %v2617 = vsub.f32 %v1877, %v2616
  %2618 = vmatpush2.msra.mxu0 %v2617
  %v2619 = vand.u32 %v1876, 4294901760
  %v2620 = vsub.f32 %v1876, %v2619
  %2621 = vmatprep.subr.mxu0 %v2620
  %v2622 = vand.u32 %v1875, 4294901760
  %v2623 = vsub.f32 %v1875, %v2622
  %2624 = vmatpush2.msra.mxu0 %v2623
  %v2625 = vand.u32 %v1874, 4294901760
  %v2626 = vsub.f32 %v1874, %v2625
  %2627 = vmatprep.subr.mxu0 %v2626
  %v2628 = vand.u32 %v1873, 4294901760
  %v2629 = vsub.f32 %v1873, %v2628
  %2630 = vmatpush2.msra.mxu0 %v2629
  %v2631 = vand.u32 %v1872, 4294901760
  %v2632 = vsub.f32 %v1872, %v2631
  %2633 = vmatprep.subr.mxu0 %v2632
  %v2634 = vand.u32 %v1871, 4294901760
  %v2635 = vsub.f32 %v1871, %v2634
  %2636 = vmatpush2.msra.mxu0 %v2635
  %v2637 = vand.u32 %v1870, 4294901760
  %v2638 = vsub.f32 %v1870, %v2637
  %2639 = vmatprep.subr.mxu0 %v2638
  %v2640 = vand.u32 %v1869, 4294901760
  %v2641 = vsub.f32 %v1869, %v2640
  %2642 = vmatpush2.msra.mxu0 %v2641
  %v2643 = vand.u32 %v1868, 4294901760
  %v2644 = vsub.f32 %v1868, %v2643
  %2645 = vmatprep.subr.mxu0 %v2644
  %v2646 = vand.u32 %v1867, 4294901760
  %v2647 = vsub.f32 %v1867, %v2646
  %2648 = vmatpush2.msra.mxu0 %v2647
  %v2649 = vand.u32 %v1866, 4294901760
  %v2650 = vsub.f32 %v1866, %v2649
  %2651 = vmatprep.subr.mxu0 %v2650
  %v2652 = vand.u32 %v1865, 4294901760
  %v2653 = vsub.f32 %v1865, %v2652
  %2654 = vmatpush2.msra.mxu0 %v2653
  %v2655 = vand.u32 %v1864, 4294901760
  %v2656 = vsub.f32 %v1864, %v2655
  %2657 = vmatprep.subr.mxu0 %v2656
  %v2658 = vand.u32 %v1863, 4294901760
  %v2659 = vsub.f32 %v1863, %v2658
  %2660 = vmatpush2.msra.mxu0 %v2659
  %v2661 = vand.u32 %v1862, 4294901760
  %v2662 = vsub.f32 %v1862, %v2661
  %2663 = vmatprep.subr.mxu0 %v2662
  %v2664 = vand.u32 %v1861, 4294901760
  %v2665 = vsub.f32 %v1861, %v2664
  %2666 = vmatpush2.msra.mxu0 %v2665
  %v2667 = vand.u32 %v1860, 4294901760
  %v2668 = vsub.f32 %v1860, %v2667
  %2669 = vmatprep.subr.mxu0 %v2668
  %v2670 = vand.u32 %v1859, 4294901760
  %v2671 = vsub.f32 %v1859, %v2670
  %2672 = vmatpush2.msra.mxu0 %v2671
  %v2673 = vand.u32 %v1858, 4294901760
  %v2674 = vsub.f32 %v1858, %v2673
  %2675 = vmatprep.subr.mxu0 %v2674
  %v2676 = vand.u32 %v1857, 4294901760
  %v2677 = vsub.f32 %v1857, %v2676
  %2678 = vmatpush2.msra.mxu0 %v2677
  %v2679 = vand.u32 %v1856, 4294901760
  %v2680 = vsub.f32 %v1856, %v2679
  %2681 = vmatprep.subr.mxu0 %v2680
  %v2682 = vand.u32 %v1855, 4294901760
  %v2683 = vsub.f32 %v1855, %v2682
  %2684 = vmatpush2.msra.mxu0 %v2683
  %v2685 = vand.u32 %v1854, 4294901760
  %v2686 = vsub.f32 %v1854, %v2685
  %2687 = vmatprep.subr.mxu0 %v2686
  %v2688 = vand.u32 %v1853, 4294901760
  %v2689 = vsub.f32 %v1853, %v2688
  %2690 = vmatpush2.msra.mxu0 %v2689
  %v2691 = vand.u32 %v1818, 4294901760
  %v2692 = vsub.f32 %v1818, %v2691
  %2693 = vmatprep.mubr.f32.mxu0 %v2692
  %v2694 = vand.u32 %v1817, 4294901760
  %v2695 = vsub.f32 %v1817, %v2694
  %2696 = vmatmul.mubr.f32.gmra.mxu0 %v2695
  %v2697 = vpop.f32.mrf.mxu0
  %v2698 = vadd.f32 %v2495, %v2697
  %v2699 = vpop.f32.mrf.mxu0
  %v2700 = vadd.f32 %v2497, %v2699
  %2701 = vdwg.mxu0
  %v2702 = vand.u32 %v1852, 4294901760
  %2703 = vmatprep.subr.mxu0 %v2702
  %v2704 = vand.u32 %v1851, 4294901760
  %2705 = vmatpush1.msra.mxu0 %v2704
  %v2706 = vand.u32 %v1850, 4294901760
  %2707 = vmatprep.subr.mxu0 %v2706
  %v2708 = vand.u32 %v1849, 4294901760
  %2709 = vmatpush1.msra.mxu0 %v2708
  %v2710 = vand.u32 %v1848, 4294901760
  %2711 = vmatprep.subr.mxu0 %v2710
  %v2712 = vand.u32 %v1847, 4294901760
  %2713 = vmatpush1.msra.mxu0 %v2712
  %v2714 = vand.u32 %v1846, 4294901760
  %2715 = vmatprep.subr.mxu0 %v2714
  %v2716 = vand.u32 %v1845, 4294901760
  %2717 = vmatpush1.msra.mxu0 %v2716
  %v2718 = vand.u32 %v1844, 4294901760
  %2719 = vmatprep.subr.mxu0 %v2718
  %v2720 = vand.u32 %v1843, 4294901760
  %2721 = vmatpush1.msra.mxu0 %v2720
  %v2722 = vand.u32 %v1842, 4294901760
  %2723 = vmatprep.subr.mxu0 %v2722
  %v2724 = vand.u32 %v1841, 4294901760
  %2725 = vmatpush1.msra.mxu0 %v2724
  %v2726 = vand.u32 %v1840, 4294901760
  %2727 = vmatprep.subr.mxu0 %v2726
  %v2728 = vand.u32 %v1839, 4294901760
  %2729 = vmatpush1.msra.mxu0 %v2728
  %v2730 = vand.u32 %v1838, 4294901760
  %2731 = vmatprep.subr.mxu0 %v2730
  %v2732 = vand.u32 %v1837, 4294901760
  %2733 = vmatpush1.msra.mxu0 %v2732
  %v2734 = vand.u32 %v1836, 4294901760
  %2735 = vmatprep.subr.mxu0 %v2734
  %v2736 = vand.u32 %v1835, 4294901760
  %2737 = vmatpush1.msra.mxu0 %v2736
  %v2738 = vand.u32 %v1834, 4294901760
  %2739 = vmatprep.subr.mxu0 %v2738
  %v2740 = vand.u32 %v1833, 4294901760
  %2741 = vmatpush1.msra.mxu0 %v2740
  %v2742 = vand.u32 %v1832, 4294901760
  %2743 = vmatprep.subr.mxu0 %v2742
  %v2744 = vand.u32 %v1831, 4294901760
  %2745 = vmatpush1.msra.mxu0 %v2744
  %v2746 = vand.u32 %v1830, 4294901760
  %2747 = vmatprep.subr.mxu0 %v2746
  %v2748 = vand.u32 %v1829, 4294901760
  %2749 = vmatpush1.msra.mxu0 %v2748
  %v2750 = vand.u32 %v1828, 4294901760
  %2751 = vmatprep.subr.mxu0 %v2750
  %v2752 = vand.u32 %v1827, 4294901760
  %2753 = vmatpush1.msra.mxu0 %v2752
  %v2754 = vand.u32 %v1826, 4294901760
  %2755 = vmatprep.subr.mxu0 %v2754
  %v2756 = vand.u32 %v1825, 4294901760
  %2757 = vmatpush1.msra.mxu0 %v2756
  %v2758 = vand.u32 %v1824, 4294901760
  %2759 = vmatprep.subr.mxu0 %v2758
  %v2760 = vand.u32 %v1823, 4294901760
  %2761 = vmatpush1.msra.mxu0 %v2760
  %v2762 = vand.u32 %v1822, 4294901760
  %2763 = vmatprep.subr.mxu0 %v2762
  %v2764 = vand.u32 %v1821, 4294901760
  %2765 = vmatpush1.msra.mxu0 %v2764
  %v2766 = vand.u32 %v1884, 4294901760
  %2767 = vmatprep.subr.mxu0 %v2766
  %v2768 = vand.u32 %v1883, 4294901760
  %2769 = vmatpush2.msra.mxu0 %v2768
  %v2770 = vand.u32 %v1882, 4294901760
  %2771 = vmatprep.subr.mxu0 %v2770
  %v2772 = vand.u32 %v1881, 4294901760
  %2773 = vmatpush2.msra.mxu0 %v2772
  %v2774 = vand.u32 %v1880, 4294901760
  %2775 = vmatprep.subr.mxu0 %v2774
  %v2776 = vand.u32 %v1879, 4294901760
  %2777 = vmatpush2.msra.mxu0 %v2776
  %v2778 = vand.u32 %v1878, 4294901760
  %2779 = vmatprep.subr.mxu0 %v2778
  %v2780 = vand.u32 %v1877, 4294901760
  %2781 = vmatpush2.msra.mxu0 %v2780
  %v2782 = vand.u32 %v1876, 4294901760
  %2783 = vmatprep.subr.mxu0 %v2782
  %v2784 = vand.u32 %v1875, 4294901760
  %2785 = vmatpush2.msra.mxu0 %v2784
  %v2786 = vand.u32 %v1874, 4294901760
  %2787 = vmatprep.subr.mxu0 %v2786
  %v2788 = vand.u32 %v1873, 4294901760
  %2789 = vmatpush2.msra.mxu0 %v2788
  %v2790 = vand.u32 %v1872, 4294901760
  %2791 = vmatprep.subr.mxu0 %v2790
  %v2792 = vand.u32 %v1871, 4294901760
  %2793 = vmatpush2.msra.mxu0 %v2792
  %v2794 = vand.u32 %v1870, 4294901760
  %2795 = vmatprep.subr.mxu0 %v2794
  %v2796 = vand.u32 %v1869, 4294901760
  %2797 = vmatpush2.msra.mxu0 %v2796
  %v2798 = vand.u32 %v1868, 4294901760
  %2799 = vmatprep.subr.mxu0 %v2798
  %v2800 = vand.u32 %v1867, 4294901760
  %2801 = vmatpush2.msra.mxu0 %v2800
  %v2802 = vand.u32 %v1866, 4294901760
  %2803 = vmatprep.subr.mxu0 %v2802
  %v2804 = vand.u32 %v1865, 4294901760
  %2805 = vmatpush2.msra.mxu0 %v2804
  %v2806 = vand.u32 %v1864, 4294901760
  %2807 = vmatprep.subr.mxu0 %v2806
  %v2808 = vand.u32 %v1863, 4294901760
  %2809 = vmatpush2.msra.mxu0 %v2808
  %v2810 = vand.u32 %v1862, 4294901760
  %2811 = vmatprep.subr.mxu0 %v2810
  %v2812 = vand.u32 %v1861, 4294901760
  %2813 = vmatpush2.msra.mxu0 %v2812
  %v2814 = vand.u32 %v1860, 4294901760
  %2815 = vmatprep.subr.mxu0 %v2814
  %v2816 = vand.u32 %v1859, 4294901760
  %2817 = vmatpush2.msra.mxu0 %v2816
  %v2818 = vand.u32 %v1858, 4294901760
  %2819 = vmatprep.subr.mxu0 %v2818
  %v2820 = vand.u32 %v1857, 4294901760
  %2821 = vmatpush2.msra.mxu0 %v2820
  %v2822 = vand.u32 %v1856, 4294901760
  %2823 = vmatprep.subr.mxu0 %v2822
  %v2824 = vand.u32 %v1855, 4294901760
  %2825 = vmatpush2.msra.mxu0 %v2824
  %v2826 = vand.u32 %v1854, 4294901760
  %2827 = vmatprep.subr.mxu0 %v2826
  %v2828 = vand.u32 %v1853, 4294901760
  %2829 = vmatpush2.msra.mxu0 %v2828
  %v2830 = vand.u32 %v1818, 4294901760
  %v2831 = vsub.f32 %v1818, %v2830
  %v2832 = vand.u32 %v2831, 4294901760
  %2833 = vmatprep.mubr.f32.mxu0 %v2832
  %v2834 = vand.u32 %v1817, 4294901760
  %v2835 = vsub.f32 %v1817, %v2834
  %v2836 = vand.u32 %v2835, 4294901760
  %2837 = vmatmul.mubr.f32.gmra.mxu0 %v2836
  %v2838 = vpop.f32.mrf.mxu0
  %v2839 = vadd.f32 %v2698, %v2838
  %v2840 = vpop.f32.mrf.mxu0
  %v2841 = vadd.f32 %v2700, %v2840
  %2842 = vdwg.mxu0
  %v2843 = vand.u32 %v1852, 4294901760
  %v2844 = vsub.f32 %v1852, %v2843
  %v2845 = vand.u32 %v2844, 4294901760
  %2846 = vmatprep.subr.mxu0 %v2845
  %v2847 = vand.u32 %v1851, 4294901760
  %v2848 = vsub.f32 %v1851, %v2847
  %v2849 = vand.u32 %v2848, 4294901760
  %2850 = vmatpush1.msra.mxu0 %v2849
  %v2851 = vand.u32 %v1850, 4294901760
  %v2852 = vsub.f32 %v1850, %v2851
  %v2853 = vand.u32 %v2852, 4294901760
  %2854 = vmatprep.subr.mxu0 %v2853
  %v2855 = vand.u32 %v1849, 4294901760
  %v2856 = vsub.f32 %v1849, %v2855
  %v2857 = vand.u32 %v2856, 4294901760
  %2858 = vmatpush1.msra.mxu0 %v2857
  %v2859 = vand.u32 %v1848, 4294901760
  %v2860 = vsub.f32 %v1848, %v2859
  %v2861 = vand.u32 %v2860, 4294901760
  %2862 = vmatprep.subr.mxu0 %v2861
  %v2863 = vand.u32 %v1847, 4294901760
  %v2864 = vsub.f32 %v1847, %v2863
  %v2865 = vand.u32 %v2864, 4294901760
  %2866 = vmatpush1.msra.mxu0 %v2865
  %v2867 = vand.u32 %v1846, 4294901760
  %v2868 = vsub.f32 %v1846, %v2867
  %v2869 = vand.u32 %v2868, 4294901760
  %2870 = vmatprep.subr.mxu0 %v2869
  %v2871 = vand.u32 %v1845, 4294901760
  %v2872 = vsub.f32 %v1845, %v2871
  %v2873 = vand.u32 %v2872, 4294901760
  %2874 = vmatpush1.msra.mxu0 %v2873
  %v2875 = vand.u32 %v1844, 4294901760
  %v2876 = vsub.f32 %v1844, %v2875
  %v2877 = vand.u32 %v2876, 4294901760
  %2878 = vmatprep.subr.mxu0 %v2877
  %v2879 = vand.u32 %v1843, 4294901760
  %v2880 = vsub.f32 %v1843, %v2879
  %v2881 = vand.u32 %v2880, 4294901760
  %2882 = vmatpush1.msra.mxu0 %v2881
  %v2883 = vand.u32 %v1842, 4294901760
  %v2884 = vsub.f32 %v1842, %v2883
  %v2885 = vand.u32 %v2884, 4294901760
  %2886 = vmatprep.subr.mxu0 %v2885
  %v2887 = vand.u32 %v1841, 4294901760
  %v2888 = vsub.f32 %v1841, %v2887
  %v2889 = vand.u32 %v2888, 4294901760
  %2890 = vmatpush1.msra.mxu0 %v2889
  %v2891 = vand.u32 %v1840, 4294901760
  %v2892 = vsub.f32 %v1840, %v2891
  %v2893 = vand.u32 %v2892, 4294901760
  %2894 = vmatprep.subr.mxu0 %v2893
  %v2895 = vand.u32 %v1839, 4294901760
  %v2896 = vsub.f32 %v1839, %v2895
  %v2897 = vand.u32 %v2896, 4294901760
  %2898 = vmatpush1.msra.mxu0 %v2897
  %v2899 = vand.u32 %v1838, 4294901760
  %v2900 = vsub.f32 %v1838, %v2899
  %v2901 = vand.u32 %v2900, 4294901760
  %2902 = vmatprep.subr.mxu0 %v2901
  %v2903 = vand.u32 %v1837, 4294901760
  %v2904 = vsub.f32 %v1837, %v2903
  %v2905 = vand.u32 %v2904, 4294901760
  %2906 = vmatpush1.msra.mxu0 %v2905
  %v2907 = vand.u32 %v1836, 4294901760
  %v2908 = vsub.f32 %v1836, %v2907
  %v2909 = vand.u32 %v2908, 4294901760
  %2910 = vmatprep.subr.mxu0 %v2909
  %v2911 = vand.u32 %v1835, 4294901760
  %v2912 = vsub.f32 %v1835, %v2911
  %v2913 = vand.u32 %v2912, 4294901760
  %2914 = vmatpush1.msra.mxu0 %v2913
  %v2915 = vand.u32 %v1834, 4294901760
  %v2916 = vsub.f32 %v1834, %v2915
  %v2917 = vand.u32 %v2916, 4294901760
  %2918 = vmatprep.subr.mxu0 %v2917
  %v2919 = vand.u32 %v1833, 4294901760
  %v2920 = vsub.f32 %v1833, %v2919
  %v2921 = vand.u32 %v2920, 4294901760
  %2922 = vmatpush1.msra.mxu0 %v2921
  %v2923 = vand.u32 %v1832, 4294901760
  %v2924 = vsub.f32 %v1832, %v2923
  %v2925 = vand.u32 %v2924, 4294901760
  %2926 = vmatprep.subr.mxu0 %v2925
  %v2927 = vand.u32 %v1831, 4294901760
  %v2928 = vsub.f32 %v1831, %v2927
  %v2929 = vand.u32 %v2928, 4294901760
  %2930 = vmatpush1.msra.mxu0 %v2929
  %v2931 = vand.u32 %v1830, 4294901760
  %v2932 = vsub.f32 %v1830, %v2931
  %v2933 = vand.u32 %v2932, 4294901760
  %2934 = vmatprep.subr.mxu0 %v2933
  %v2935 = vand.u32 %v1829, 4294901760
  %v2936 = vsub.f32 %v1829, %v2935
  %v2937 = vand.u32 %v2936, 4294901760
  %2938 = vmatpush1.msra.mxu0 %v2937
  %v2939 = vand.u32 %v1828, 4294901760
  %v2940 = vsub.f32 %v1828, %v2939
  %v2941 = vand.u32 %v2940, 4294901760
  %2942 = vmatprep.subr.mxu0 %v2941
  %v2943 = vand.u32 %v1827, 4294901760
  %v2944 = vsub.f32 %v1827, %v2943
  %v2945 = vand.u32 %v2944, 4294901760
  %2946 = vmatpush1.msra.mxu0 %v2945
  %v2947 = vand.u32 %v1826, 4294901760
  %v2948 = vsub.f32 %v1826, %v2947
  %v2949 = vand.u32 %v2948, 4294901760
  %2950 = vmatprep.subr.mxu0 %v2949
  %v2951 = vand.u32 %v1825, 4294901760
  %v2952 = vsub.f32 %v1825, %v2951
  %v2953 = vand.u32 %v2952, 4294901760
  %2954 = vmatpush1.msra.mxu0 %v2953
  %v2955 = vand.u32 %v1824, 4294901760
  %v2956 = vsub.f32 %v1824, %v2955
  %v2957 = vand.u32 %v2956, 4294901760
  %2958 = vmatprep.subr.mxu0 %v2957
  %v2959 = vand.u32 %v1823, 4294901760
  %v2960 = vsub.f32 %v1823, %v2959
  %v2961 = vand.u32 %v2960, 4294901760
  %2962 = vmatpush1.msra.mxu0 %v2961
  %v2963 = vand.u32 %v1822, 4294901760
  %v2964 = vsub.f32 %v1822, %v2963
  %v2965 = vand.u32 %v2964, 4294901760
  %2966 = vmatprep.subr.mxu0 %v2965
  %v2967 = vand.u32 %v1821, 4294901760
  %v2968 = vsub.f32 %v1821, %v2967
  %v2969 = vand.u32 %v2968, 4294901760
  %2970 = vmatpush1.msra.mxu0 %v2969
  %v2971 = vand.u32 %v1884, 4294901760
  %v2972 = vsub.f32 %v1884, %v2971
  %v2973 = vand.u32 %v2972, 4294901760
  %2974 = vmatprep.subr.mxu0 %v2973
  %v2975 = vand.u32 %v1883, 4294901760
  %v2976 = vsub.f32 %v1883, %v2975
  %v2977 = vand.u32 %v2976, 4294901760
  %2978 = vmatpush2.msra.mxu0 %v2977
  %v2979 = vand.u32 %v1882, 4294901760
  %v2980 = vsub.f32 %v1882, %v2979
  %v2981 = vand.u32 %v2980, 4294901760
  %2982 = vmatprep.subr.mxu0 %v2981
  %v2983 = vand.u32 %v1881, 4294901760
  %v2984 = vsub.f32 %v1881, %v2983
  %v2985 = vand.u32 %v2984, 4294901760
  %2986 = vmatpush2.msra.mxu0 %v2985
  %v2987 = vand.u32 %v1880, 4294901760
  %v2988 = vsub.f32 %v1880, %v2987
  %v2989 = vand.u32 %v2988, 4294901760
  %2990 = vmatprep.subr.mxu0 %v2989
  %v2991 = vand.u32 %v1879, 4294901760
  %v2992 = vsub.f32 %v1879, %v2991
  %v2993 = vand.u32 %v2992, 4294901760
  %2994 = vmatpush2.msra.mxu0 %v2993
  %v2995 = vand.u32 %v1878, 4294901760
  %v2996 = vsub.f32 %v1878, %v2995
  %v2997 = vand.u32 %v2996, 4294901760
  %2998 = vmatprep.subr.mxu0 %v2997
  %v2999 = vand.u32 %v1877, 4294901760
  %v3000 = vsub.f32 %v1877, %v2999
  %v3001 = vand.u32 %v3000, 4294901760
  %3002 = vmatpush2.msra.mxu0 %v3001
  %v3003 = vand.u32 %v1876, 4294901760
  %v3004 = vsub.f32 %v1876, %v3003
  %v3005 = vand.u32 %v3004, 4294901760
  %3006 = vmatprep.subr.mxu0 %v3005
  %v3007 = vand.u32 %v1875, 4294901760
  %v3008 = vsub.f32 %v1875, %v3007
  %v3009 = vand.u32 %v3008, 4294901760
  %3010 = vmatpush2.msra.mxu0 %v3009
  %v3011 = vand.u32 %v1874, 4294901760
  %v3012 = vsub.f32 %v1874, %v3011
  %v3013 = vand.u32 %v3012, 4294901760
  %3014 = vmatprep.subr.mxu0 %v3013
  %v3015 = vand.u32 %v1873, 4294901760
  %v3016 = vsub.f32 %v1873, %v3015
  %v3017 = vand.u32 %v3016, 4294901760
  %3018 = vmatpush2.msra.mxu0 %v3017
  %v3019 = vand.u32 %v1872, 4294901760
  %v3020 = vsub.f32 %v1872, %v3019
  %v3021 = vand.u32 %v3020, 4294901760
  %3022 = vmatprep.subr.mxu0 %v3021
  %v3023 = vand.u32 %v1871, 4294901760
  %v3024 = vsub.f32 %v1871, %v3023
  %v3025 = vand.u32 %v3024, 4294901760
  %3026 = vmatpush2.msra.mxu0 %v3025
  %v3027 = vand.u32 %v1870, 4294901760
  %v3028 = vsub.f32 %v1870, %v3027
  %v3029 = vand.u32 %v3028, 4294901760
  %3030 = vmatprep.subr.mxu0 %v3029
  %v3031 = vand.u32 %v1869, 4294901760
  %v3032 = vsub.f32 %v1869, %v3031
  %v3033 = vand.u32 %v3032, 4294901760
  %3034 = vmatpush2.msra.mxu0 %v3033
  %v3035 = vand.u32 %v1868, 4294901760
  %v3036 = vsub.f32 %v1868, %v3035
  %v3037 = vand.u32 %v3036, 4294901760
  %3038 = vmatprep.subr.mxu0 %v3037
  %v3039 = vand.u32 %v1867, 4294901760
  %v3040 = vsub.f32 %v1867, %v3039
  %v3041 = vand.u32 %v3040, 4294901760
  %3042 = vmatpush2.msra.mxu0 %v3041
  %v3043 = vand.u32 %v1866, 4294901760
  %v3044 = vsub.f32 %v1866, %v3043
  %v3045 = vand.u32 %v3044, 4294901760
  %3046 = vmatprep.subr.mxu0 %v3045
  %v3047 = vand.u32 %v1865, 4294901760
  %v3048 = vsub.f32 %v1865, %v3047
  %v3049 = vand.u32 %v3048, 4294901760
  %3050 = vmatpush2.msra.mxu0 %v3049
  %v3051 = vand.u32 %v1864, 4294901760
  %v3052 = vsub.f32 %v1864, %v3051
  %v3053 = vand.u32 %v3052, 4294901760
  %3054 = vmatprep.subr.mxu0 %v3053
  %v3055 = vand.u32 %v1863, 4294901760
  %v3056 = vsub.f32 %v1863, %v3055
  %v3057 = vand.u32 %v3056, 4294901760
  %3058 = vmatpush2.msra.mxu0 %v3057
  %v3059 = vand.u32 %v1862, 4294901760
  %v3060 = vsub.f32 %v1862, %v3059
  %v3061 = vand.u32 %v3060, 4294901760
  %3062 = vmatprep.subr.mxu0 %v3061
  %v3063 = vand.u32 %v1861, 4294901760
  %v3064 = vsub.f32 %v1861, %v3063
  %v3065 = vand.u32 %v3064, 4294901760
  %3066 = vmatpush2.msra.mxu0 %v3065
  %v3067 = vand.u32 %v1860, 4294901760
  %v3068 = vsub.f32 %v1860, %v3067
  %v3069 = vand.u32 %v3068, 4294901760
  %3070 = vmatprep.subr.mxu0 %v3069
  %v3071 = vand.u32 %v1859, 4294901760
  %v3072 = vsub.f32 %v1859, %v3071
  %v3073 = vand.u32 %v3072, 4294901760
  %3074 = vmatpush2.msra.mxu0 %v3073
  %v3075 = vand.u32 %v1858, 4294901760
  %v3076 = vsub.f32 %v1858, %v3075
  %v3077 = vand.u32 %v3076, 4294901760
  %3078 = vmatprep.subr.mxu0 %v3077
  %v3079 = vand.u32 %v1857, 4294901760
  %v3080 = vsub.f32 %v1857, %v3079
  %v3081 = vand.u32 %v3080, 4294901760
  %3082 = vmatpush2.msra.mxu0 %v3081
  %v3083 = vand.u32 %v1856, 4294901760
  %v3084 = vsub.f32 %v1856, %v3083
  %v3085 = vand.u32 %v3084, 4294901760
  %3086 = vmatprep.subr.mxu0 %v3085
  %v3087 = vand.u32 %v1855, 4294901760
  %v3088 = vsub.f32 %v1855, %v3087
  %v3089 = vand.u32 %v3088, 4294901760
  %3090 = vmatpush2.msra.mxu0 %v3089
  %v3091 = vand.u32 %v1854, 4294901760
  %v3092 = vsub.f32 %v1854, %v3091
  %v3093 = vand.u32 %v3092, 4294901760
  %3094 = vmatprep.subr.mxu0 %v3093
  %v3095 = vand.u32 %v1853, 4294901760
  %v3096 = vsub.f32 %v1853, %v3095
  %v3097 = vand.u32 %v3096, 4294901760
  %3098 = vmatpush2.msra.mxu0 %v3097
  %v3099 = vand.u32 %v1818, 4294901760
  %3100 = vmatprep.mubr.f32.mxu0 %v3099
  %v3101 = vand.u32 %v1817, 4294901760
  %3102 = vmatmul.mubr.f32.gmra.mxu0 %v3101
  %v3103 = vpop.f32.mrf.mxu0
  %v3104 = vadd.f32 %v2839, %v3103
  %v3105 = vpop.f32.mrf.mxu0
  %v3106 = vadd.f32 %v2841, %v3105
  %3107 = vdwg.mxu0
  %v3108 = vand.u32 %v1852, 4294901760
  %3109 = vmatprep.subr.mxu0 %v3108
  %v3110 = vand.u32 %v1851, 4294901760
  %3111 = vmatpush1.msra.mxu0 %v3110
  %v3112 = vand.u32 %v1850, 4294901760
  %3113 = vmatprep.subr.mxu0 %v3112
  %v3114 = vand.u32 %v1849, 4294901760
  %3115 = vmatpush1.msra.mxu0 %v3114
  %v3116 = vand.u32 %v1848, 4294901760
  %3117 = vmatprep.subr.mxu0 %v3116
  %v3118 = vand.u32 %v1847, 4294901760
  %3119 = vmatpush1.msra.mxu0 %v3118
  %v3120 = vand.u32 %v1846, 4294901760
  %3121 = vmatprep.subr.mxu0 %v3120
  %v3122 = vand.u32 %v1845, 4294901760
  %3123 = vmatpush1.msra.mxu0 %v3122
  %v3124 = vand.u32 %v1844, 4294901760
  %3125 = vmatprep.subr.mxu0 %v3124
  %v3126 = vand.u32 %v1843, 4294901760
  %3127 = vmatpush1.msra.mxu0 %v3126
  %v3128 = vand.u32 %v1842, 4294901760
  %3129 = vmatprep.subr.mxu0 %v3128
  %v3130 = vand.u32 %v1841, 4294901760
  %3131 = vmatpush1.msra.mxu0 %v3130
  %v3132 = vand.u32 %v1840, 4294901760
  %3133 = vmatprep.subr.mxu0 %v3132
  %v3134 = vand.u32 %v1839, 4294901760
  %3135 = vmatpush1.msra.mxu0 %v3134
  %v3136 = vand.u32 %v1838, 4294901760
  %3137 = vmatprep.subr.mxu0 %v3136
  %v3138 = vand.u32 %v1837, 4294901760
  %3139 = vmatpush1.msra.mxu0 %v3138
  %v3140 = vand.u32 %v1836, 4294901760
  %3141 = vmatprep.subr.mxu0 %v3140
  %v3142 = vand.u32 %v1835, 4294901760
  %3143 = vmatpush1.msra.mxu0 %v3142
  %v3144 = vand.u32 %v1834, 4294901760
  %3145 = vmatprep.subr.mxu0 %v3144
  %v3146 = vand.u32 %v1833, 4294901760
  %3147 = vmatpush1.msra.mxu0 %v3146
  %v3148 = vand.u32 %v1832, 4294901760
  %3149 = vmatprep.subr.mxu0 %v3148
  %v3150 = vand.u32 %v1831, 4294901760
  %3151 = vmatpush1.msra.mxu0 %v3150
  %v3152 = vand.u32 %v1830, 4294901760
  %3153 = vmatprep.subr.mxu0 %v3152
  %v3154 = vand.u32 %v1829, 4294901760
  %3155 = vmatpush1.msra.mxu0 %v3154
  %v3156 = vand.u32 %v1828, 4294901760
  %3157 = vmatprep.subr.mxu0 %v3156
  %v3158 = vand.u32 %v1827, 4294901760
  %3159 = vmatpush1.msra.mxu0 %v3158
  %v3160 = vand.u32 %v1826, 4294901760
  %3161 = vmatprep.subr.mxu0 %v3160
  %v3162 = vand.u32 %v1825, 4294901760
  %3163 = vmatpush1.msra.mxu0 %v3162
  %v3164 = vand.u32 %v1824, 4294901760
  %3165 = vmatprep.subr.mxu0 %v3164
  %v3166 = vand.u32 %v1823, 4294901760
  %3167 = vmatpush1.msra.mxu0 %v3166
  %v3168 = vand.u32 %v1822, 4294901760
  %3169 = vmatprep.subr.mxu0 %v3168
  %v3170 = vand.u32 %v1821, 4294901760
  %3171 = vmatpush1.msra.mxu0 %v3170
  %v3172 = vand.u32 %v1884, 4294901760
  %3173 = vmatprep.subr.mxu0 %v3172
  %v3174 = vand.u32 %v1883, 4294901760
  %3175 = vmatpush2.msra.mxu0 %v3174
  %v3176 = vand.u32 %v1882, 4294901760
  %3177 = vmatprep.subr.mxu0 %v3176
  %v3178 = vand.u32 %v1881, 4294901760
  %3179 = vmatpush2.msra.mxu0 %v3178
  %v3180 = vand.u32 %v1880, 4294901760
  %3181 = vmatprep.subr.mxu0 %v3180
  %v3182 = vand.u32 %v1879, 4294901760
  %3183 = vmatpush2.msra.mxu0 %v3182
  %v3184 = vand.u32 %v1878, 4294901760
  %3185 = vmatprep.subr.mxu0 %v3184
  %v3186 = vand.u32 %v1877, 4294901760
  %3187 = vmatpush2.msra.mxu0 %v3186
  %v3188 = vand.u32 %v1876, 4294901760
  %3189 = vmatprep.subr.mxu0 %v3188
  %v3190 = vand.u32 %v1875, 4294901760
  %3191 = vmatpush2.msra.mxu0 %v3190
  %v3192 = vand.u32 %v1874, 4294901760
  %3193 = vmatprep.subr.mxu0 %v3192
  %v3194 = vand.u32 %v1873, 4294901760
  %3195 = vmatpush2.msra.mxu0 %v3194
  %v3196 = vand.u32 %v1872, 4294901760
  %3197 = vmatprep.subr.mxu0 %v3196
  %v3198 = vand.u32 %v1871, 4294901760
  %3199 = vmatpush2.msra.mxu0 %v3198
  %v3200 = vand.u32 %v1870, 4294901760
  %3201 = vmatprep.subr.mxu0 %v3200
  %v3202 = vand.u32 %v1869, 4294901760
  %3203 = vmatpush2.msra.mxu0 %v3202
  %v3204 = vand.u32 %v1868, 4294901760
  %3205 = vmatprep.subr.mxu0 %v3204
  %v3206 = vand.u32 %v1867, 4294901760
  %3207 = vmatpush2.msra.mxu0 %v3206
  %v3208 = vand.u32 %v1866, 4294901760
  %3209 = vmatprep.subr.mxu0 %v3208
  %v3210 = vand.u32 %v1865, 4294901760
  %3211 = vmatpush2.msra.mxu0 %v3210
  %v3212 = vand.u32 %v1864, 4294901760
  %3213 = vmatprep.subr.mxu0 %v3212
  %v3214 = vand.u32 %v1863, 4294901760
  %3215 = vmatpush2.msra.mxu0 %v3214
  %v3216 = vand.u32 %v1862, 4294901760
  %3217 = vmatprep.subr.mxu0 %v3216
  %v3218 = vand.u32 %v1861, 4294901760
  %3219 = vmatpush2.msra.mxu0 %v3218
  %v3220 = vand.u32 %v1860, 4294901760
  %3221 = vmatprep.subr.mxu0 %v3220
  %v3222 = vand.u32 %v1859, 4294901760
  %3223 = vmatpush2.msra.mxu0 %v3222
  %v3224 = vand.u32 %v1858, 4294901760
  %3225 = vmatprep.subr.mxu0 %v3224
  %v3226 = vand.u32 %v1857, 4294901760
  %3227 = vmatpush2.msra.mxu0 %v3226
  %v3228 = vand.u32 %v1856, 4294901760
  %3229 = vmatprep.subr.mxu0 %v3228
  %v3230 = vand.u32 %v1855, 4294901760
  %3231 = vmatpush2.msra.mxu0 %v3230
  %v3232 = vand.u32 %v1854, 4294901760
  %3233 = vmatprep.subr.mxu0 %v3232
  %v3234 = vand.u32 %v1853, 4294901760
  %3235 = vmatpush2.msra.mxu0 %v3234
  %v3236 = vand.u32 %v1818, 4294901760
  %3237 = vmatprep.mubr.f32.mxu0 %v3236
  %v3238 = vand.u32 %v1817, 4294901760
  %3239 = vmatmul.mubr.f32.gmra.mxu0 %v3238
  %v3240 = vpop.f32.mrf.mxu0
  %v3241 = vadd.f32 %v3104, %v3240
  %v3242 = vpop.f32.mrf.mxu0
  %v3243 = vadd.f32 %v3106, %v3242
  %3244 = vdwg.mxu0
  %v3245 = vand.u32 %v1916, 4294901760
  %3246 = vmatprep.subr.mxu0 %v3245
  %v3247 = vand.u32 %v1915, 4294901760
  %3248 = vmatpush1.msra.mxu0 %v3247
  %v3249 = vand.u32 %v1914, 4294901760
  %3250 = vmatprep.subr.mxu0 %v3249
  %v3251 = vand.u32 %v1913, 4294901760
  %3252 = vmatpush1.msra.mxu0 %v3251
  %v3253 = vand.u32 %v1912, 4294901760
  %3254 = vmatprep.subr.mxu0 %v3253
  %v3255 = vand.u32 %v1911, 4294901760
  %3256 = vmatpush1.msra.mxu0 %v3255
  %v3257 = vand.u32 %v1910, 4294901760
  %3258 = vmatprep.subr.mxu0 %v3257
  %v3259 = vand.u32 %v1909, 4294901760
  %3260 = vmatpush1.msra.mxu0 %v3259
  %v3261 = vand.u32 %v1908, 4294901760
  %3262 = vmatprep.subr.mxu0 %v3261
  %v3263 = vand.u32 %v1907, 4294901760
  %3264 = vmatpush1.msra.mxu0 %v3263
  %v3265 = vand.u32 %v1906, 4294901760
  %3266 = vmatprep.subr.mxu0 %v3265
  %v3267 = vand.u32 %v1905, 4294901760
  %3268 = vmatpush1.msra.mxu0 %v3267
  %v3269 = vand.u32 %v1904, 4294901760
  %3270 = vmatprep.subr.mxu0 %v3269
  %v3271 = vand.u32 %v1903, 4294901760
  %3272 = vmatpush1.msra.mxu0 %v3271
  %v3273 = vand.u32 %v1902, 4294901760
  %3274 = vmatprep.subr.mxu0 %v3273
  %v3275 = vand.u32 %v1901, 4294901760
  %3276 = vmatpush1.msra.mxu0 %v3275
  %v3277 = vand.u32 %v1900, 4294901760
  %3278 = vmatprep.subr.mxu0 %v3277
  %v3279 = vand.u32 %v1899, 4294901760
  %3280 = vmatpush1.msra.mxu0 %v3279
  %v3281 = vand.u32 %v1898, 4294901760
  %3282 = vmatprep.subr.mxu0 %v3281
  %v3283 = vand.u32 %v1897, 4294901760
  %3284 = vmatpush1.msra.mxu0 %v3283
  %v3285 = vand.u32 %v1896, 4294901760
  %3286 = vmatprep.subr.mxu0 %v3285
  %v3287 = vand.u32 %v1895, 4294901760
  %3288 = vmatpush1.msra.mxu0 %v3287
  %v3289 = vand.u32 %v1894, 4294901760
  %3290 = vmatprep.subr.mxu0 %v3289
  %v3291 = vand.u32 %v1893, 4294901760
  %3292 = vmatpush1.msra.mxu0 %v3291
  %v3293 = vand.u32 %v1892, 4294901760
  %3294 = vmatprep.subr.mxu0 %v3293
  %v3295 = vand.u32 %v1891, 4294901760
  %3296 = vmatpush1.msra.mxu0 %v3295
  %v3297 = vand.u32 %v1890, 4294901760
  %3298 = vmatprep.subr.mxu0 %v3297
  %v3299 = vand.u32 %v1889, 4294901760
  %3300 = vmatpush1.msra.mxu0 %v3299
  %v3301 = vand.u32 %v1888, 4294901760
  %3302 = vmatprep.subr.mxu0 %v3301
  %v3303 = vand.u32 %v1887, 4294901760
  %3304 = vmatpush1.msra.mxu0 %v3303
  %v3305 = vand.u32 %v1886, 4294901760
  %3306 = vmatprep.subr.mxu0 %v3305
  %v3307 = vand.u32 %v1885, 4294901760
  %3308 = vmatpush1.msra.mxu0 %v3307
  %v3309 = vand.u32 %v1948, 4294901760
  %3310 = vmatprep.subr.mxu0 %v3309
  %v3311 = vand.u32 %v1947, 4294901760
  %3312 = vmatpush2.msra.mxu0 %v3311
  %v3313 = vand.u32 %v1946, 4294901760
  %3314 = vmatprep.subr.mxu0 %v3313
  %v3315 = vand.u32 %v1945, 4294901760
  %3316 = vmatpush2.msra.mxu0 %v3315
  %v3317 = vand.u32 %v1944, 4294901760
  %3318 = vmatprep.subr.mxu0 %v3317
  %v3319 = vand.u32 %v1943, 4294901760
  %3320 = vmatpush2.msra.mxu0 %v3319
  %v3321 = vand.u32 %v1942, 4294901760
  %3322 = vmatprep.subr.mxu0 %v3321
  %v3323 = vand.u32 %v1941, 4294901760
  %3324 = vmatpush2.msra.mxu0 %v3323
  %v3325 = vand.u32 %v1940, 4294901760
  %3326 = vmatprep.subr.mxu0 %v3325
  %v3327 = vand.u32 %v1939, 4294901760
  %3328 = vmatpush2.msra.mxu0 %v3327
  %v3329 = vand.u32 %v1938, 4294901760
  %3330 = vmatprep.subr.mxu0 %v3329
  %v3331 = vand.u32 %v1937, 4294901760
  %3332 = vmatpush2.msra.mxu0 %v3331
  %v3333 = vand.u32 %v1936, 4294901760
  %3334 = vmatprep.subr.mxu0 %v3333
  %v3335 = vand.u32 %v1935, 4294901760
  %3336 = vmatpush2.msra.mxu0 %v3335
  %v3337 = vand.u32 %v1934, 4294901760
  %3338 = vmatprep.subr.mxu0 %v3337
  %v3339 = vand.u32 %v1933, 4294901760
  %3340 = vmatpush2.msra.mxu0 %v3339
  %v3341 = vand.u32 %v1932, 4294901760
  %3342 = vmatprep.subr.mxu0 %v3341
  %v3343 = vand.u32 %v1931, 4294901760
  %3344 = vmatpush2.msra.mxu0 %v3343
  %v3345 = vand.u32 %v1930, 4294901760
  %3346 = vmatprep.subr.mxu0 %v3345
  %v3347 = vand.u32 %v1929, 4294901760
  %3348 = vmatpush2.msra.mxu0 %v3347
  %v3349 = vand.u32 %v1928, 4294901760
  %3350 = vmatprep.subr.mxu0 %v3349
  %v3351 = vand.u32 %v1927, 4294901760
  %3352 = vmatpush2.msra.mxu0 %v3351
  %v3353 = vand.u32 %v1926, 4294901760
  %3354 = vmatprep.subr.mxu0 %v3353
  %v3355 = vand.u32 %v1925, 4294901760
  %3356 = vmatpush2.msra.mxu0 %v3355
  %v3357 = vand.u32 %v1924, 4294901760
  %3358 = vmatprep.subr.mxu0 %v3357
  %v3359 = vand.u32 %v1923, 4294901760
  %3360 = vmatpush2.msra.mxu0 %v3359
  %v3361 = vand.u32 %v1922, 4294901760
  %3362 = vmatprep.subr.mxu0 %v3361
  %v3363 = vand.u32 %v1921, 4294901760
  %3364 = vmatpush2.msra.mxu0 %v3363
  %v3365 = vand.u32 %v1920, 4294901760
  %3366 = vmatprep.subr.mxu0 %v3365
  %v3367 = vand.u32 %v1919, 4294901760
  %3368 = vmatpush2.msra.mxu0 %v3367
  %v3369 = vand.u32 %v1918, 4294901760
  %3370 = vmatprep.subr.mxu0 %v3369
  %v3371 = vand.u32 %v1917, 4294901760
  %3372 = vmatpush2.msra.mxu0 %v3371
  %v3373 = vand.u32 %v1820, 4294901760
  %v3374 = vsub.f32 %v1820, %v3373
  %v3375 = vand.u32 %v3374, 4294901760
  %v3376 = vsub.f32 %v3374, %v3375
  %v3377 = vand.u32 %v3376, 4294901760
  %3378 = vmatprep.mubr.f32.mxu0 %v3377
  %v3379 = vand.u32 %v1819, 4294901760
  %v3380 = vsub.f32 %v1819, %v3379
  %v3381 = vand.u32 %v3380, 4294901760
  %v3382 = vsub.f32 %v3380, %v3381
  %v3383 = vand.u32 %v3382, 4294901760
  %3384 = vmatmul.mubr.f32.gmra.mxu0 %v3383
  %v3385 = vpop.f32.mrf.mxu0
  %v3386 = vadd.f32 %v3241, %v3385
  %v3387 = vpop.f32.mrf.mxu0
  %v3388 = vadd.f32 %v3243, %v3387
  %3389 = vdwg.mxu0
  %v3390 = vand.u32 %v1916, 4294901760
  %v3391 = vsub.f32 %v1916, %v3390
  %v3392 = vand.u32 %v3391, 4294901760
  %v3393 = vsub.f32 %v3391, %v3392
  %v3394 = vand.u32 %v3393, 4294901760
  %3395 = vmatprep.subr.mxu0 %v3394
  %v3396 = vand.u32 %v1915, 4294901760
  %v3397 = vsub.f32 %v1915, %v3396
  %v3398 = vand.u32 %v3397, 4294901760
  %v3399 = vsub.f32 %v3397, %v3398
  %v3400 = vand.u32 %v3399, 4294901760
  %3401 = vmatpush1.msra.mxu0 %v3400
  %v3402 = vand.u32 %v1914, 4294901760
  %v3403 = vsub.f32 %v1914, %v3402
  %v3404 = vand.u32 %v3403, 4294901760
  %v3405 = vsub.f32 %v3403, %v3404
  %v3406 = vand.u32 %v3405, 4294901760
  %3407 = vmatprep.subr.mxu0 %v3406
  %v3408 = vand.u32 %v1913, 4294901760
  %v3409 = vsub.f32 %v1913, %v3408
  %v3410 = vand.u32 %v3409, 4294901760
  %v3411 = vsub.f32 %v3409, %v3410
  %v3412 = vand.u32 %v3411, 4294901760
  %3413 = vmatpush1.msra.mxu0 %v3412
  %v3414 = vand.u32 %v1912, 4294901760
  %v3415 = vsub.f32 %v1912, %v3414
  %v3416 = vand.u32 %v3415, 4294901760
  %v3417 = vsub.f32 %v3415, %v3416
  %v3418 = vand.u32 %v3417, 4294901760
  %3419 = vmatprep.subr.mxu0 %v3418
  %v3420 = vand.u32 %v1911, 4294901760
  %v3421 = vsub.f32 %v1911, %v3420
  %v3422 = vand.u32 %v3421, 4294901760
  %v3423 = vsub.f32 %v3421, %v3422
  %v3424 = vand.u32 %v3423, 4294901760
  %3425 = vmatpush1.msra.mxu0 %v3424
  %v3426 = vand.u32 %v1910, 4294901760
  %v3427 = vsub.f32 %v1910, %v3426
  %v3428 = vand.u32 %v3427, 4294901760
  %v3429 = vsub.f32 %v3427, %v3428
  %v3430 = vand.u32 %v3429, 4294901760
  %3431 = vmatprep.subr.mxu0 %v3430
  %v3432 = vand.u32 %v1909, 4294901760
  %v3433 = vsub.f32 %v1909, %v3432
  %v3434 = vand.u32 %v3433, 4294901760
  %v3435 = vsub.f32 %v3433, %v3434
  %v3436 = vand.u32 %v3435, 4294901760
  %3437 = vmatpush1.msra.mxu0 %v3436
  %v3438 = vand.u32 %v1908, 4294901760
  %v3439 = vsub.f32 %v1908, %v3438
  %v3440 = vand.u32 %v3439, 4294901760
  %v3441 = vsub.f32 %v3439, %v3440
  %v3442 = vand.u32 %v3441, 4294901760
  %3443 = vmatprep.subr.mxu0 %v3442
  %v3444 = vand.u32 %v1907, 4294901760
  %v3445 = vsub.f32 %v1907, %v3444
  %v3446 = vand.u32 %v3445, 4294901760
  %v3447 = vsub.f32 %v3445, %v3446
  %v3448 = vand.u32 %v3447, 4294901760
  %3449 = vmatpush1.msra.mxu0 %v3448
  %v3450 = vand.u32 %v1906, 4294901760
  %v3451 = vsub.f32 %v1906, %v3450
  %v3452 = vand.u32 %v3451, 4294901760
  %v3453 = vsub.f32 %v3451, %v3452
  %v3454 = vand.u32 %v3453, 4294901760
  %3455 = vmatprep.subr.mxu0 %v3454
  %v3456 = vand.u32 %v1905, 4294901760
  %v3457 = vsub.f32 %v1905, %v3456
  %v3458 = vand.u32 %v3457, 4294901760
  %v3459 = vsub.f32 %v3457, %v3458
  %v3460 = vand.u32 %v3459, 4294901760
  %3461 = vmatpush1.msra.mxu0 %v3460
  %v3462 = vand.u32 %v1904, 4294901760
  %v3463 = vsub.f32 %v1904, %v3462
  %v3464 = vand.u32 %v3463, 4294901760
  %v3465 = vsub.f32 %v3463, %v3464
  %v3466 = vand.u32 %v3465, 4294901760
  %3467 = vmatprep.subr.mxu0 %v3466
  %v3468 = vand.u32 %v1903, 4294901760
  %v3469 = vsub.f32 %v1903, %v3468
  %v3470 = vand.u32 %v3469, 4294901760
  %v3471 = vsub.f32 %v3469, %v3470
  %v3472 = vand.u32 %v3471, 4294901760
  %3473 = vmatpush1.msra.mxu0 %v3472
  %v3474 = vand.u32 %v1902, 4294901760
  %v3475 = vsub.f32 %v1902, %v3474
  %v3476 = vand.u32 %v3475, 4294901760
  %v3477 = vsub.f32 %v3475, %v3476
  %v3478 = vand.u32 %v3477, 4294901760
  %3479 = vmatprep.subr.mxu0 %v3478
  %v3480 = vand.u32 %v1901, 4294901760
  %v3481 = vsub.f32 %v1901, %v3480
  %v3482 = vand.u32 %v3481, 4294901760
  %v3483 = vsub.f32 %v3481, %v3482
  %v3484 = vand.u32 %v3483, 4294901760
  %3485 = vmatpush1.msra.mxu0 %v3484
  %v3486 = vand.u32 %v1900, 4294901760
  %v3487 = vsub.f32 %v1900, %v3486
  %v3488 = vand.u32 %v3487, 4294901760
  %v3489 = vsub.f32 %v3487, %v3488
  %v3490 = vand.u32 %v3489, 4294901760
  %3491 = vmatprep.subr.mxu0 %v3490
  %v3492 = vand.u32 %v1899, 4294901760
  %v3493 = vsub.f32 %v1899, %v3492
  %v3494 = vand.u32 %v3493, 4294901760
  %v3495 = vsub.f32 %v3493, %v3494
  %v3496 = vand.u32 %v3495, 4294901760
  %3497 = vmatpush1.msra.mxu0 %v3496
  %v3498 = vand.u32 %v1898, 4294901760
  %v3499 = vsub.f32 %v1898, %v3498
  %v3500 = vand.u32 %v3499, 4294901760
  %v3501 = vsub.f32 %v3499, %v3500
  %v3502 = vand.u32 %v3501, 4294901760
  %3503 = vmatprep.subr.mxu0 %v3502
  %v3504 = vand.u32 %v1897, 4294901760
  %v3505 = vsub.f32 %v1897, %v3504
  %v3506 = vand.u32 %v3505, 4294901760
  %v3507 = vsub.f32 %v3505, %v3506
  %v3508 = vand.u32 %v3507, 4294901760
  %3509 = vmatpush1.msra.mxu0 %v3508
  %v3510 = vand.u32 %v1896, 4294901760
  %v3511 = vsub.f32 %v1896, %v3510
  %v3512 = vand.u32 %v3511, 4294901760
  %v3513 = vsub.f32 %v3511, %v3512
  %v3514 = vand.u32 %v3513, 4294901760
  %3515 = vmatprep.subr.mxu0 %v3514
  %v3516 = vand.u32 %v1895, 4294901760
  %v3517 = vsub.f32 %v1895, %v3516
  %v3518 = vand.u32 %v3517, 4294901760
  %v3519 = vsub.f32 %v3517, %v3518
  %v3520 = vand.u32 %v3519, 4294901760
  %3521 = vmatpush1.msra.mxu0 %v3520
  %v3522 = vand.u32 %v1894, 4294901760
  %v3523 = vsub.f32 %v1894, %v3522
  %v3524 = vand.u32 %v3523, 4294901760
  %v3525 = vsub.f32 %v3523, %v3524
  %v3526 = vand.u32 %v3525, 4294901760
  %3527 = vmatprep.subr.mxu0 %v3526
  %v3528 = vand.u32 %v1893, 4294901760
  %v3529 = vsub.f32 %v1893, %v3528
  %v3530 = vand.u32 %v3529, 4294901760
  %v3531 = vsub.f32 %v3529, %v3530
  %v3532 = vand.u32 %v3531, 4294901760
  %3533 = vmatpush1.msra.mxu0 %v3532
  %v3534 = vand.u32 %v1892, 4294901760
  %v3535 = vsub.f32 %v1892, %v3534
  %v3536 = vand.u32 %v3535, 4294901760
  %v3537 = vsub.f32 %v3535, %v3536
  %v3538 = vand.u32 %v3537, 4294901760
  %3539 = vmatprep.subr.mxu0 %v3538
  %v3540 = vand.u32 %v1891, 4294901760
  %v3541 = vsub.f32 %v1891, %v3540
  %v3542 = vand.u32 %v3541, 4294901760
  %v3543 = vsub.f32 %v3541, %v3542
  %v3544 = vand.u32 %v3543, 4294901760
  %3545 = vmatpush1.msra.mxu0 %v3544
  %v3546 = vand.u32 %v1890, 4294901760
  %v3547 = vsub.f32 %v1890, %v3546
  %v3548 = vand.u32 %v3547, 4294901760
  %v3549 = vsub.f32 %v3547, %v3548
  %v3550 = vand.u32 %v3549, 4294901760
  %3551 = vmatprep.subr.mxu0 %v3550
  %v3552 = vand.u32 %v1889, 4294901760
  %v3553 = vsub.f32 %v1889, %v3552
  %v3554 = vand.u32 %v3553, 4294901760
  %v3555 = vsub.f32 %v3553, %v3554
  %v3556 = vand.u32 %v3555, 4294901760
  %3557 = vmatpush1.msra.mxu0 %v3556
  %v3558 = vand.u32 %v1888, 4294901760
  %v3559 = vsub.f32 %v1888, %v3558
  %v3560 = vand.u32 %v3559, 4294901760
  %v3561 = vsub.f32 %v3559, %v3560
  %v3562 = vand.u32 %v3561, 4294901760
  %3563 = vmatprep.subr.mxu0 %v3562
  %v3564 = vand.u32 %v1887, 4294901760
  %v3565 = vsub.f32 %v1887, %v3564
  %v3566 = vand.u32 %v3565, 4294901760
  %v3567 = vsub.f32 %v3565, %v3566
  %v3568 = vand.u32 %v3567, 4294901760
  %3569 = vmatpush1.msra.mxu0 %v3568
  %v3570 = vand.u32 %v1886, 4294901760
  %v3571 = vsub.f32 %v1886, %v3570
  %v3572 = vand.u32 %v3571, 4294901760
  %v3573 = vsub.f32 %v3571, %v3572
  %v3574 = vand.u32 %v3573, 4294901760
  %3575 = vmatprep.subr.mxu0 %v3574
  %v3576 = vand.u32 %v1885, 4294901760
  %v3577 = vsub.f32 %v1885, %v3576
  %v3578 = vand.u32 %v3577, 4294901760
  %v3579 = vsub.f32 %v3577, %v3578
  %v3580 = vand.u32 %v3579, 4294901760
  %3581 = vmatpush1.msra.mxu0 %v3580
  %v3582 = vand.u32 %v1948, 4294901760
  %v3583 = vsub.f32 %v1948, %v3582
  %v3584 = vand.u32 %v3583, 4294901760
  %v3585 = vsub.f32 %v3583, %v3584
  %v3586 = vand.u32 %v3585, 4294901760
  %3587 = vmatprep.subr.mxu0 %v3586
  %v3588 = vand.u32 %v1947, 4294901760
  %v3589 = vsub.f32 %v1947, %v3588
  %v3590 = vand.u32 %v3589, 4294901760
  %v3591 = vsub.f32 %v3589, %v3590
  %v3592 = vand.u32 %v3591, 4294901760
  %3593 = vmatpush2.msra.mxu0 %v3592
  %v3594 = vand.u32 %v1946, 4294901760
  %v3595 = vsub.f32 %v1946, %v3594
  %v3596 = vand.u32 %v3595, 4294901760
  %v3597 = vsub.f32 %v3595, %v3596
  %v3598 = vand.u32 %v3597, 4294901760
  %3599 = vmatprep.subr.mxu0 %v3598
  %v3600 = vand.u32 %v1945, 4294901760
  %v3601 = vsub.f32 %v1945, %v3600
  %v3602 = vand.u32 %v3601, 4294901760
  %v3603 = vsub.f32 %v3601, %v3602
  %v3604 = vand.u32 %v3603, 4294901760
  %3605 = vmatpush2.msra.mxu0 %v3604
  %v3606 = vand.u32 %v1944, 4294901760
  %v3607 = vsub.f32 %v1944, %v3606
  %v3608 = vand.u32 %v3607, 4294901760
  %v3609 = vsub.f32 %v3607, %v3608
  %v3610 = vand.u32 %v3609, 4294901760
  %3611 = vmatprep.subr.mxu0 %v3610
  %v3612 = vand.u32 %v1943, 4294901760
  %v3613 = vsub.f32 %v1943, %v3612
  %v3614 = vand.u32 %v3613, 4294901760
  %v3615 = vsub.f32 %v3613, %v3614
  %v3616 = vand.u32 %v3615, 4294901760
  %3617 = vmatpush2.msra.mxu0 %v3616
  %v3618 = vand.u32 %v1942, 4294901760
  %v3619 = vsub.f32 %v1942, %v3618
  %v3620 = vand.u32 %v3619, 4294901760
  %v3621 = vsub.f32 %v3619, %v3620
  %v3622 = vand.u32 %v3621, 4294901760
  %3623 = vmatprep.subr.mxu0 %v3622
  %v3624 = vand.u32 %v1941, 4294901760
  %v3625 = vsub.f32 %v1941, %v3624
  %v3626 = vand.u32 %v3625, 4294901760
  %v3627 = vsub.f32 %v3625, %v3626
  %v3628 = vand.u32 %v3627, 4294901760
  %3629 = vmatpush2.msra.mxu0 %v3628
  %v3630 = vand.u32 %v1940, 4294901760
  %v3631 = vsub.f32 %v1940, %v3630
  %v3632 = vand.u32 %v3631, 4294901760
  %v3633 = vsub.f32 %v3631, %v3632
  %v3634 = vand.u32 %v3633, 4294901760
  %3635 = vmatprep.subr.mxu0 %v3634
  %v3636 = vand.u32 %v1939, 4294901760
  %v3637 = vsub.f32 %v1939, %v3636
  %v3638 = vand.u32 %v3637, 4294901760
  %v3639 = vsub.f32 %v3637, %v3638
  %v3640 = vand.u32 %v3639, 4294901760
  %3641 = vmatpush2.msra.mxu0 %v3640
  %v3642 = vand.u32 %v1938, 4294901760
  %v3643 = vsub.f32 %v1938, %v3642
  %v3644 = vand.u32 %v3643, 4294901760
  %v3645 = vsub.f32 %v3643, %v3644
  %v3646 = vand.u32 %v3645, 4294901760
  %3647 = vmatprep.subr.mxu0 %v3646
  %v3648 = vand.u32 %v1937, 4294901760
  %v3649 = vsub.f32 %v1937, %v3648
  %v3650 = vand.u32 %v3649, 4294901760
  %v3651 = vsub.f32 %v3649, %v3650
  %v3652 = vand.u32 %v3651, 4294901760
  %3653 = vmatpush2.msra.mxu0 %v3652
  %v3654 = vand.u32 %v1936, 4294901760
  %v3655 = vsub.f32 %v1936, %v3654
  %v3656 = vand.u32 %v3655, 4294901760
  %v3657 = vsub.f32 %v3655, %v3656
  %v3658 = vand.u32 %v3657, 4294901760
  %3659 = vmatprep.subr.mxu0 %v3658
  %v3660 = vand.u32 %v1935, 4294901760
  %v3661 = vsub.f32 %v1935, %v3660
  %v3662 = vand.u32 %v3661, 4294901760
  %v3663 = vsub.f32 %v3661, %v3662
  %v3664 = vand.u32 %v3663, 4294901760
  %3665 = vmatpush2.msra.mxu0 %v3664
  %v3666 = vand.u32 %v1934, 4294901760
  %v3667 = vsub.f32 %v1934, %v3666
  %v3668 = vand.u32 %v3667, 4294901760
  %v3669 = vsub.f32 %v3667, %v3668
  %v3670 = vand.u32 %v3669, 4294901760
  %3671 = vmatprep.subr.mxu0 %v3670
  %v3672 = vand.u32 %v1933, 4294901760
  %v3673 = vsub.f32 %v1933, %v3672
  %v3674 = vand.u32 %v3673, 4294901760
  %v3675 = vsub.f32 %v3673, %v3674
  %v3676 = vand.u32 %v3675, 4294901760
  %3677 = vmatpush2.msra.mxu0 %v3676
  %v3678 = vand.u32 %v1932, 4294901760
  %v3679 = vsub.f32 %v1932, %v3678
  %v3680 = vand.u32 %v3679, 4294901760
  %v3681 = vsub.f32 %v3679, %v3680
  %v3682 = vand.u32 %v3681, 4294901760
  %3683 = vmatprep.subr.mxu0 %v3682
  %v3684 = vand.u32 %v1931, 4294901760
  %v3685 = vsub.f32 %v1931, %v3684
  %v3686 = vand.u32 %v3685, 4294901760
  %v3687 = vsub.f32 %v3685, %v3686
  %v3688 = vand.u32 %v3687, 4294901760
  %3689 = vmatpush2.msra.mxu0 %v3688
  %v3690 = vand.u32 %v1930, 4294901760
  %v3691 = vsub.f32 %v1930, %v3690
  %v3692 = vand.u32 %v3691, 4294901760
  %v3693 = vsub.f32 %v3691, %v3692
  %v3694 = vand.u32 %v3693, 4294901760
  %3695 = vmatprep.subr.mxu0 %v3694
  %v3696 = vand.u32 %v1929, 4294901760
  %v3697 = vsub.f32 %v1929, %v3696
  %v3698 = vand.u32 %v3697, 4294901760
  %v3699 = vsub.f32 %v3697, %v3698
  %v3700 = vand.u32 %v3699, 4294901760
  %3701 = vmatpush2.msra.mxu0 %v3700
  %v3702 = vand.u32 %v1928, 4294901760
  %v3703 = vsub.f32 %v1928, %v3702
  %v3704 = vand.u32 %v3703, 4294901760
  %v3705 = vsub.f32 %v3703, %v3704
  %v3706 = vand.u32 %v3705, 4294901760
  %3707 = vmatprep.subr.mxu0 %v3706
  %v3708 = vand.u32 %v1927, 4294901760
  %v3709 = vsub.f32 %v1927, %v3708
  %v3710 = vand.u32 %v3709, 4294901760
  %v3711 = vsub.f32 %v3709, %v3710
  %v3712 = vand.u32 %v3711, 4294901760
  %3713 = vmatpush2.msra.mxu0 %v3712
  %v3714 = vand.u32 %v1926, 4294901760
  %v3715 = vsub.f32 %v1926, %v3714
  %v3716 = vand.u32 %v3715, 4294901760
  %v3717 = vsub.f32 %v3715, %v3716
  %v3718 = vand.u32 %v3717, 4294901760
  %3719 = vmatprep.subr.mxu0 %v3718
  %v3720 = vand.u32 %v1925, 4294901760
  %v3721 = vsub.f32 %v1925, %v3720
  %v3722 = vand.u32 %v3721, 4294901760
  %v3723 = vsub.f32 %v3721, %v3722
  %v3724 = vand.u32 %v3723, 4294901760
  %3725 = vmatpush2.msra.mxu0 %v3724
  %v3726 = vand.u32 %v1924, 4294901760
  %v3727 = vsub.f32 %v1924, %v3726
  %v3728 = vand.u32 %v3727, 4294901760
  %v3729 = vsub.f32 %v3727, %v3728
  %v3730 = vand.u32 %v3729, 4294901760
  %3731 = vmatprep.subr.mxu0 %v3730
  %v3732 = vand.u32 %v1923, 4294901760
  %v3733 = vsub.f32 %v1923, %v3732
  %v3734 = vand.u32 %v3733, 4294901760
  %v3735 = vsub.f32 %v3733, %v3734
  %v3736 = vand.u32 %v3735, 4294901760
  %3737 = vmatpush2.msra.mxu0 %v3736
  %v3738 = vand.u32 %v1922, 4294901760
  %v3739 = vsub.f32 %v1922, %v3738
  %v3740 = vand.u32 %v3739, 4294901760
  %v3741 = vsub.f32 %v3739, %v3740
  %v3742 = vand.u32 %v3741, 4294901760
  %3743 = vmatprep.subr.mxu0 %v3742
  %v3744 = vand.u32 %v1921, 4294901760
  %v3745 = vsub.f32 %v1921, %v3744
  %v3746 = vand.u32 %v3745, 4294901760
  %v3747 = vsub.f32 %v3745, %v3746
  %v3748 = vand.u32 %v3747, 4294901760
  %3749 = vmatpush2.msra.mxu0 %v3748
  %v3750 = vand.u32 %v1920, 4294901760
  %v3751 = vsub.f32 %v1920, %v3750
  %v3752 = vand.u32 %v3751, 4294901760
  %v3753 = vsub.f32 %v3751, %v3752
  %v3754 = vand.u32 %v3753, 4294901760
  %3755 = vmatprep.subr.mxu0 %v3754
  %v3756 = vand.u32 %v1919, 4294901760
  %v3757 = vsub.f32 %v1919, %v3756
  %v3758 = vand.u32 %v3757, 4294901760
  %v3759 = vsub.f32 %v3757, %v3758
  %v3760 = vand.u32 %v3759, 4294901760
  %3761 = vmatpush2.msra.mxu0 %v3760
  %v3762 = vand.u32 %v1918, 4294901760
  %v3763 = vsub.f32 %v1918, %v3762
  %v3764 = vand.u32 %v3763, 4294901760
  %v3765 = vsub.f32 %v3763, %v3764
  %v3766 = vand.u32 %v3765, 4294901760
  %3767 = vmatprep.subr.mxu0 %v3766
  %v3768 = vand.u32 %v1917, 4294901760
  %v3769 = vsub.f32 %v1917, %v3768
  %v3770 = vand.u32 %v3769, 4294901760
  %v3771 = vsub.f32 %v3769, %v3770
  %v3772 = vand.u32 %v3771, 4294901760
  %3773 = vmatpush2.msra.mxu0 %v3772
  %v3774 = vand.u32 %v1820, 4294901760
  %3775 = vmatprep.mubr.f32.mxu0 %v3774
  %v3776 = vand.u32 %v1819, 4294901760
  %3777 = vmatmul.mubr.f32.gmra.mxu0 %v3776
  %v3778 = vpop.f32.mrf.mxu0
  %v3779 = vadd.f32 %v3386, %v3778
  %v3780 = vpop.f32.mrf.mxu0
  %v3781 = vadd.f32 %v3388, %v3780
  %3782 = vdwg.mxu0
  %v3783 = vand.u32 %v1916, 4294901760
  %v3784 = vsub.f32 %v1916, %v3783
  %3785 = vmatprep.subr.mxu0 %v3784
  %v3786 = vand.u32 %v1915, 4294901760
  %v3787 = vsub.f32 %v1915, %v3786
  %3788 = vmatpush1.msra.mxu0 %v3787
  %v3789 = vand.u32 %v1914, 4294901760
  %v3790 = vsub.f32 %v1914, %v3789
  %3791 = vmatprep.subr.mxu0 %v3790
  %v3792 = vand.u32 %v1913, 4294901760
  %v3793 = vsub.f32 %v1913, %v3792
  %3794 = vmatpush1.msra.mxu0 %v3793
  %v3795 = vand.u32 %v1912, 4294901760
  %v3796 = vsub.f32 %v1912, %v3795
  %3797 = vmatprep.subr.mxu0 %v3796
  %v3798 = vand.u32 %v1911, 4294901760
  %v3799 = vsub.f32 %v1911, %v3798
  %3800 = vmatpush1.msra.mxu0 %v3799
  %v3801 = vand.u32 %v1910, 4294901760
  %v3802 = vsub.f32 %v1910, %v3801
  %3803 = vmatprep.subr.mxu0 %v3802
  %v3804 = vand.u32 %v1909, 4294901760
  %v3805 = vsub.f32 %v1909, %v3804
  %3806 = vmatpush1.msra.mxu0 %v3805
  %v3807 = vand.u32 %v1908, 4294901760
  %v3808 = vsub.f32 %v1908, %v3807
  %3809 = vmatprep.subr.mxu0 %v3808
  %v3810 = vand.u32 %v1907, 4294901760
  %v3811 = vsub.f32 %v1907, %v3810
  %3812 = vmatpush1.msra.mxu0 %v3811
  %v3813 = vand.u32 %v1906, 4294901760
  %v3814 = vsub.f32 %v1906, %v3813
  %3815 = vmatprep.subr.mxu0 %v3814
  %v3816 = vand.u32 %v1905, 4294901760
  %v3817 = vsub.f32 %v1905, %v3816
  %3818 = vmatpush1.msra.mxu0 %v3817
  %v3819 = vand.u32 %v1904, 4294901760
  %v3820 = vsub.f32 %v1904, %v3819
  %3821 = vmatprep.subr.mxu0 %v3820
  %v3822 = vand.u32 %v1903, 4294901760
  %v3823 = vsub.f32 %v1903, %v3822
  %3824 = vmatpush1.msra.mxu0 %v3823
  %v3825 = vand.u32 %v1902, 4294901760
  %v3826 = vsub.f32 %v1902, %v3825
  %3827 = vmatprep.subr.mxu0 %v3826
  %v3828 = vand.u32 %v1901, 4294901760
  %v3829 = vsub.f32 %v1901, %v3828
  %3830 = vmatpush1.msra.mxu0 %v3829
  %v3831 = vand.u32 %v1900, 4294901760
  %v3832 = vsub.f32 %v1900, %v3831
  %3833 = vmatprep.subr.mxu0 %v3832
  %v3834 = vand.u32 %v1899, 4294901760
  %v3835 = vsub.f32 %v1899, %v3834
  %3836 = vmatpush1.msra.mxu0 %v3835
  %v3837 = vand.u32 %v1898, 4294901760
  %v3838 = vsub.f32 %v1898, %v3837
  %3839 = vmatprep.subr.mxu0 %v3838
  %v3840 = vand.u32 %v1897, 4294901760
  %v3841 = vsub.f32 %v1897, %v3840
  %3842 = vmatpush1.msra.mxu0 %v3841
  %v3843 = vand.u32 %v1896, 4294901760
  %v3844 = vsub.f32 %v1896, %v3843
  %3845 = vmatprep.subr.mxu0 %v3844
  %v3846 = vand.u32 %v1895, 4294901760
  %v3847 = vsub.f32 %v1895, %v3846
  %3848 = vmatpush1.msra.mxu0 %v3847
  %v3849 = vand.u32 %v1894, 4294901760
  %v3850 = vsub.f32 %v1894, %v3849
  %3851 = vmatprep.subr.mxu0 %v3850
  %v3852 = vand.u32 %v1893, 4294901760
  %v3853 = vsub.f32 %v1893, %v3852
  %3854 = vmatpush1.msra.mxu0 %v3853
  %v3855 = vand.u32 %v1892, 4294901760
  %v3856 = vsub.f32 %v1892, %v3855
  %3857 = vmatprep.subr.mxu0 %v3856
  %v3858 = vand.u32 %v1891, 4294901760
  %v3859 = vsub.f32 %v1891, %v3858
  %3860 = vmatpush1.msra.mxu0 %v3859
  %v3861 = vand.u32 %v1890, 4294901760
  %v3862 = vsub.f32 %v1890, %v3861
  %3863 = vmatprep.subr.mxu0 %v3862
  %v3864 = vand.u32 %v1889, 4294901760
  %v3865 = vsub.f32 %v1889, %v3864
  %3866 = vmatpush1.msra.mxu0 %v3865
  %v3867 = vand.u32 %v1888, 4294901760
  %v3868 = vsub.f32 %v1888, %v3867
  %3869 = vmatprep.subr.mxu0 %v3868
  %v3870 = vand.u32 %v1887, 4294901760
  %v3871 = vsub.f32 %v1887, %v3870
  %3872 = vmatpush1.msra.mxu0 %v3871
  %v3873 = vand.u32 %v1886, 4294901760
  %v3874 = vsub.f32 %v1886, %v3873
  %3875 = vmatprep.subr.mxu0 %v3874
  %v3876 = vand.u32 %v1885, 4294901760
  %v3877 = vsub.f32 %v1885, %v3876
  %3878 = vmatpush1.msra.mxu0 %v3877
  %v3879 = vand.u32 %v1948, 4294901760
  %v3880 = vsub.f32 %v1948, %v3879
  %3881 = vmatprep.subr.mxu0 %v3880
  %v3882 = vand.u32 %v1947, 4294901760
  %v3883 = vsub.f32 %v1947, %v3882
  %3884 = vmatpush2.msra.mxu0 %v3883
  %v3885 = vand.u32 %v1946, 4294901760
  %v3886 = vsub.f32 %v1946, %v3885
  %3887 = vmatprep.subr.mxu0 %v3886
  %v3888 = vand.u32 %v1945, 4294901760
  %v3889 = vsub.f32 %v1945, %v3888
  %3890 = vmatpush2.msra.mxu0 %v3889
  %v3891 = vand.u32 %v1944, 4294901760
  %v3892 = vsub.f32 %v1944, %v3891
  %3893 = vmatprep.subr.mxu0 %v3892
  %v3894 = vand.u32 %v1943, 4294901760
  %v3895 = vsub.f32 %v1943, %v3894
  %3896 = vmatpush2.msra.mxu0 %v3895
  %v3897 = vand.u32 %v1942, 4294901760
  %v3898 = vsub.f32 %v1942, %v3897
  %3899 = vmatprep.subr.mxu0 %v3898
  %v3900 = vand.u32 %v1941, 4294901760
  %v3901 = vsub.f32 %v1941, %v3900
  %3902 = vmatpush2.msra.mxu0 %v3901
  %v3903 = vand.u32 %v1940, 4294901760
  %v3904 = vsub.f32 %v1940, %v3903
  %3905 = vmatprep.subr.mxu0 %v3904
  %v3906 = vand.u32 %v1939, 4294901760
  %v3907 = vsub.f32 %v1939, %v3906
  %3908 = vmatpush2.msra.mxu0 %v3907
  %v3909 = vand.u32 %v1938, 4294901760
  %v3910 = vsub.f32 %v1938, %v3909
  %3911 = vmatprep.subr.mxu0 %v3910
  %v3912 = vand.u32 %v1937, 4294901760
  %v3913 = vsub.f32 %v1937, %v3912
  %3914 = vmatpush2.msra.mxu0 %v3913
  %v3915 = vand.u32 %v1936, 4294901760
  %v3916 = vsub.f32 %v1936, %v3915
  %3917 = vmatprep.subr.mxu0 %v3916
  %v3918 = vand.u32 %v1935, 4294901760
  %v3919 = vsub.f32 %v1935, %v3918
  %3920 = vmatpush2.msra.mxu0 %v3919
  %v3921 = vand.u32 %v1934, 4294901760
  %v3922 = vsub.f32 %v1934, %v3921
  %3923 = vmatprep.subr.mxu0 %v3922
  %v3924 = vand.u32 %v1933, 4294901760
  %v3925 = vsub.f32 %v1933, %v3924
  %3926 = vmatpush2.msra.mxu0 %v3925
  %v3927 = vand.u32 %v1932, 4294901760
  %v3928 = vsub.f32 %v1932, %v3927
  %3929 = vmatprep.subr.mxu0 %v3928
  %v3930 = vand.u32 %v1931, 4294901760
  %v3931 = vsub.f32 %v1931, %v3930
  %3932 = vmatpush2.msra.mxu0 %v3931
  %v3933 = vand.u32 %v1930, 4294901760
  %v3934 = vsub.f32 %v1930, %v3933
  %3935 = vmatprep.subr.mxu0 %v3934
  %v3936 = vand.u32 %v1929, 4294901760
  %v3937 = vsub.f32 %v1929, %v3936
  %3938 = vmatpush2.msra.mxu0 %v3937
  %v3939 = vand.u32 %v1928, 4294901760
  %v3940 = vsub.f32 %v1928, %v3939
  %3941 = vmatprep.subr.mxu0 %v3940
  %v3942 = vand.u32 %v1927, 4294901760
  %v3943 = vsub.f32 %v1927, %v3942
  %3944 = vmatpush2.msra.mxu0 %v3943
  %v3945 = vand.u32 %v1926, 4294901760
  %v3946 = vsub.f32 %v1926, %v3945
  %3947 = vmatprep.subr.mxu0 %v3946
  %v3948 = vand.u32 %v1925, 4294901760
  %v3949 = vsub.f32 %v1925, %v3948
  %3950 = vmatpush2.msra.mxu0 %v3949
  %v3951 = vand.u32 %v1924, 4294901760
  %v3952 = vsub.f32 %v1924, %v3951
  %3953 = vmatprep.subr.mxu0 %v3952
  %v3954 = vand.u32 %v1923, 4294901760
  %v3955 = vsub.f32 %v1923, %v3954
  %3956 = vmatpush2.msra.mxu0 %v3955
  %v3957 = vand.u32 %v1922, 4294901760
  %v3958 = vsub.f32 %v1922, %v3957
  %3959 = vmatprep.subr.mxu0 %v3958
  %v3960 = vand.u32 %v1921, 4294901760
  %v3961 = vsub.f32 %v1921, %v3960
  %3962 = vmatpush2.msra.mxu0 %v3961
  %v3963 = vand.u32 %v1920, 4294901760
  %v3964 = vsub.f32 %v1920, %v3963
  %3965 = vmatprep.subr.mxu0 %v3964
  %v3966 = vand.u32 %v1919, 4294901760
  %v3967 = vsub.f32 %v1919, %v3966
  %3968 = vmatpush2.msra.mxu0 %v3967
  %v3969 = vand.u32 %v1918, 4294901760
  %v3970 = vsub.f32 %v1918, %v3969
  %3971 = vmatprep.subr.mxu0 %v3970
  %v3972 = vand.u32 %v1917, 4294901760
  %v3973 = vsub.f32 %v1917, %v3972
  %3974 = vmatpush2.msra.mxu0 %v3973
  %v3975 = vand.u32 %v1820, 4294901760
  %v3976 = vsub.f32 %v1820, %v3975
  %3977 = vmatprep.mubr.f32.mxu0 %v3976
  %v3978 = vand.u32 %v1819, 4294901760
  %v3979 = vsub.f32 %v1819, %v3978
  %3980 = vmatmul.mubr.f32.gmra.mxu0 %v3979
  %v3981 = vpop.f32.mrf.mxu0
  %v3982 = vadd.f32 %v3779, %v3981
  %v3983 = vpop.f32.mrf.mxu0
  %v3984 = vadd.f32 %v3781, %v3983
  %3985 = vdwg.mxu0
  %v3986 = vand.u32 %v1916, 4294901760
  %3987 = vmatprep.subr.mxu0 %v3986
  %v3988 = vand.u32 %v1915, 4294901760
  %3989 = vmatpush1.msra.mxu0 %v3988
  %v3990 = vand.u32 %v1914, 4294901760
  %3991 = vmatprep.subr.mxu0 %v3990
  %v3992 = vand.u32 %v1913, 4294901760
  %3993 = vmatpush1.msra.mxu0 %v3992
  %v3994 = vand.u32 %v1912, 4294901760
  %3995 = vmatprep.subr.mxu0 %v3994
  %v3996 = vand.u32 %v1911, 4294901760
  %3997 = vmatpush1.msra.mxu0 %v3996
  %v3998 = vand.u32 %v1910, 4294901760
  %3999 = vmatprep.subr.mxu0 %v3998
  %v4000 = vand.u32 %v1909, 4294901760
  %4001 = vmatpush1.msra.mxu0 %v4000
  %v4002 = vand.u32 %v1908, 4294901760
  %4003 = vmatprep.subr.mxu0 %v4002
  %v4004 = vand.u32 %v1907, 4294901760
  %4005 = vmatpush1.msra.mxu0 %v4004
  %v4006 = vand.u32 %v1906, 4294901760
  %4007 = vmatprep.subr.mxu0 %v4006
  %v4008 = vand.u32 %v1905, 4294901760
  %4009 = vmatpush1.msra.mxu0 %v4008
  %v4010 = vand.u32 %v1904, 4294901760
  %4011 = vmatprep.subr.mxu0 %v4010
  %v4012 = vand.u32 %v1903, 4294901760
  %4013 = vmatpush1.msra.mxu0 %v4012
  %v4014 = vand.u32 %v1902, 4294901760
  %4015 = vmatprep.subr.mxu0 %v4014
  %v4016 = vand.u32 %v1901, 4294901760
  %4017 = vmatpush1.msra.mxu0 %v4016
  %v4018 = vand.u32 %v1900, 4294901760
  %4019 = vmatprep.subr.mxu0 %v4018
  %v4020 = vand.u32 %v1899, 4294901760
  %4021 = vmatpush1.msra.mxu0 %v4020
  %v4022 = vand.u32 %v1898, 4294901760
  %4023 = vmatprep.subr.mxu0 %v4022
  %v4024 = vand.u32 %v1897, 4294901760
  %4025 = vmatpush1.msra.mxu0 %v4024
  %v4026 = vand.u32 %v1896, 4294901760
  %4027 = vmatprep.subr.mxu0 %v4026
  %v4028 = vand.u32 %v1895, 4294901760
  %4029 = vmatpush1.msra.mxu0 %v4028
  %v4030 = vand.u32 %v1894, 4294901760
  %4031 = vmatprep.subr.mxu0 %v4030
  %v4032 = vand.u32 %v1893, 4294901760
  %4033 = vmatpush1.msra.mxu0 %v4032
  %v4034 = vand.u32 %v1892, 4294901760
  %4035 = vmatprep.subr.mxu0 %v4034
  %v4036 = vand.u32 %v1891, 4294901760
  %4037 = vmatpush1.msra.mxu0 %v4036
  %v4038 = vand.u32 %v1890, 4294901760
  %4039 = vmatprep.subr.mxu0 %v4038
  %v4040 = vand.u32 %v1889, 4294901760
  %4041 = vmatpush1.msra.mxu0 %v4040
  %v4042 = vand.u32 %v1888, 4294901760
  %4043 = vmatprep.subr.mxu0 %v4042
  %v4044 = vand.u32 %v1887, 4294901760
  %4045 = vmatpush1.msra.mxu0 %v4044
  %v4046 = vand.u32 %v1886, 4294901760
  %4047 = vmatprep.subr.mxu0 %v4046
  %v4048 = vand.u32 %v1885, 4294901760
  %4049 = vmatpush1.msra.mxu0 %v4048
  %v4050 = vand.u32 %v1948, 4294901760
  %4051 = vmatprep.subr.mxu0 %v4050
  %v4052 = vand.u32 %v1947, 4294901760
  %4053 = vmatpush2.msra.mxu0 %v4052
  %v4054 = vand.u32 %v1946, 4294901760
  %4055 = vmatprep.subr.mxu0 %v4054
  %v4056 = vand.u32 %v1945, 4294901760
  %4057 = vmatpush2.msra.mxu0 %v4056
  %v4058 = vand.u32 %v1944, 4294901760
  %4059 = vmatprep.subr.mxu0 %v4058
  %v4060 = vand.u32 %v1943, 4294901760
  %4061 = vmatpush2.msra.mxu0 %v4060
  %v4062 = vand.u32 %v1942, 4294901760
  %4063 = vmatprep.subr.mxu0 %v4062
  %v4064 = vand.u32 %v1941, 4294901760
  %4065 = vmatpush2.msra.mxu0 %v4064
  %v4066 = vand.u32 %v1940, 4294901760
  %4067 = vmatprep.subr.mxu0 %v4066
  %v4068 = vand.u32 %v1939, 4294901760
  %4069 = vmatpush2.msra.mxu0 %v4068
  %v4070 = vand.u32 %v1938, 4294901760
  %4071 = vmatprep.subr.mxu0 %v4070
  %v4072 = vand.u32 %v1937, 4294901760
  %4073 = vmatpush2.msra.mxu0 %v4072
  %v4074 = vand.u32 %v1936, 4294901760
  %4075 = vmatprep.subr.mxu0 %v4074
  %v4076 = vand.u32 %v1935, 4294901760
  %4077 = vmatpush2.msra.mxu0 %v4076
  %v4078 = vand.u32 %v1934, 4294901760
  %4079 = vmatprep.subr.mxu0 %v4078
  %v4080 = vand.u32 %v1933, 4294901760
  %4081 = vmatpush2.msra.mxu0 %v4080
  %v4082 = vand.u32 %v1932, 4294901760
  %4083 = vmatprep.subr.mxu0 %v4082
  %v4084 = vand.u32 %v1931, 4294901760
  %4085 = vmatpush2.msra.mxu0 %v4084
  %v4086 = vand.u32 %v1930, 4294901760
  %4087 = vmatprep.subr.mxu0 %v4086
  %v4088 = vand.u32 %v1929, 4294901760
  %4089 = vmatpush2.msra.mxu0 %v4088
  %v4090 = vand.u32 %v1928, 4294901760
  %4091 = vmatprep.subr.mxu0 %v4090
  %v4092 = vand.u32 %v1927, 4294901760
  %4093 = vmatpush2.msra.mxu0 %v4092
  %v4094 = vand.u32 %v1926, 4294901760
  %4095 = vmatprep.subr.mxu0 %v4094
  %v4096 = vand.u32 %v1925, 4294901760
  %4097 = vmatpush2.msra.mxu0 %v4096
  %v4098 = vand.u32 %v1924, 4294901760
  %4099 = vmatprep.subr.mxu0 %v4098
  %v4100 = vand.u32 %v1923, 4294901760
  %4101 = vmatpush2.msra.mxu0 %v4100
  %v4102 = vand.u32 %v1922, 4294901760
  %4103 = vmatprep.subr.mxu0 %v4102
  %v4104 = vand.u32 %v1921, 4294901760
  %4105 = vmatpush2.msra.mxu0 %v4104
  %v4106 = vand.u32 %v1920, 4294901760
  %4107 = vmatprep.subr.mxu0 %v4106
  %v4108 = vand.u32 %v1919, 4294901760
  %4109 = vmatpush2.msra.mxu0 %v4108
  %v4110 = vand.u32 %v1918, 4294901760
  %4111 = vmatprep.subr.mxu0 %v4110
  %v4112 = vand.u32 %v1917, 4294901760
  %4113 = vmatpush2.msra.mxu0 %v4112
  %v4114 = vand.u32 %v1820, 4294901760
  %v4115 = vsub.f32 %v1820, %v4114
  %v4116 = vand.u32 %v4115, 4294901760
  %4117 = vmatprep.mubr.f32.mxu0 %v4116
  %v4118 = vand.u32 %v1819, 4294901760
  %v4119 = vsub.f32 %v1819, %v4118
  %v4120 = vand.u32 %v4119, 4294901760
  %4121 = vmatmul.mubr.f32.gmra.mxu0 %v4120
  %v4122 = vpop.f32.mrf.mxu0
  %v4123 = vadd.f32 %v3982, %v4122
  %v4124 = vpop.f32.mrf.mxu0
  %v4125 = vadd.f32 %v3984, %v4124
  %4126 = vdwg.mxu0
  %v4127 = vand.u32 %v1916, 4294901760
  %v4128 = vsub.f32 %v1916, %v4127
  %v4129 = vand.u32 %v4128, 4294901760
  %4130 = vmatprep.subr.mxu0 %v4129
  %v4131 = vand.u32 %v1915, 4294901760
  %v4132 = vsub.f32 %v1915, %v4131
  %v4133 = vand.u32 %v4132, 4294901760
  %4134 = vmatpush1.msra.mxu0 %v4133
  %v4135 = vand.u32 %v1914, 4294901760
  %v4136 = vsub.f32 %v1914, %v4135
  %v4137 = vand.u32 %v4136, 4294901760
  %4138 = vmatprep.subr.mxu0 %v4137
  %v4139 = vand.u32 %v1913, 4294901760
  %v4140 = vsub.f32 %v1913, %v4139
  %v4141 = vand.u32 %v4140, 4294901760
  %4142 = vmatpush1.msra.mxu0 %v4141
  %v4143 = vand.u32 %v1912, 4294901760
  %v4144 = vsub.f32 %v1912, %v4143
  %v4145 = vand.u32 %v4144, 4294901760
  %4146 = vmatprep.subr.mxu0 %v4145
  %v4147 = vand.u32 %v1911, 4294901760
  %v4148 = vsub.f32 %v1911, %v4147
  %v4149 = vand.u32 %v4148, 4294901760
  %4150 = vmatpush1.msra.mxu0 %v4149
  %v4151 = vand.u32 %v1910, 4294901760
  %v4152 = vsub.f32 %v1910, %v4151
  %v4153 = vand.u32 %v4152, 4294901760
  %4154 = vmatprep.subr.mxu0 %v4153
  %v4155 = vand.u32 %v1909, 4294901760
  %v4156 = vsub.f32 %v1909, %v4155
  %v4157 = vand.u32 %v4156, 4294901760
  %4158 = vmatpush1.msra.mxu0 %v4157
  %v4159 = vand.u32 %v1908, 4294901760
  %v4160 = vsub.f32 %v1908, %v4159
  %v4161 = vand.u32 %v4160, 4294901760
  %4162 = vmatprep.subr.mxu0 %v4161
  %v4163 = vand.u32 %v1907, 4294901760
  %v4164 = vsub.f32 %v1907, %v4163
  %v4165 = vand.u32 %v4164, 4294901760
  %4166 = vmatpush1.msra.mxu0 %v4165
  %v4167 = vand.u32 %v1906, 4294901760
  %v4168 = vsub.f32 %v1906, %v4167
  %v4169 = vand.u32 %v4168, 4294901760
  %4170 = vmatprep.subr.mxu0 %v4169
  %v4171 = vand.u32 %v1905, 4294901760
  %v4172 = vsub.f32 %v1905, %v4171
  %v4173 = vand.u32 %v4172, 4294901760
  %4174 = vmatpush1.msra.mxu0 %v4173
  %v4175 = vand.u32 %v1904, 4294901760
  %v4176 = vsub.f32 %v1904, %v4175
  %v4177 = vand.u32 %v4176, 4294901760
  %4178 = vmatprep.subr.mxu0 %v4177
  %v4179 = vand.u32 %v1903, 4294901760
  %v4180 = vsub.f32 %v1903, %v4179
  %v4181 = vand.u32 %v4180, 4294901760
  %4182 = vmatpush1.msra.mxu0 %v4181
  %v4183 = vand.u32 %v1902, 4294901760
  %v4184 = vsub.f32 %v1902, %v4183
  %v4185 = vand.u32 %v4184, 4294901760
  %4186 = vmatprep.subr.mxu0 %v4185
  %v4187 = vand.u32 %v1901, 4294901760
  %v4188 = vsub.f32 %v1901, %v4187
  %v4189 = vand.u32 %v4188, 4294901760
  %4190 = vmatpush1.msra.mxu0 %v4189
  %v4191 = vand.u32 %v1900, 4294901760
  %v4192 = vsub.f32 %v1900, %v4191
  %v4193 = vand.u32 %v4192, 4294901760
  %4194 = vmatprep.subr.mxu0 %v4193
  %v4195 = vand.u32 %v1899, 4294901760
  %v4196 = vsub.f32 %v1899, %v4195
  %v4197 = vand.u32 %v4196, 4294901760
  %4198 = vmatpush1.msra.mxu0 %v4197
  %v4199 = vand.u32 %v1898, 4294901760
  %v4200 = vsub.f32 %v1898, %v4199
  %v4201 = vand.u32 %v4200, 4294901760
  %4202 = vmatprep.subr.mxu0 %v4201
  %v4203 = vand.u32 %v1897, 4294901760
  %v4204 = vsub.f32 %v1897, %v4203
  %v4205 = vand.u32 %v4204, 4294901760
  %4206 = vmatpush1.msra.mxu0 %v4205
  %v4207 = vand.u32 %v1896, 4294901760
  %v4208 = vsub.f32 %v1896, %v4207
  %v4209 = vand.u32 %v4208, 4294901760
  %4210 = vmatprep.subr.mxu0 %v4209
  %v4211 = vand.u32 %v1895, 4294901760
  %v4212 = vsub.f32 %v1895, %v4211
  %v4213 = vand.u32 %v4212, 4294901760
  %4214 = vmatpush1.msra.mxu0 %v4213
  %v4215 = vand.u32 %v1894, 4294901760
  %v4216 = vsub.f32 %v1894, %v4215
  %v4217 = vand.u32 %v4216, 4294901760
  %4218 = vmatprep.subr.mxu0 %v4217
  %v4219 = vand.u32 %v1893, 4294901760
  %v4220 = vsub.f32 %v1893, %v4219
  %v4221 = vand.u32 %v4220, 4294901760
  %4222 = vmatpush1.msra.mxu0 %v4221
  %v4223 = vand.u32 %v1892, 4294901760
  %v4224 = vsub.f32 %v1892, %v4223
  %v4225 = vand.u32 %v4224, 4294901760
  %4226 = vmatprep.subr.mxu0 %v4225
  %v4227 = vand.u32 %v1891, 4294901760
  %v4228 = vsub.f32 %v1891, %v4227
  %v4229 = vand.u32 %v4228, 4294901760
  %4230 = vmatpush1.msra.mxu0 %v4229
  %v4231 = vand.u32 %v1890, 4294901760
  %v4232 = vsub.f32 %v1890, %v4231
  %v4233 = vand.u32 %v4232, 4294901760
  %4234 = vmatprep.subr.mxu0 %v4233
  %v4235 = vand.u32 %v1889, 4294901760
  %v4236 = vsub.f32 %v1889, %v4235
  %v4237 = vand.u32 %v4236, 4294901760
  %4238 = vmatpush1.msra.mxu0 %v4237
  %v4239 = vand.u32 %v1888, 4294901760
  %v4240 = vsub.f32 %v1888, %v4239
  %v4241 = vand.u32 %v4240, 4294901760
  %4242 = vmatprep.subr.mxu0 %v4241
  %v4243 = vand.u32 %v1887, 4294901760
  %v4244 = vsub.f32 %v1887, %v4243
  %v4245 = vand.u32 %v4244, 4294901760
  %4246 = vmatpush1.msra.mxu0 %v4245
  %v4247 = vand.u32 %v1886, 4294901760
  %v4248 = vsub.f32 %v1886, %v4247
  %v4249 = vand.u32 %v4248, 4294901760
  %4250 = vmatprep.subr.mxu0 %v4249
  %v4251 = vand.u32 %v1885, 4294901760
  %v4252 = vsub.f32 %v1885, %v4251
  %v4253 = vand.u32 %v4252, 4294901760
  %4254 = vmatpush1.msra.mxu0 %v4253
  %v4255 = vand.u32 %v1948, 4294901760
  %v4256 = vsub.f32 %v1948, %v4255
  %v4257 = vand.u32 %v4256, 4294901760
  %4258 = vmatprep.subr.mxu0 %v4257
  %v4259 = vand.u32 %v1947, 4294901760
  %v4260 = vsub.f32 %v1947, %v4259
  %v4261 = vand.u32 %v4260, 4294901760
  %4262 = vmatpush2.msra.mxu0 %v4261
  %v4263 = vand.u32 %v1946, 4294901760
  %v4264 = vsub.f32 %v1946, %v4263
  %v4265 = vand.u32 %v4264, 4294901760
  %4266 = vmatprep.subr.mxu0 %v4265
  %v4267 = vand.u32 %v1945, 4294901760
  %v4268 = vsub.f32 %v1945, %v4267
  %v4269 = vand.u32 %v4268, 4294901760
  %4270 = vmatpush2.msra.mxu0 %v4269
  %v4271 = vand.u32 %v1944, 4294901760
  %v4272 = vsub.f32 %v1944, %v4271
  %v4273 = vand.u32 %v4272, 4294901760
  %4274 = vmatprep.subr.mxu0 %v4273
  %v4275 = vand.u32 %v1943, 4294901760
  %v4276 = vsub.f32 %v1943, %v4275
  %v4277 = vand.u32 %v4276, 4294901760
  %4278 = vmatpush2.msra.mxu0 %v4277
  %v4279 = vand.u32 %v1942, 4294901760
  %v4280 = vsub.f32 %v1942, %v4279
  %v4281 = vand.u32 %v4280, 4294901760
  %4282 = vmatprep.subr.mxu0 %v4281
  %v4283 = vand.u32 %v1941, 4294901760
  %v4284 = vsub.f32 %v1941, %v4283
  %v4285 = vand.u32 %v4284, 4294901760
  %4286 = vmatpush2.msra.mxu0 %v4285
  %v4287 = vand.u32 %v1940, 4294901760
  %v4288 = vsub.f32 %v1940, %v4287
  %v4289 = vand.u32 %v4288, 4294901760
  %4290 = vmatprep.subr.mxu0 %v4289
  %v4291 = vand.u32 %v1939, 4294901760
  %v4292 = vsub.f32 %v1939, %v4291
  %v4293 = vand.u32 %v4292, 4294901760
  %4294 = vmatpush2.msra.mxu0 %v4293
  %v4295 = vand.u32 %v1938, 4294901760
  %v4296 = vsub.f32 %v1938, %v4295
  %v4297 = vand.u32 %v4296, 4294901760
  %4298 = vmatprep.subr.mxu0 %v4297
  %v4299 = vand.u32 %v1937, 4294901760
  %v4300 = vsub.f32 %v1937, %v4299
  %v4301 = vand.u32 %v4300, 4294901760
  %4302 = vmatpush2.msra.mxu0 %v4301
  %v4303 = vand.u32 %v1936, 4294901760
  %v4304 = vsub.f32 %v1936, %v4303
  %v4305 = vand.u32 %v4304, 4294901760
  %4306 = vmatprep.subr.mxu0 %v4305
  %v4307 = vand.u32 %v1935, 4294901760
  %v4308 = vsub.f32 %v1935, %v4307
  %v4309 = vand.u32 %v4308, 4294901760
  %4310 = vmatpush2.msra.mxu0 %v4309
  %v4311 = vand.u32 %v1934, 4294901760
  %v4312 = vsub.f32 %v1934, %v4311
  %v4313 = vand.u32 %v4312, 4294901760
  %4314 = vmatprep.subr.mxu0 %v4313
  %v4315 = vand.u32 %v1933, 4294901760
  %v4316 = vsub.f32 %v1933, %v4315
  %v4317 = vand.u32 %v4316, 4294901760
  %4318 = vmatpush2.msra.mxu0 %v4317
  %v4319 = vand.u32 %v1932, 4294901760
  %v4320 = vsub.f32 %v1932, %v4319
  %v4321 = vand.u32 %v4320, 4294901760
  %4322 = vmatprep.subr.mxu0 %v4321
  %v4323 = vand.u32 %v1931, 4294901760
  %v4324 = vsub.f32 %v1931, %v4323
  %v4325 = vand.u32 %v4324, 4294901760
  %4326 = vmatpush2.msra.mxu0 %v4325
  %v4327 = vand.u32 %v1930, 4294901760
  %v4328 = vsub.f32 %v1930, %v4327
  %v4329 = vand.u32 %v4328, 4294901760
  %4330 = vmatprep.subr.mxu0 %v4329
  %v4331 = vand.u32 %v1929, 4294901760
  %v4332 = vsub.f32 %v1929, %v4331
  %v4333 = vand.u32 %v4332, 4294901760
  %4334 = vmatpush2.msra.mxu0 %v4333
  %v4335 = vand.u32 %v1928, 4294901760
  %v4336 = vsub.f32 %v1928, %v4335
  %v4337 = vand.u32 %v4336, 4294901760
  %4338 = vmatprep.subr.mxu0 %v4337
  %v4339 = vand.u32 %v1927, 4294901760
  %v4340 = vsub.f32 %v1927, %v4339
  %v4341 = vand.u32 %v4340, 4294901760
  %4342 = vmatpush2.msra.mxu0 %v4341
  %v4343 = vand.u32 %v1926, 4294901760
  %v4344 = vsub.f32 %v1926, %v4343
  %v4345 = vand.u32 %v4344, 4294901760
  %4346 = vmatprep.subr.mxu0 %v4345
  %v4347 = vand.u32 %v1925, 4294901760
  %v4348 = vsub.f32 %v1925, %v4347
  %v4349 = vand.u32 %v4348, 4294901760
  %4350 = vmatpush2.msra.mxu0 %v4349
  %v4351 = vand.u32 %v1924, 4294901760
  %v4352 = vsub.f32 %v1924, %v4351
  %v4353 = vand.u32 %v4352, 4294901760
  %4354 = vmatprep.subr.mxu0 %v4353
  %v4355 = vand.u32 %v1923, 4294901760
  %v4356 = vsub.f32 %v1923, %v4355
  %v4357 = vand.u32 %v4356, 4294901760
  %4358 = vmatpush2.msra.mxu0 %v4357
  %v4359 = vand.u32 %v1922, 4294901760
  %v4360 = vsub.f32 %v1922, %v4359
  %v4361 = vand.u32 %v4360, 4294901760
  %4362 = vmatprep.subr.mxu0 %v4361
  %v4363 = vand.u32 %v1921, 4294901760
  %v4364 = vsub.f32 %v1921, %v4363
  %v4365 = vand.u32 %v4364, 4294901760
  %4366 = vmatpush2.msra.mxu0 %v4365
  %v4367 = vand.u32 %v1920, 4294901760
  %v4368 = vsub.f32 %v1920, %v4367
  %v4369 = vand.u32 %v4368, 4294901760
  %4370 = vmatprep.subr.mxu0 %v4369
  %v4371 = vand.u32 %v1919, 4294901760
  %v4372 = vsub.f32 %v1919, %v4371
  %v4373 = vand.u32 %v4372, 4294901760
  %4374 = vmatpush2.msra.mxu0 %v4373
  %v4375 = vand.u32 %v1918, 4294901760
  %v4376 = vsub.f32 %v1918, %v4375
  %v4377 = vand.u32 %v4376, 4294901760
  %4378 = vmatprep.subr.mxu0 %v4377
  %v4379 = vand.u32 %v1917, 4294901760
  %v4380 = vsub.f32 %v1917, %v4379
  %v4381 = vand.u32 %v4380, 4294901760
  %4382 = vmatpush2.msra.mxu0 %v4381
  %v4383 = vand.u32 %v1820, 4294901760
  %4384 = vmatprep.mubr.f32.mxu0 %v4383
  %v4385 = vand.u32 %v1819, 4294901760
  %4386 = vmatmul.mubr.f32.gmra.mxu0 %v4385
  %v4387 = vpop.f32.mrf.mxu0
  %v4388 = vadd.f32 %v4123, %v4387
  %v4389 = vpop.f32.mrf.mxu0
  %v4390 = vadd.f32 %v4125, %v4389
  %4391 = vdwg.mxu0
  %v4392 = vand.u32 %v1916, 4294901760
  %4393 = vmatprep.subr.mxu0 %v4392
  %v4394 = vand.u32 %v1915, 4294901760
  %4395 = vmatpush1.msra.mxu0 %v4394
  %v4396 = vand.u32 %v1914, 4294901760
  %4397 = vmatprep.subr.mxu0 %v4396
  %v4398 = vand.u32 %v1913, 4294901760
  %4399 = vmatpush1.msra.mxu0 %v4398
  %v4400 = vand.u32 %v1912, 4294901760
  %4401 = vmatprep.subr.mxu0 %v4400
  %v4402 = vand.u32 %v1911, 4294901760
  %4403 = vmatpush1.msra.mxu0 %v4402
  %v4404 = vand.u32 %v1910, 4294901760
  %4405 = vmatprep.subr.mxu0 %v4404
  %v4406 = vand.u32 %v1909, 4294901760
  %4407 = vmatpush1.msra.mxu0 %v4406
  %v4408 = vand.u32 %v1908, 4294901760
  %4409 = vmatprep.subr.mxu0 %v4408
  %v4410 = vand.u32 %v1907, 4294901760
  %4411 = vmatpush1.msra.mxu0 %v4410
  %v4412 = vand.u32 %v1906, 4294901760
  %4413 = vmatprep.subr.mxu0 %v4412
  %v4414 = vand.u32 %v1905, 4294901760
  %4415 = vmatpush1.msra.mxu0 %v4414
  %v4416 = vand.u32 %v1904, 4294901760
  %4417 = vmatprep.subr.mxu0 %v4416
  %v4418 = vand.u32 %v1903, 4294901760
  %4419 = vmatpush1.msra.mxu0 %v4418
  %v4420 = vand.u32 %v1902, 4294901760
  %4421 = vmatprep.subr.mxu0 %v4420
  %v4422 = vand.u32 %v1901, 4294901760
  %4423 = vmatpush1.msra.mxu0 %v4422
  %v4424 = vand.u32 %v1900, 4294901760
  %4425 = vmatprep.subr.mxu0 %v4424
  %v4426 = vand.u32 %v1899, 4294901760
  %4427 = vmatpush1.msra.mxu0 %v4426
  %v4428 = vand.u32 %v1898, 4294901760
  %4429 = vmatprep.subr.mxu0 %v4428
  %v4430 = vand.u32 %v1897, 4294901760
  %4431 = vmatpush1.msra.mxu0 %v4430
  %v4432 = vand.u32 %v1896, 4294901760
  %4433 = vmatprep.subr.mxu0 %v4432
  %v4434 = vand.u32 %v1895, 4294901760
  %4435 = vmatpush1.msra.mxu0 %v4434
  %v4436 = vand.u32 %v1894, 4294901760
  %4437 = vmatprep.subr.mxu0 %v4436
  %v4438 = vand.u32 %v1893, 4294901760
  %4439 = vmatpush1.msra.mxu0 %v4438
  %v4440 = vand.u32 %v1892, 4294901760
  %4441 = vmatprep.subr.mxu0 %v4440
  %v4442 = vand.u32 %v1891, 4294901760
  %4443 = vmatpush1.msra.mxu0 %v4442
  %v4444 = vand.u32 %v1890, 4294901760
  %4445 = vmatprep.subr.mxu0 %v4444
  %v4446 = vand.u32 %v1889, 4294901760
  %4447 = vmatpush1.msra.mxu0 %v4446
  %v4448 = vand.u32 %v1888, 4294901760
  %4449 = vmatprep.subr.mxu0 %v4448
  %v4450 = vand.u32 %v1887, 4294901760
  %4451 = vmatpush1.msra.mxu0 %v4450
  %v4452 = vand.u32 %v1886, 4294901760
  %4453 = vmatprep.subr.mxu0 %v4452
  %v4454 = vand.u32 %v1885, 4294901760
  %4455 = vmatpush1.msra.mxu0 %v4454
  %v4456 = vand.u32 %v1948, 4294901760
  %4457 = vmatprep.subr.mxu0 %v4456
  %v4458 = vand.u32 %v1947, 4294901760
  %4459 = vmatpush2.msra.mxu0 %v4458
  %v4460 = vand.u32 %v1946, 4294901760
  %4461 = vmatprep.subr.mxu0 %v4460
  %v4462 = vand.u32 %v1945, 4294901760
  %4463 = vmatpush2.msra.mxu0 %v4462
  %v4464 = vand.u32 %v1944, 4294901760
  %4465 = vmatprep.subr.mxu0 %v4464
  %v4466 = vand.u32 %v1943, 4294901760
  %4467 = vmatpush2.msra.mxu0 %v4466
  %v4468 = vand.u32 %v1942, 4294901760
  %4469 = vmatprep.subr.mxu0 %v4468
  %v4470 = vand.u32 %v1941, 4294901760
  %4471 = vmatpush2.msra.mxu0 %v4470
  %v4472 = vand.u32 %v1940, 4294901760
  %4473 = vmatprep.subr.mxu0 %v4472
  %v4474 = vand.u32 %v1939, 4294901760
  %4475 = vmatpush2.msra.mxu0 %v4474
  %v4476 = vand.u32 %v1938, 4294901760
  %4477 = vmatprep.subr.mxu0 %v4476
  %v4478 = vand.u32 %v1937, 4294901760
  %4479 = vmatpush2.msra.mxu0 %v4478
  %v4480 = vand.u32 %v1936, 4294901760
  %4481 = vmatprep.subr.mxu0 %v4480
  %v4482 = vand.u32 %v1935, 4294901760
  %4483 = vmatpush2.msra.mxu0 %v4482
  %v4484 = vand.u32 %v1934, 4294901760
  %4485 = vmatprep.subr.mxu0 %v4484
  %v4486 = vand.u32 %v1933, 4294901760
  %4487 = vmatpush2.msra.mxu0 %v4486
  %v4488 = vand.u32 %v1932, 4294901760
  %4489 = vmatprep.subr.mxu0 %v4488
  %v4490 = vand.u32 %v1931, 4294901760
  %4491 = vmatpush2.msra.mxu0 %v4490
  %v4492 = vand.u32 %v1930, 4294901760
  %4493 = vmatprep.subr.mxu0 %v4492
  %v4494 = vand.u32 %v1929, 4294901760
  %4495 = vmatpush2.msra.mxu0 %v4494
  %v4496 = vand.u32 %v1928, 4294901760
  %4497 = vmatprep.subr.mxu0 %v4496
  %v4498 = vand.u32 %v1927, 4294901760
  %4499 = vmatpush2.msra.mxu0 %v4498
  %v4500 = vand.u32 %v1926, 4294901760
  %4501 = vmatprep.subr.mxu0 %v4500
  %v4502 = vand.u32 %v1925, 4294901760
  %4503 = vmatpush2.msra.mxu0 %v4502
  %v4504 = vand.u32 %v1924, 4294901760
  %4505 = vmatprep.subr.mxu0 %v4504
  %v4506 = vand.u32 %v1923, 4294901760
  %4507 = vmatpush2.msra.mxu0 %v4506
  %v4508 = vand.u32 %v1922, 4294901760
  %4509 = vmatprep.subr.mxu0 %v4508
  %v4510 = vand.u32 %v1921, 4294901760
  %4511 = vmatpush2.msra.mxu0 %v4510
  %v4512 = vand.u32 %v1920, 4294901760
  %4513 = vmatprep.subr.mxu0 %v4512
  %v4514 = vand.u32 %v1919, 4294901760
  %4515 = vmatpush2.msra.mxu0 %v4514
  %v4516 = vand.u32 %v1918, 4294901760
  %4517 = vmatprep.subr.mxu0 %v4516
  %v4518 = vand.u32 %v1917, 4294901760
  %4519 = vmatpush2.msra.mxu0 %v4518
  %v4520 = vand.u32 %v1820, 4294901760
  %4521 = vmatprep.mubr.f32.mxu0 %v4520
  %v4522 = vand.u32 %v1819, 4294901760
  %4523 = vmatmul.mubr.f32.gmra.mxu0 %v4522
  %v4524 = vpop.f32.mrf.mxu0
  %v4525 = vadd.f32 %v4388, %v4524
  %v4526 = vpop.f32.mrf.mxu0
  %v4527 = vadd.f32 %v4390, %v4526
  %4528 = vdwg.mxu0
  %v4529 = vmax.f32 %v4525, 0.0
  %v4530 = vmax.f32 %v4527, 0.0
  %v4533 = vcombine.low %v4529, %v4530
  %v4535 = vunpack.c.l.s4 1966171168
  %v4536 = vunpack.c.0.s8 %v4535
  %v4537 = vlaneseq
  %v4538 = vshrl.u32 %v4537, 7
  %v4539 = vsub.s32 %v4536, %v4538
  %v4540 = vrot.slane %v4533, %v4539
  %v4542 = vunpack.c.l.s4 1966171168
  %v4543 = vunpack.c.0.s8 %v4542
  %v4544 = vlaneseq
  %v4545 = vshrl.u32 %v4544, 7
  %v4546 = vsub.s32 %v4543, %v4545
  %v4547 = vrot.slane %v4540, %v4546
  %v4549 = vlaneseq
  %vm4550 = vcmp.ge.s32.totalorder %v4549, 0
  %vm4551 = vcmp.lt.s32.totalorder %v4549, 256
  %vm4552 = vmand %vm4550, %vm4551
  %4553 = vst.msk [vmem:[%s5] sm:$0x3] %vm4552, %v4547
  // Predicated region
  $region22: #{context_encoder_forward.1} parent=0 // pred_check
    _
  $region23: #{context_encoder_forward.1} parent=0 // pred_check_branch
    %4555 = sbr.rel (0) target = $region25
  $region24: #{context_encoder_forward.1} parent=0 // pred_region
    _
  $region25: #{context_encoder_forward.1} parent=0 // pred_fallthru
    _
  // Predicated region
  $region26: #{context_encoder_forward.1} parent=0 // pred_check
    _
  $region27: #{context_encoder_forward.1} parent=0 // pred_check_branch
    %4557 = sbr.rel (0) target = $region29
  $region28: #{context_encoder_forward.1} parent=0 // pred_region
    _
  $region29: #{context_encoder_forward.1} parent=0 // pred_fallthru
    _

</llo_original>
